<compile_context>
chip_gen: v5e
topology: v5e:2x2
jax: 0.10.0
libtpu: 0.0.40
codegen_flags: <defaults>
</compile_context>

<pallas_src>
import jax
import jax.numpy as jnp
import numpy as np
from jax.experimental import pallas as pl
from jax.experimental.pallas import tpu as pltpu


# ----------------------------------------------------------------------------
# Fused kernel factory: the entire STConv forward in one invocation (grid=(1,))
# ----------------------------------------------------------------------------
def _make_stconv_kernel(meta):
    Kt, Ks = meta["Kt"], meta["Ks"]
    gate_segs = meta["gate"]   # [(wmat row offset, Kt*Cin, bias row)] x 5
    sp_segs = meta["sp"]       # [(spw  row offset, Ks*Cin, bias row)] x 2
    fc_off, fc_bias_row = meta["fc"]

    def kernel(x_ref, wmat_ref, spw_ref, bias_ref, bn_ref, o_ref):
        f32 = jnp.float32
        bf16 = jnp.bfloat16
        Cout2 = wmat_ref.shape[1]      # 2 * temporal_channel (=128)
        Cout = Cout2 // 2
        Csp = spw_ref.shape[1]         # spatial channels (=16)
        bn_all = bn_ref[...]           # (N, 4) f32: [gamma1, beta1, gamma2, beta2] columns

        def bias_row(row, width):
            b = bias_ref[pl.ds(row, 1), :]              # (1, Cout2) f32
            return b[:, :width].reshape(1, 1, 1, width)

        def time_gate(x, seg):
            """Gated temporal conv (residual identity folded into tap-0 weights).
            x: (B, T, N, Cin) f32 -> (B, T-Kt+1, N, Cout) f32."""
            w_off, kcin, brow = seg
            B, T, N, Cin = x.shape
            Tout = T - (Kt - 1)
            xb = x.astype(bf16)
            # im2col over the (major, free) time axis -> ONE MXU matmul per gate
            op = jnp.concatenate([xb[:, k:k + Tout] for k in range(Kt)], axis=-1)
            op = op.reshape(B * Tout * N, kcin)                       # tile relabel only
            w = wmat_ref[pl.ds(w_off, kcin), :]                       # (Kt*Cin, 2*Cout) bf16
            pq = jnp.dot(op, w, preferred_element_type=f32)
            pq = pq.reshape(B, Tout, N, Cout2) + bias_row(brow, Cout2)
            p, q = pq[..., :Cout], pq[..., Cout:]
            # sigmoid via EUP exp + approx reciprocal (keeps the divide off the VALU)
            return p * pl.reciprocal(1.0 + jnp.exp(-q), approx=True)

        def node_shift(xb, d):
            """result[..., n, :] = xb[..., n+d, :], zeros outside the node range."""
            B, T, N, C = xb.shape
            if d == 0:
                return xb
            z = jnp.zeros((B, T, abs(d), C), xb.dtype)
            if d > 0:
                return jnp.concatenate([xb[:, :, d:], z], axis=2)
            return jnp.concatenate([z, xb[:, :, :N + d]], axis=2)

        def spatial_relu(x, seg):
            """(Ks,1) conv over the node axis ('same' zero padding) + ReLU, as one matmul."""
            w_off, rows, brow = seg
            B, T, N, Cin = x.shape
            pad = (Ks - 1) // 2
            xb = x.astype(bf16)
            op = jnp.concatenate([node_shift(xb, k - pad) for k in range(Ks)], axis=-1)
            op = op.reshape(B * T * N, rows)
            w = spw_ref[pl.ds(w_off, rows), :]                        # (Ks*Cin, Csp) bf16
            out = jnp.dot(op, w, preferred_element_type=f32).reshape(B, T, N, Csp)
            return jnp.maximum(out + bias_row(brow, Csp), 0.0)

        def batch_norm(x, col):
            """BatchNorm2d(num_nodes), training-mode batch stats, single fused pass:
            var = E[x^2] - mean^2, then one scale/shift FMA over the tensor."""
            B, T, N, C = x.shape
            inv_cnt = 1.0 / (B * T * C)
            s = jnp.sum(x, axis=(0, 1, 3), keepdims=True)             # (1,1,N,1)
            ss = jnp.sum(x * x, axis=(0, 1, 3), keepdims=True)
            mean = s * inv_cnt
            var = ss * inv_cnt - mean * mean
            gamma = bn_all[:, col:col + 1].reshape(1, 1, N, 1)
            beta = bn_all[:, col + 1:col + 2].reshape(1, 1, N, 1)
            scale = gamma * jax.lax.rsqrt(var + 1e-5)
            return x * scale + (beta - mean * scale)

        x = x_ref[...].astype(f32)

        # ---- STConvBlock 1
        t = time_gate(x, gate_segs[0])
        t = spatial_relu(t, sp_segs[0])
        t = time_gate(t, gate_segs[1])
        t = batch_norm(t, 0)
        # ---- STConvBlock 2
        t = time_gate(t, gate_segs[2])
        t = spatial_relu(t, sp_segs[1])
        t = time_gate(t, gate_segs[3])
        t = batch_norm(t, 2)
        # ---- last temporal block
        t = time_gate(t, gate_segs[4])

        # ---- final per-node FC: Tf dots of (B*N, C) @ (C, 128-padded), lane-slice to T_out
        B, Tf, N, C = t.shape
        T_out = o_ref.shape[-1]
        acc = jnp.zeros((B * N, Cout2), f32)
        for tf in range(Tf):  # static unroll; rows ordered (tf, c) match PyTorch reshape
            part = t[:, tf].reshape(B * N, C).astype(bf16)
            w = wmat_ref[pl.ds(fc_off + tf * C, C), :]                # (C, Cout2) bf16
            acc = acc + jnp.dot(part, w, preferred_element_type=f32)
        y = acc[:, :T_out] + bias_ref[pl.ds(fc_bias_row, 1), :][:, :T_out]
        o_ref[...] = y.reshape(B, N, T_out).astype(o_ref.dtype)

    return kernel


# ----------------------------------------------------------------------------
# Wrapper: one pallas_call, 5 operands, everything resident in VMEM
# ----------------------------------------------------------------------------
def build_forward(meta):
    kernel = _make_stconv_kernel(meta)
    T_out = meta["t_out"]

    @jax.jit
    def forward(x, wmat, spw, bias, bn):
        # x: (B, num_nodes, T, C) as in the PyTorch module; kernel wants (B, T, N, C)
        x_t = jnp.transpose(x, (0, 2, 1, 3))
        B, _, N, _ = x_t.shape
        args = (x_t, wmat, spw, bias, bn)
        return pl.pallas_call(
            kernel,
            out_shape=jax.ShapeDtypeStruct((B, N, T_out), jnp.float32),
            grid=(1,),
            in_specs=[pl.BlockSpec(a.shape, lambda i, nd=a.ndim: (0,) * nd) for a in args],
            out_specs=pl.BlockSpec((B, N, T_out), lambda i: (0, 0, 0)),
            compiler_params=pltpu.CompilerParams(dimension_semantics=("arbitrary",)),
        )(*args)

    return forward


# ----------------------------------------------------------------------------
# Parameter packing (plain JAX, done once):
#   wmat : bf16 (R, 2*tch)  5 fused gate weights (im2col rows, residual folded into tap 0,
#                           row-padded to multiples of 16) + FC weight (output cols padded)
#   spw  : bf16 (2*Ks*tch, sch)  both spatial conv weights, im2col rows, stacked
#   bias : f32  (8, 2*tch)  rows 0-4 gate biases, 5-6 spatial biases, 7 FC bias (lane-padded)
#   bn   : f32  (N, 4)      per-node BN affine: [gamma1, beta1, gamma2, beta2] columns
# ----------------------------------------------------------------------------
def pack_params(params, Kt=3, Ks=3):
    def fuse_gate(w1, b1, w2, b2):
        K, Cin, Cout = w1.shape
        w1_eff = w1.at[0].add(jnp.eye(Cin, Cout, dtype=w1.dtype))   # fold residual into tap 0
        w = jnp.concatenate([w1_eff, w2], axis=-1).reshape(K * Cin, 2 * Cout)
        b = jnp.concatenate([b1, b2], axis=-1)                      # (1, 2*Cout)
        return w, b

    p1, p2 = params["block1"], params["block2"]
    gates = [
        (p1["t1_w1"], p1["t1_b1"], p1["t1_w2"], p1["t1_b2"]),
        (p1["t2_w1"], p1["t2_b1"], p1["t2_w2"], p1["t2_b2"]),
        (p2["t1_w1"], p2["t1_b1"], p2["t1_w2"], p2["t1_b2"]),
        (p2["t2_w1"], p2["t2_b1"], p2["t2_w2"], p2["t2_b2"]),
        (params["lt_w1"], params["lt_b1"], params["lt_w2"], params["lt_b2"]),
    ]
    gate_ws, gate_bs = zip(*[fuse_gate(*g) for g in gates])

    width = gate_ws[0].shape[1]                      # 2 * temporal_channel
    blocks, gate_segs, off = [], [], 0
    for i, w in enumerate(gate_ws):
        kcin = w.shape[0]
        padded = -(-kcin // 16) * 16                 # bf16 sublane-tile aligned
        blocks.append(jnp.pad(w, ((0, padded - kcin), (0, 0))))
        gate_segs.append((off, kcin, i))
        off += padded
    fc_w = params["fc_w"]                            # (Tf*tch, T_out)
    blocks.append(jnp.pad(fc_w, ((0, 0), (0, width - fc_w.shape[1]))))
    fc_seg = (off, 7)
    wmat = jnp.concatenate(blocks, axis=0).astype(jnp.bfloat16)

    sp_blocks, sp_segs, sp_off = [], [], 0
    for i, p in enumerate((p1, p2)):
        w = p["sp_w"]                                # (Ks, tch, sch)
        rows = w.shape[0] * w.shape[1]
        sp_blocks.append(w.reshape(rows, w.shape[2]))
        sp_segs.append((sp_off, rows, 5 + i))
        sp_off += rows
    spw = jnp.concatenate(sp_blocks, axis=0).astype(jnp.bfloat16)

    def pad_row(v):
        v = v.reshape(1, -1)
        return jnp.pad(v, ((0, 0), (0, width - v.shape[1])))

    bias = jnp.concatenate(
        list(gate_bs) + [pad_row(p1["sp_b"]), pad_row(p2["sp_b"]), pad_row(params["fc_b"])],
        axis=0).astype(jnp.float32)
    bn = jnp.stack([p1["bn_gamma"], p1["bn_beta"], p2["bn_gamma"], p2["bn_beta"]],
                   axis=1).astype(jnp.float32)

    meta = dict(Kt=Kt, Ks=Ks, gate=gate_segs, sp=sp_segs, fc=fc_seg,
                t_out=int(params["fc_w"].shape[1]))
    return (wmat, spw, bias, bn), meta


# ----------------------------------------------------------------------------
# Deterministic parameter initialization (synthetic; same shapes as the PyTorch module)
# ----------------------------------------------------------------------------
def _conv_params(key, K, cin, cout):
    kw, kb = jax.random.split(key)
    w = 0.1 * jax.random.normal(kw, (K, cin, cout), jnp.float32)
    b = 0.01 * jax.random.normal(kb, (1, cout), jnp.float32)
    return w, b


def _time_block_params(key, cin, cout, Kt=3):
    k1, k2 = jax.random.split(key)
    w1, b1 = _conv_params(k1, Kt, cin, cout)
    w2, b2 = _conv_params(k2, Kt, cin, cout)
    return w1, b1, w2, b2


def _st_block_params(key, cin, spatial_ch, cout, num_nodes, Ks):
    k1, k2, k3 = jax.random.split(key, 3)
    t1_w1, t1_b1, t1_w2, t1_b2 = _time_block_params(k1, cin, cout)
    sp_w, sp_b = _conv_params(k2, Ks, cout, spatial_ch)
    t2_w1, t2_b1, t2_w2, t2_b2 = _time_block_params(k3, spatial_ch, cout)
    return dict(
        t1_w1=t1_w1, t1_b1=t1_b1, t1_w2=t1_w2, t1_b2=t1_b2,
        sp_w=sp_w, sp_b=sp_b,
        t2_w1=t2_w1, t2_b1=t2_b1, t2_w2=t2_w2, t2_b2=t2_b2,
        bn_gamma=jnp.ones((num_nodes,), jnp.float32),
        bn_beta=jnp.zeros((num_nodes,), jnp.float32),
    )


def init_params(key, num_nodes, num_features, num_timesteps_input,
                num_timesteps_output, Ks, Kt):
    spatial_ch, temporal_ch = 16, 64
    kb1, kb2, klt, kfc = jax.random.split(key, 4)
    block1 = _st_block_params(kb1, num_features, spatial_ch, temporal_ch, num_nodes, Ks)
    block2 = _st_block_params(kb2, temporal_ch, spatial_ch, temporal_ch, num_nodes, Ks)
    lt_w1, lt_b1, lt_w2, lt_b2 = _time_block_params(klt, temporal_ch, temporal_ch)
    D = (num_timesteps_input - (Kt - 1) * 5) * temporal_ch
    kw, kb = jax.random.split(kfc)
    fc_w = 0.1 * jax.random.normal(kw, (D, num_timesteps_output), jnp.float32)
    fc_b = 0.01 * jax.random.normal(kb, (1, num_timesteps_output), jnp.float32)
    return dict(block1=block1, block2=block2,
                lt_w1=lt_w1, lt_b1=lt_b1, lt_w2=lt_w2, lt_b2=lt_b2,
                fc_w=fc_w, fc_b=fc_b)


# ----------------------------------------------------------------------------
# Pure-JAX fp32 reference (unfused weights, explicit residual/padding) for a sanity check
# ----------------------------------------------------------------------------
def _ref_time_block(x, w1, b1, w2, b2):
    K, Cin, Cout = w1.shape
    B, N, T, _ = x.shape
    Tout = T - (K - 1)
    xp_ = jnp.zeros((B, N, Tout, Cout), jnp.float32)
    xq_ = jnp.zeros((B, N, Tout, Cout), jnp.float32)
    for k in range(K):
        xs = x[:, :, k:k + Tout, :]
        xp_ = xp_ + jnp.einsum("bntc,cd->bntd", xs, w1[k])
        xq_ = xq_ + jnp.einsum("bntc,cd->bntd", xs, w2[k])
    xp_ = xp_ + b1.reshape(1, 1, 1, Cout)
    xq_ = xq_ + b2.reshape(1, 1, 1, Cout)
    res = jnp.pad(x[:, :, :Tout, :], ((0, 0), (0, 0), (0, 0), (0, Cout - Cin)))
    return (res + xp_) * jax.nn.sigmoid(xq_)


def _ref_spatial_relu(x, w, b):
    K, Cin, Cout = w.shape
    pad = (K - 1) // 2
    B, N, T, _ = x.shape
    xp = jnp.pad(x, ((0, 0), (pad, pad), (0, 0), (0, 0)))
    out = jnp.zeros((B, N, T, Cout), jnp.float32)
    for k in range(K):
        out = out + jnp.einsum("bntc,cd->bntd", xp[:, k:k + N], w[k])
    return jax.nn.relu(out + b.reshape(1, 1, 1, Cout))


def _ref_batch_norm(x, g, bt):
    mean = x.mean(axis=(0, 2, 3), keepdims=True)
    var = ((x - mean) ** 2).mean(axis=(0, 2, 3), keepdims=True)
    return (x - mean) * jax.lax.rsqrt(var + 1e-5) * g.reshape(1, -1, 1, 1) + bt.reshape(1, -1, 1, 1)


def st_conv_reference(x, params):
    def block(x, p):
        t = _ref_time_block(x, p["t1_w1"], p["t1_b1"], p["t1_w2"], p["t1_b2"])
        t = _ref_spatial_relu(t, p["sp_w"], p["sp_b"])
        t = _ref_time_block(t, p["t2_w1"], p["t2_b1"], p["t2_w2"], p["t2_b2"])
        return _ref_batch_norm(t, p["bn_gamma"], p["bn_beta"])

    t = block(x, params["block1"])
    t = block(t, params["block2"])
    t = _ref_time_block(t, params["lt_w1"], params["lt_b1"],
                        params["lt_w2"], params["lt_b2"])
    B, N = t.shape[0], t.shape[1]
    flat = t.reshape(B, N, -1)
    return flat @ params["fc_w"] + params["fc_b"].reshape(1, 1, -1)


# ----------------------------------------------------------------------------
if __name__ == "__main__":
    # Small shapes consistent with the module. TimeBlock's kernel is hard-coded to 3,
    # so Kt must be 3 for STConv's final Linear in-feature count to match.
    B, num_nodes, T_in, num_features = 2, 8, 12, 3
    Ks, Kt, T_out = 3, 3, 4

    key = jax.random.PRNGKey(0)
    k_param, k_x = jax.random.split(key)
    params = init_params(k_param, num_nodes, num_features, T_in, T_out, Ks, Kt)
    packed, meta = pack_params(params, Kt=Kt, Ks=Ks)
    forward = build_forward(meta)

    # layout: x is (batch, num_nodes, num_timesteps, num_features), as in the PyTorch module.
    x = jax.random.normal(k_x, (B, num_nodes, T_in, num_features), jnp.float32)

    y = forward(x, *packed)
    jax.block_until_ready(y)

    assert y.shape == (B, num_nodes, T_out), y.shape
    assert bool(jnp.all(jnp.isfinite(y)))

    # Sanity check against the unfused fp32 reference (tolerance covers the intentional
    # bf16 matmul operands with fp32 accumulation).
    y_ref = st_conv_reference(x, params)
    np.testing.assert_allclose(np.asarray(y), np.asarray(y_ref), rtol=5e-2, atol=5e-2)

    print("KERNEL_OK")
</pallas_src>

<mosaic_0001>
module attributes {stable_mosaic.version = 11 : i64} {
  func.func @kernel(%arg0: i32, %arg1: memref<2x12x8x3xf32, #tpu.memory_space<vmem>>, %arg2: memref<624x128xbf16, #tpu.memory_space<vmem>>, %arg3: memref<384x16xbf16, #tpu.memory_space<vmem>>, %arg4: memref<8x128xf32, #tpu.memory_space<vmem>>, %arg5: memref<8x4xf32, #tpu.memory_space<vmem>>, %arg6: memref<2x8x4xf32, #tpu.memory_space<vmem>>) attributes {dimension_semantics = [#tpu.dimension_semantics<arbitrary>], iteration_bounds = array<i64: 1>, scalar_prefetch = 0 : i64, scratch_operands = 0 : i64, tpu.core_type = #tpu.core_type<tc>, window_params = [{pipeline_mode = #tpu.pipeline_mode<synchronous>, transform_indices = @transform_0, window_bounds = array<i64: 2, 12, 8, 3>}, {pipeline_mode = #tpu.pipeline_mode<synchronous>, transform_indices = @transform_1, window_bounds = array<i64: 624, 128>}, {pipeline_mode = #tpu.pipeline_mode<synchronous>, transform_indices = @transform_2, window_bounds = array<i64: 384, 16>}, {pipeline_mode = #tpu.pipeline_mode<synchronous>, transform_indices = @transform_3, window_bounds = array<i64: 8, 128>}, {pipeline_mode = #tpu.pipeline_mode<synchronous>, transform_indices = @transform_4, window_bounds = array<i64: 8, 4>}, {pipeline_mode = #tpu.pipeline_mode<synchronous>, transform_indices = @transform_5, window_bounds = array<i64: 2, 8, 4>}]} {
    %c0 = arith.constant 0 : index
    %c0_0 = arith.constant 0 : index
    %0 = vector.load %arg5[%c0, %c0_0] : memref<8x4xf32, #tpu.memory_space<vmem>>, vector<8x4xf32>
    %c0_1 = arith.constant 0 : index
    %c0_2 = arith.constant 0 : index
    %c0_3 = arith.constant 0 : index
    %c0_4 = arith.constant 0 : index
    %1 = vector.load %arg1[%c0_1, %c0_2, %c0_3, %c0_4] : memref<2x12x8x3xf32, #tpu.memory_space<vmem>>, vector<2x12x8x3xf32>
    %2 = arith.truncf %1 : vector<2x12x8x3xf32> to vector<2x12x8x3xbf16>
    %3 = vector.extract_strided_slice %2 {offsets = [0, 0, 0, 0], sizes = [2, 10, 8, 3], strides = [1, 1, 1, 1]} : vector<2x12x8x3xbf16> to vector<2x10x8x3xbf16>
    %4 = vector.extract_strided_slice %2 {offsets = [0, 1, 0, 0], sizes = [2, 10, 8, 3], strides = [1, 1, 1, 1]} : vector<2x12x8x3xbf16> to vector<2x10x8x3xbf16>
    %5 = vector.extract_strided_slice %2 {offsets = [0, 2, 0, 0], sizes = [2, 10, 8, 3], strides = [1, 1, 1, 1]} : vector<2x12x8x3xbf16> to vector<2x10x8x3xbf16>
    %6 = tpu.concatenate %3, %4, %5 in 3 : vector<2x10x8x3xbf16>, vector<2x10x8x3xbf16>, vector<2x10x8x3xbf16> -> vector<2x10x8x9xbf16>
    %7 = vector.shape_cast %6 : vector<2x10x8x9xbf16> to vector<160x9xbf16>
    %c0_5 = arith.constant 0 : index
    %c0_6 = arith.constant 0 : index
    %8 = vector.load %arg2[%c0_5, %c0_6] : memref<624x128xbf16, #tpu.memory_space<vmem>>, vector<9x128xbf16>
    %cst = arith.constant dense<0.000000e+00> : vector<160x128xf32>
    %9 = tpu.matmul %7, %8, %cst {dimension_numbers = #tpu.dot_dimension_numbers<[1], [0], [0], [1], [0, 0, 1, 1], [], []>} : vector<160x9xbf16>, vector<9x128xbf16>, vector<160x128xf32> -> vector<160x128xf32>
    %10 = vector.shape_cast %9 : vector<160x128xf32> to vector<2x10x8x128xf32>
    %c0_7 = arith.constant 0 : index
    %c0_8 = arith.constant 0 : index
    %11 = vector.load %arg4[%c0_7, %c0_8] : memref<8x128xf32, #tpu.memory_space<vmem>>, vector<1x128xf32>
    %12 = vector.shape_cast %11 : vector<1x128xf32> to vector<1x1x1x128xf32>
    %13 = vector.broadcast %12 : vector<1x1x1x128xf32> to vector<2x10x8x128xf32>
    %14 = arith.addf %10, %13 : vector<2x10x8x128xf32>
    %15 = vector.extract_strided_slice %14 {offsets = [0, 0, 0, 0], sizes = [2, 10, 8, 64], strides = [1, 1, 1, 1]} : vector<2x10x8x128xf32> to vector<2x10x8x64xf32>
    %16 = vector.extract_strided_slice %14 {offsets = [0, 0, 0, 64], sizes = [2, 10, 8, 64], strides = [1, 1, 1, 1]} : vector<2x10x8x128xf32> to vector<2x10x8x64xf32>
    %cst_9 = arith.constant 0.000000e+00 : f32
    %17 = vector.broadcast %cst_9 : f32 to vector<2x10x8x64xf32>
    %18 = arith.subf %17, %16 : vector<2x10x8x64xf32>
    %19 = math.exp %18 : vector<2x10x8x64xf32>
    %cst_10 = arith.constant 1.000000e+00 : f32
    %20 = vector.broadcast %cst_10 : f32 to vector<2x10x8x64xf32>
    %21 = arith.addf %20, %19 : vector<2x10x8x64xf32>
    %22 = tpu.reciprocal %21 {approx = true} : vector<2x10x8x64xf32> -> vector<2x10x8x64xf32>
    %23 = arith.mulf %15, %22 : vector<2x10x8x64xf32>
    %24 = arith.truncf %23 : vector<2x10x8x64xf32> to vector<2x10x8x64xbf16>
    %cst_11 = arith.constant 0.000000e+00 : bf16
    %25 = vector.broadcast %cst_11 : bf16 to vector<2x10x1x64xbf16>
    %26 = vector.extract_strided_slice %24 {offsets = [0, 0, 0, 0], sizes = [2, 10, 7, 64], strides = [1, 1, 1, 1]} : vector<2x10x8x64xbf16> to vector<2x10x7x64xbf16>
    %27 = tpu.concatenate %25, %26 in 2 : vector<2x10x1x64xbf16>, vector<2x10x7x64xbf16> -> vector<2x10x8x64xbf16>
    %cst_12 = arith.constant 0.000000e+00 : bf16
    %28 = vector.broadcast %cst_12 : bf16 to vector<2x10x1x64xbf16>
    %29 = vector.extract_strided_slice %24 {offsets = [0, 0, 1, 0], sizes = [2, 10, 7, 64], strides = [1, 1, 1, 1]} : vector<2x10x8x64xbf16> to vector<2x10x7x64xbf16>
    %30 = tpu.concatenate %29, %28 in 2 : vector<2x10x7x64xbf16>, vector<2x10x1x64xbf16> -> vector<2x10x8x64xbf16>
    %31 = tpu.concatenate %27, %24, %30 in 3 : vector<2x10x8x64xbf16>, vector<2x10x8x64xbf16>, vector<2x10x8x64xbf16> -> vector<2x10x8x192xbf16>
    %32 = vector.shape_cast %31 : vector<2x10x8x192xbf16> to vector<160x192xbf16>
    %c0_13 = arith.constant 0 : index
    %c0_14 = arith.constant 0 : index
    %33 = vector.load %arg3[%c0_13, %c0_14] : memref<384x16xbf16, #tpu.memory_space<vmem>>, vector<192x16xbf16>
    %cst_15 = arith.constant dense<0.000000e+00> : vector<160x16xf32>
    %34 = tpu.matmul %32, %33, %cst_15 {dimension_numbers = #tpu.dot_dimension_numbers<[1], [0], [0], [1], [0, 0, 1, 1], [], []>} : vector<160x192xbf16>, vector<192x16xbf16>, vector<160x16xf32> -> vector<160x16xf32>
    %35 = vector.shape_cast %34 : vector<160x16xf32> to vector<2x10x8x16xf32>
    %c5 = arith.constant 5 : index
    %c0_16 = arith.constant 0 : index
    %36 = vector.load %arg4[%c5, %c0_16] : memref<8x128xf32, #tpu.memory_space<vmem>>, vector<1x128xf32>
    %37 = vector.extract_strided_slice %36 {offsets = [0, 0], sizes = [1, 16], strides = [1, 1]} : vector<1x128xf32> to vector<1x16xf32>
    %38 = vector.shape_cast %37 : vector<1x16xf32> to vector<1x1x1x16xf32>
    %39 = vector.broadcast %38 : vector<1x1x1x16xf32> to vector<2x10x8x16xf32>
    %40 = arith.addf %35, %39 : vector<2x10x8x16xf32>
    %cst_17 = arith.constant 0.000000e+00 : f32
    %41 = vector.broadcast %cst_17 : f32 to vector<2x10x8x16xf32>
    %42 = arith.maximumf %40, %41 : vector<2x10x8x16xf32>
    %43 = arith.truncf %42 : vector<2x10x8x16xf32> to vector<2x10x8x16xbf16>
    %44 = vector.extract_strided_slice %43 {offsets = [0, 0, 0, 0], sizes = [2, 8, 8, 16], strides = [1, 1, 1, 1]} : vector<2x10x8x16xbf16> to vector<2x8x8x16xbf16>
    %45 = vector.extract_strided_slice %43 {offsets = [0, 1, 0, 0], sizes = [2, 8, 8, 16], strides = [1, 1, 1, 1]} : vector<2x10x8x16xbf16> to vector<2x8x8x16xbf16>
    %46 = vector.extract_strided_slice %43 {offsets = [0, 2, 0, 0], sizes = [2, 8, 8, 16], strides = [1, 1, 1, 1]} : vector<2x10x8x16xbf16> to vector<2x8x8x16xbf16>
    %47 = tpu.concatenate %44, %45, %46 in 3 : vector<2x8x8x16xbf16>, vector<2x8x8x16xbf16>, vector<2x8x8x16xbf16> -> vector<2x8x8x48xbf16>
    %48 = vector.shape_cast %47 : vector<2x8x8x48xbf16> to vector<128x48xbf16>
    %c16 = arith.constant 16 : index
    %c0_18 = arith.constant 0 : index
    %49 = vector.load %arg2[%c16, %c0_18] : memref<624x128xbf16, #tpu.memory_space<vmem>>, vector<48x128xbf16>
    %cst_19 = arith.constant dense<0.000000e+00> : vector<128x128xf32>
    %50 = tpu.matmul %48, %49, %cst_19 {dimension_numbers = #tpu.dot_dimension_numbers<[1], [0], [0], [1], [0, 0, 1, 1], [], []>} : vector<128x48xbf16>, vector<48x128xbf16>, vector<128x128xf32> -> vector<128x128xf32>
    %51 = vector.shape_cast %50 : vector<128x128xf32> to vector<2x8x8x128xf32>
    %c1 = arith.constant 1 : index
    %c0_20 = arith.constant 0 : index
    %52 = vector.load %arg4[%c1, %c0_20] : memref<8x128xf32, #tpu.memory_space<vmem>>, vector<1x128xf32>
    %53 = vector.shape_cast %52 : vector<1x128xf32> to vector<1x1x1x128xf32>
    %54 = vector.broadcast %53 : vector<1x1x1x128xf32> to vector<2x8x8x128xf32>
    %55 = arith.addf %51, %54 : vector<2x8x8x128xf32>
    %56 = vector.extract_strided_slice %55 {offsets = [0, 0, 0, 0], sizes = [2, 8, 8, 64], strides = [1, 1, 1, 1]} : vector<2x8x8x128xf32> to vector<2x8x8x64xf32>
    %57 = vector.extract_strided_slice %55 {offsets = [0, 0, 0, 64], sizes = [2, 8, 8, 64], strides = [1, 1, 1, 1]} : vector<2x8x8x128xf32> to vector<2x8x8x64xf32>
    %cst_21 = arith.constant 0.000000e+00 : f32
    %58 = vector.broadcast %cst_21 : f32 to vector<2x8x8x64xf32>
    %59 = arith.subf %58, %57 : vector<2x8x8x64xf32>
    %60 = math.exp %59 : vector<2x8x8x64xf32>
    %cst_22 = arith.constant 1.000000e+00 : f32
    %61 = vector.broadcast %cst_22 : f32 to vector<2x8x8x64xf32>
    %62 = arith.addf %61, %60 : vector<2x8x8x64xf32>
    %63 = tpu.reciprocal %62 {approx = true} : vector<2x8x8x64xf32> -> vector<2x8x8x64xf32>
    %64 = arith.mulf %56, %63 : vector<2x8x8x64xf32>
    %cst_23 = arith.constant dense<0.000000e+00> : vector<8xf32>
    %65 = vector.multi_reduction <add>, %64, %cst_23 [0, 1, 3] : vector<2x8x8x64xf32> to vector<8xf32>
    %66 = vector.shape_cast %65 : vector<8xf32> to vector<1x1x8x1xf32>
    %67 = arith.mulf %64, %64 : vector<2x8x8x64xf32>
    %cst_24 = arith.constant dense<0.000000e+00> : vector<8xf32>
    %68 = vector.multi_reduction <add>, %67, %cst_24 [0, 1, 3] : vector<2x8x8x64xf32> to vector<8xf32>
    %69 = vector.shape_cast %68 : vector<8xf32> to vector<1x1x8x1xf32>
    %cst_25 = arith.constant 9.765625E-4 : f32
    %70 = vector.broadcast %cst_25 : f32 to vector<1x1x8x1xf32>
    %71 = arith.mulf %66, %70 : vector<1x1x8x1xf32>
    %cst_26 = arith.constant 9.765625E-4 : f32
    %72 = vector.broadcast %cst_26 : f32 to vector<1x1x8x1xf32>
    %73 = arith.mulf %69, %72 : vector<1x1x8x1xf32>
    %74 = arith.mulf %71, %71 : vector<1x1x8x1xf32>
    %75 = arith.subf %73, %74 : vector<1x1x8x1xf32>
    %76 = vector.extract_strided_slice %0 {offsets = [0, 0], sizes = [8, 1], strides = [1, 1]} : vector<8x4xf32> to vector<8x1xf32>
    %77 = vector.shape_cast %76 : vector<8x1xf32> to vector<1x1x8x1xf32>
    %78 = vector.extract_strided_slice %0 {offsets = [0, 1], sizes = [8, 1], strides = [1, 1]} : vector<8x4xf32> to vector<8x1xf32>
    %79 = vector.shape_cast %78 : vector<8x1xf32> to vector<1x1x8x1xf32>
    %cst_27 = arith.constant 9.99999974E-6 : f32
    %80 = vector.broadcast %cst_27 : f32 to vector<1x1x8x1xf32>
    %81 = arith.addf %75, %80 : vector<1x1x8x1xf32>
    %82 = math.rsqrt %81 : vector<1x1x8x1xf32>
    %83 = arith.mulf %77, %82 : vector<1x1x8x1xf32>
    %84 = vector.broadcast %83 : vector<1x1x8x1xf32> to vector<2x8x8x64xf32>
    %85 = arith.mulf %64, %84 : vector<2x8x8x64xf32>
    %86 = arith.mulf %71, %83 : vector<1x1x8x1xf32>
    %87 = arith.subf %79, %86 : vector<1x1x8x1xf32>
    %88 = vector.broadcast %87 : vector<1x1x8x1xf32> to vector<2x8x8x64xf32>
    %89 = arith.addf %85, %88 : vector<2x8x8x64xf32>
    %90 = arith.truncf %89 : vector<2x8x8x64xf32> to vector<2x8x8x64xbf16>
    %91 = vector.extract_strided_slice %90 {offsets = [0, 0, 0, 0], sizes = [2, 6, 8, 64], strides = [1, 1, 1, 1]} : vector<2x8x8x64xbf16> to vector<2x6x8x64xbf16>
    %92 = vector.extract_strided_slice %90 {offsets = [0, 1, 0, 0], sizes = [2, 6, 8, 64], strides = [1, 1, 1, 1]} : vector<2x8x8x64xbf16> to vector<2x6x8x64xbf16>
    %93 = vector.extract_strided_slice %90 {offsets = [0, 2, 0, 0], sizes = [2, 6, 8, 64], strides = [1, 1, 1, 1]} : vector<2x8x8x64xbf16> to vector<2x6x8x64xbf16>
    %94 = tpu.concatenate %91, %92, %93 in 3 : vector<2x6x8x64xbf16>, vector<2x6x8x64xbf16>, vector<2x6x8x64xbf16> -> vector<2x6x8x192xbf16>
    %95 = vector.shape_cast %94 : vector<2x6x8x192xbf16> to vector<96x192xbf16>
    %c64 = arith.constant 64 : index
    %c0_28 = arith.constant 0 : index
    %96 = vector.load %arg2[%c64, %c0_28] : memref<624x128xbf16, #tpu.memory_space<vmem>>, vector<192x128xbf16>
    %cst_29 = arith.constant dense<0.000000e+00> : vector<96x128xf32>
    %97 = tpu.matmul %95, %96, %cst_29 {dimension_numbers = #tpu.dot_dimension_numbers<[1], [0], [0], [1], [0, 0, 1, 1], [], []>} : vector<96x192xbf16>, vector<192x128xbf16>, vector<96x128xf32> -> vector<96x128xf32>
    %98 = vector.shape_cast %97 : vector<96x128xf32> to vector<2x6x8x128xf32>
    %c2 = arith.constant 2 : index
    %c0_30 = arith.constant 0 : index
    %99 = vector.load %arg4[%c2, %c0_30] : memref<8x128xf32, #tpu.memory_space<vmem>>, vector<1x128xf32>
    %100 = vector.shape_cast %99 : vector<1x128xf32> to vector<1x1x1x128xf32>
    %101 = vector.broadcast %100 : vector<1x1x1x128xf32> to vector<2x6x8x128xf32>
    %102 = arith.addf %98, %101 : vector<2x6x8x128xf32>
    %103 = vector.extract_strided_slice %102 {offsets = [0, 0, 0, 0], sizes = [2, 6, 8, 64], strides = [1, 1, 1, 1]} : vector<2x6x8x128xf32> to vector<2x6x8x64xf32>
    %104 = vector.extract_strided_slice %102 {offsets = [0, 0, 0, 64], sizes = [2, 6, 8, 64], strides = [1, 1, 1, 1]} : vector<2x6x8x128xf32> to vector<2x6x8x64xf32>
    %cst_31 = arith.constant 0.000000e+00 : f32
    %105 = vector.broadcast %cst_31 : f32 to vector<2x6x8x64xf32>
    %106 = arith.subf %105, %104 : vector<2x6x8x64xf32>
    %107 = math.exp %106 : vector<2x6x8x64xf32>
    %cst_32 = arith.constant 1.000000e+00 : f32
    %108 = vector.broadcast %cst_32 : f32 to vector<2x6x8x64xf32>
    %109 = arith.addf %108, %107 : vector<2x6x8x64xf32>
    %110 = tpu.reciprocal %109 {approx = true} : vector<2x6x8x64xf32> -> vector<2x6x8x64xf32>
    %111 = arith.mulf %103, %110 : vector<2x6x8x64xf32>
    %112 = arith.truncf %111 : vector<2x6x8x64xf32> to vector<2x6x8x64xbf16>
    %cst_33 = arith.constant 0.000000e+00 : bf16
    %113 = vector.broadcast %cst_33 : bf16 to vector<2x6x1x64xbf16>
    %114 = vector.extract_strided_slice %112 {offsets = [0, 0, 0, 0], sizes = [2, 6, 7, 64], strides = [1, 1, 1, 1]} : vector<2x6x8x64xbf16> to vector<2x6x7x64xbf16>
    %115 = tpu.concatenate %113, %114 in 2 : vector<2x6x1x64xbf16>, vector<2x6x7x64xbf16> -> vector<2x6x8x64xbf16>
    %cst_34 = arith.constant 0.000000e+00 : bf16
    %116 = vector.broadcast %cst_34 : bf16 to vector<2x6x1x64xbf16>
    %117 = vector.extract_strided_slice %112 {offsets = [0, 0, 1, 0], sizes = [2, 6, 7, 64], strides = [1, 1, 1, 1]} : vector<2x6x8x64xbf16> to vector<2x6x7x64xbf16>
    %118 = tpu.concatenate %117, %116 in 2 : vector<2x6x7x64xbf16>, vector<2x6x1x64xbf16> -> vector<2x6x8x64xbf16>
    %119 = tpu.concatenate %115, %112, %118 in 3 : vector<2x6x8x64xbf16>, vector<2x6x8x64xbf16>, vector<2x6x8x64xbf16> -> vector<2x6x8x192xbf16>
    %120 = vector.shape_cast %119 : vector<2x6x8x192xbf16> to vector<96x192xbf16>
    %c192 = arith.constant 192 : index
    %c0_35 = arith.constant 0 : index
    %121 = vector.load %arg3[%c192, %c0_35] : memref<384x16xbf16, #tpu.memory_space<vmem>>, vector<192x16xbf16>
    %cst_36 = arith.constant dense<0.000000e+00> : vector<96x16xf32>
    %122 = tpu.matmul %120, %121, %cst_36 {dimension_numbers = #tpu.dot_dimension_numbers<[1], [0], [0], [1], [0, 0, 1, 1], [], []>} : vector<96x192xbf16>, vector<192x16xbf16>, vector<96x16xf32> -> vector<96x16xf32>
    %123 = vector.shape_cast %122 : vector<96x16xf32> to vector<2x6x8x16xf32>
    %c6 = arith.constant 6 : index
    %c0_37 = arith.constant 0 : index
    %124 = vector.load %arg4[%c6, %c0_37] : memref<8x128xf32, #tpu.memory_space<vmem>>, vector<1x128xf32>
    %125 = vector.extract_strided_slice %124 {offsets = [0, 0], sizes = [1, 16], strides = [1, 1]} : vector<1x128xf32> to vector<1x16xf32>
    %126 = vector.shape_cast %125 : vector<1x16xf32> to vector<1x1x1x16xf32>
    %127 = vector.broadcast %126 : vector<1x1x1x16xf32> to vector<2x6x8x16xf32>
    %128 = arith.addf %123, %127 : vector<2x6x8x16xf32>
    %cst_38 = arith.constant 0.000000e+00 : f32
    %129 = vector.broadcast %cst_38 : f32 to vector<2x6x8x16xf32>
    %130 = arith.maximumf %128, %129 : vector<2x6x8x16xf32>
    %131 = arith.truncf %130 : vector<2x6x8x16xf32> to vector<2x6x8x16xbf16>
    %132 = vector.extract_strided_slice %131 {offsets = [0, 0, 0, 0], sizes = [2, 4, 8, 16], strides = [1, 1, 1, 1]} : vector<2x6x8x16xbf16> to vector<2x4x8x16xbf16>
    %133 = vector.extract_strided_slice %131 {offsets = [0, 1, 0, 0], sizes = [2, 4, 8, 16], strides = [1, 1, 1, 1]} : vector<2x6x8x16xbf16> to vector<2x4x8x16xbf16>
    %134 = vector.extract_strided_slice %131 {offsets = [0, 2, 0, 0], sizes = [2, 4, 8, 16], strides = [1, 1, 1, 1]} : vector<2x6x8x16xbf16> to vector<2x4x8x16xbf16>
    %135 = tpu.concatenate %132, %133, %134 in 3 : vector<2x4x8x16xbf16>, vector<2x4x8x16xbf16>, vector<2x4x8x16xbf16> -> vector<2x4x8x48xbf16>
    %136 = vector.shape_cast %135 : vector<2x4x8x48xbf16> to vector<64x48xbf16>
    %c256 = arith.constant 256 : index
    %c0_39 = arith.constant 0 : index
    %137 = vector.load %arg2[%c256, %c0_39] : memref<624x128xbf16, #tpu.memory_space<vmem>>, vector<48x128xbf16>
    %cst_40 = arith.constant dense<0.000000e+00> : vector<64x128xf32>
    %138 = tpu.matmul %136, %137, %cst_40 {dimension_numbers = #tpu.dot_dimension_numbers<[1], [0], [0], [1], [0, 0, 1, 1], [], []>} : vector<64x48xbf16>, vector<48x128xbf16>, vector<64x128xf32> -> vector<64x128xf32>
    %139 = vector.shape_cast %138 : vector<64x128xf32> to vector<2x4x8x128xf32>
    %c3 = arith.constant 3 : index
    %c0_41 = arith.constant 0 : index
    %140 = vector.load %arg4[%c3, %c0_41] : memref<8x128xf32, #tpu.memory_space<vmem>>, vector<1x128xf32>
    %141 = vector.shape_cast %140 : vector<1x128xf32> to vector<1x1x1x128xf32>
    %142 = vector.broadcast %141 : vector<1x1x1x128xf32> to vector<2x4x8x128xf32>
    %143 = arith.addf %139, %142 : vector<2x4x8x128xf32>
    %144 = vector.extract_strided_slice %143 {offsets = [0, 0, 0, 0], sizes = [2, 4, 8, 64], strides = [1, 1, 1, 1]} : vector<2x4x8x128xf32> to vector<2x4x8x64xf32>
    %145 = vector.extract_strided_slice %143 {offsets = [0, 0, 0, 64], sizes = [2, 4, 8, 64], strides = [1, 1, 1, 1]} : vector<2x4x8x128xf32> to vector<2x4x8x64xf32>
    %cst_42 = arith.constant 0.000000e+00 : f32
    %146 = vector.broadcast %cst_42 : f32 to vector<2x4x8x64xf32>
    %147 = arith.subf %146, %145 : vector<2x4x8x64xf32>
    %148 = math.exp %147 : vector<2x4x8x64xf32>
    %cst_43 = arith.constant 1.000000e+00 : f32
    %149 = vector.broadcast %cst_43 : f32 to vector<2x4x8x64xf32>
    %150 = arith.addf %149, %148 : vector<2x4x8x64xf32>
    %151 = tpu.reciprocal %150 {approx = true} : vector<2x4x8x64xf32> -> vector<2x4x8x64xf32>
    %152 = arith.mulf %144, %151 : vector<2x4x8x64xf32>
    %cst_44 = arith.constant dense<0.000000e+00> : vector<8xf32>
    %153 = vector.multi_reduction <add>, %152, %cst_44 [0, 1, 3] : vector<2x4x8x64xf32> to vector<8xf32>
    %154 = vector.shape_cast %153 : vector<8xf32> to vector<1x1x8x1xf32>
    %155 = arith.mulf %152, %152 : vector<2x4x8x64xf32>
    %cst_45 = arith.constant dense<0.000000e+00> : vector<8xf32>
    %156 = vector.multi_reduction <add>, %155, %cst_45 [0, 1, 3] : vector<2x4x8x64xf32> to vector<8xf32>
    %157 = vector.shape_cast %156 : vector<8xf32> to vector<1x1x8x1xf32>
    %cst_46 = arith.constant 0.001953125 : f32
    %158 = vector.broadcast %cst_46 : f32 to vector<1x1x8x1xf32>
    %159 = arith.mulf %154, %158 : vector<1x1x8x1xf32>
    %cst_47 = arith.constant 0.001953125 : f32
    %160 = vector.broadcast %cst_47 : f32 to vector<1x1x8x1xf32>
    %161 = arith.mulf %157, %160 : vector<1x1x8x1xf32>
    %162 = arith.mulf %159, %159 : vector<1x1x8x1xf32>
    %163 = arith.subf %161, %162 : vector<1x1x8x1xf32>
    %164 = vector.extract_strided_slice %0 {offsets = [0, 2], sizes = [8, 1], strides = [1, 1]} : vector<8x4xf32> to vector<8x1xf32>
    %165 = vector.shape_cast %164 : vector<8x1xf32> to vector<1x1x8x1xf32>
    %166 = vector.extract_strided_slice %0 {offsets = [0, 3], sizes = [8, 1], strides = [1, 1]} : vector<8x4xf32> to vector<8x1xf32>
    %167 = vector.shape_cast %166 : vector<8x1xf32> to vector<1x1x8x1xf32>
    %cst_48 = arith.constant 9.99999974E-6 : f32
    %168 = vector.broadcast %cst_48 : f32 to vector<1x1x8x1xf32>
    %169 = arith.addf %163, %168 : vector<1x1x8x1xf32>
    %170 = math.rsqrt %169 : vector<1x1x8x1xf32>
    %171 = arith.mulf %165, %170 : vector<1x1x8x1xf32>
    %172 = vector.broadcast %171 : vector<1x1x8x1xf32> to vector<2x4x8x64xf32>
    %173 = arith.mulf %152, %172 : vector<2x4x8x64xf32>
    %174 = arith.mulf %159, %171 : vector<1x1x8x1xf32>
    %175 = arith.subf %167, %174 : vector<1x1x8x1xf32>
    %176 = vector.broadcast %175 : vector<1x1x8x1xf32> to vector<2x4x8x64xf32>
    %177 = arith.addf %173, %176 : vector<2x4x8x64xf32>
    %178 = arith.truncf %177 : vector<2x4x8x64xf32> to vector<2x4x8x64xbf16>
    %179 = vector.extract_strided_slice %178 {offsets = [0, 0, 0, 0], sizes = [2, 2, 8, 64], strides = [1, 1, 1, 1]} : vector<2x4x8x64xbf16> to vector<2x2x8x64xbf16>
    %180 = vector.extract_strided_slice %178 {offsets = [0, 1, 0, 0], sizes = [2, 2, 8, 64], strides = [1, 1, 1, 1]} : vector<2x4x8x64xbf16> to vector<2x2x8x64xbf16>
    %181 = vector.extract_strided_slice %178 {offsets = [0, 2, 0, 0], sizes = [2, 2, 8, 64], strides = [1, 1, 1, 1]} : vector<2x4x8x64xbf16> to vector<2x2x8x64xbf16>
    %182 = tpu.concatenate %179, %180, %181 in 3 : vector<2x2x8x64xbf16>, vector<2x2x8x64xbf16>, vector<2x2x8x64xbf16> -> vector<2x2x8x192xbf16>
    %183 = vector.shape_cast %182 : vector<2x2x8x192xbf16> to vector<32x192xbf16>
    %c304 = arith.constant 304 : index
    %c0_49 = arith.constant 0 : index
    %184 = vector.load %arg2[%c304, %c0_49] : memref<624x128xbf16, #tpu.memory_space<vmem>>, vector<192x128xbf16>
    %cst_50 = arith.constant dense<0.000000e+00> : vector<32x128xf32>
    %185 = tpu.matmul %183, %184, %cst_50 {dimension_numbers = #tpu.dot_dimension_numbers<[1], [0], [0], [1], [0, 0, 1, 1], [], []>} : vector<32x192xbf16>, vector<192x128xbf16>, vector<32x128xf32> -> vector<32x128xf32>
    %186 = vector.shape_cast %185 : vector<32x128xf32> to vector<2x2x8x128xf32>
    %c4 = arith.constant 4 : index
    %c0_51 = arith.constant 0 : index
    %187 = vector.load %arg4[%c4, %c0_51] : memref<8x128xf32, #tpu.memory_space<vmem>>, vector<1x128xf32>
    %188 = vector.shape_cast %187 : vector<1x128xf32> to vector<1x1x1x128xf32>
    %189 = vector.broadcast %188 : vector<1x1x1x128xf32> to vector<2x2x8x128xf32>
    %190 = arith.addf %186, %189 : vector<2x2x8x128xf32>
    %191 = vector.extract_strided_slice %190 {offsets = [0, 0, 0, 0], sizes = [2, 2, 8, 64], strides = [1, 1, 1, 1]} : vector<2x2x8x128xf32> to vector<2x2x8x64xf32>
    %192 = vector.extract_strided_slice %190 {offsets = [0, 0, 0, 64], sizes = [2, 2, 8, 64], strides = [1, 1, 1, 1]} : vector<2x2x8x128xf32> to vector<2x2x8x64xf32>
    %cst_52 = arith.constant 0.000000e+00 : f32
    %193 = vector.broadcast %cst_52 : f32 to vector<2x2x8x64xf32>
    %194 = arith.subf %193, %192 : vector<2x2x8x64xf32>
    %195 = math.exp %194 : vector<2x2x8x64xf32>
    %cst_53 = arith.constant 1.000000e+00 : f32
    %196 = vector.broadcast %cst_53 : f32 to vector<2x2x8x64xf32>
    %197 = arith.addf %196, %195 : vector<2x2x8x64xf32>
    %198 = tpu.reciprocal %197 {approx = true} : vector<2x2x8x64xf32> -> vector<2x2x8x64xf32>
    %199 = arith.mulf %191, %198 : vector<2x2x8x64xf32>
    %cst_54 = arith.constant 0.000000e+00 : f32
    %200 = vector.broadcast %cst_54 : f32 to vector<16x128xf32>
    %201 = vector.extract_strided_slice %199 {offsets = [0, 0, 0, 0], sizes = [2, 1, 8, 64], strides = [1, 1, 1, 1]} : vector<2x2x8x64xf32> to vector<2x1x8x64xf32>
    %202 = vector.shape_cast %201 : vector<2x1x8x64xf32> to vector<2x8x64xf32>
    %203 = vector.shape_cast %202 : vector<2x8x64xf32> to vector<16x64xf32>
    %204 = arith.truncf %203 : vector<16x64xf32> to vector<16x64xbf16>
    %c496 = arith.constant 496 : index
    %c0_55 = arith.constant 0 : index
    %205 = vector.load %arg2[%c496, %c0_55] : memref<624x128xbf16, #tpu.memory_space<vmem>>, vector<64x128xbf16>
    %cst_56 = arith.constant dense<0.000000e+00> : vector<16x128xf32>
    %206 = tpu.matmul %204, %205, %cst_56 {dimension_numbers = #tpu.dot_dimension_numbers<[1], [0], [0], [1], [0, 0, 1, 1], [], []>} : vector<16x64xbf16>, vector<64x128xbf16>, vector<16x128xf32> -> vector<16x128xf32>
    %207 = arith.addf %200, %206 : vector<16x128xf32>
    %208 = vector.extract_strided_slice %199 {offsets = [0, 1, 0, 0], sizes = [2, 1, 8, 64], strides = [1, 1, 1, 1]} : vector<2x2x8x64xf32> to vector<2x1x8x64xf32>
    %209 = vector.shape_cast %208 : vector<2x1x8x64xf32> to vector<2x8x64xf32>
    %210 = vector.shape_cast %209 : vector<2x8x64xf32> to vector<16x64xf32>
    %211 = arith.truncf %210 : vector<16x64xf32> to vector<16x64xbf16>
    %c560 = arith.constant 560 : index
    %c0_57 = arith.constant 0 : index
    %212 = vector.load %arg2[%c560, %c0_57] : memref<624x128xbf16, #tpu.memory_space<vmem>>, vector<64x128xbf16>
    %cst_58 = arith.constant dense<0.000000e+00> : vector<16x128xf32>
    %213 = tpu.matmul %211, %212, %cst_58 {dimension_numbers = #tpu.dot_dimension_numbers<[1], [0], [0], [1], [0, 0, 1, 1], [], []>} : vector<16x64xbf16>, vector<64x128xbf16>, vector<16x128xf32> -> vector<16x128xf32>
    %214 = arith.addf %207, %213 : vector<16x128xf32>
    %215 = vector.extract_strided_slice %214 {offsets = [0, 0], sizes = [16, 4], strides = [1, 1]} : vector<16x128xf32> to vector<16x4xf32>
    %c7 = arith.constant 7 : index
    %c0_59 = arith.constant 0 : index
    %216 = vector.load %arg4[%c7, %c0_59] : memref<8x128xf32, #tpu.memory_space<vmem>>, vector<1x128xf32>
    %217 = vector.extract_strided_slice %216 {offsets = [0, 0], sizes = [1, 4], strides = [1, 1]} : vector<1x128xf32> to vector<1x4xf32>
    %218 = vector.broadcast %217 : vector<1x4xf32> to vector<16x4xf32>
    %219 = arith.addf %215, %218 : vector<16x4xf32>
    %220 = vector.shape_cast %219 : vector<16x4xf32> to vector<2x8x4xf32>
    %c0_60 = arith.constant 0 : index
    %c0_61 = arith.constant 0 : index
    %c0_62 = arith.constant 0 : index
    %221 = vector.load %arg6[%c0_60, %c0_61, %c0_62] : memref<2x8x4xf32, #tpu.memory_space<vmem>>, vector<2x8x4xf32>
    tpu.vector_store %arg6[%c0_60, %c0_61, %c0_62], %220 {strides = array<i32>} : memref<2x8x4xf32, #tpu.memory_space<vmem>>, vector<2x8x4xf32>,
    return
  }
  func.func @transform_0(%arg0: i32) -> (i32, i32, i32, i32) {
    %c0_i32 = arith.constant 0 : i32
    %c0_i32_0 = arith.constant 0 : i32
    %c0_i32_1 = arith.constant 0 : i32
    %c0_i32_2 = arith.constant 0 : i32
    %c0_i32_3 = arith.constant 0 : i32
    return %c0_i32, %c0_i32_0, %c0_i32_1, %c0_i32_2 : i32, i32, i32, i32
  }
  func.func @transform_1(%arg0: i32) -> (i32, i32) {
    %c0_i32 = arith.constant 0 : i32
    %c0_i32_0 = arith.constant 0 : i32
    %c0_i32_1 = arith.constant 0 : i32
    return %c0_i32, %c0_i32_0 : i32, i32
  }
  func.func @transform_2(%arg0: i32) -> (i32, i32) {
    %c0_i32 = arith.constant 0 : i32
    %c0_i32_0 = arith.constant 0 : i32
    %c0_i32_1 = arith.constant 0 : i32
    return %c0_i32, %c0_i32_0 : i32, i32
  }
  func.func @transform_3(%arg0: i32) -> (i32, i32) {
    %c0_i32 = arith.constant 0 : i32
    %c0_i32_0 = arith.constant 0 : i32
    %c0_i32_1 = arith.constant 0 : i32
    return %c0_i32, %c0_i32_0 : i32, i32
  }
  func.func @transform_4(%arg0: i32) -> (i32, i32) {
    %c0_i32 = arith.constant 0 : i32
    %c0_i32_0 = arith.constant 0 : i32
    %c0_i32_1 = arith.constant 0 : i32
    return %c0_i32, %c0_i32_0 : i32, i32
  }
  func.func @transform_5(%arg0: i32) -> (i32, i32, i32) {
    %c0_i32 = arith.constant 0 : i32
    %c0_i32_0 = arith.constant 0 : i32
    %c0_i32_1 = arith.constant 0 : i32
    %c0_i32_2 = arith.constant 0 : i32
    return %c0_i32, %c0_i32_0, %c0_i32_1 : i32, i32, i32
  }
}

</mosaic_0001>

<llo_original>
// kernel: forward.1
$region0: #{forward.1}
  #allocation0 [shape = 'u32[]', space=smem, size = 0x4, offset = 0x4, fixed_abs, tag = 'smem constant byte address 0x4 - core index']
  #allocation1 [shape = 'u32[72,128]{1,0:T(1,128)}', space=vmem, size = 0x9000, scoped, tag = 'internal scratch']
  %s0 = inlined_call_operand.vmem [shape: f32[2,12,8,3], index: 0, kind: input, shape index: {}]
  %s1 = inlined_call_operand.vmem [shape: bf16[624,128], index: 1, kind: input, shape index: {}]
  %s2 = inlined_call_operand.vmem [shape: bf16[384,16], index: 2, kind: input, shape index: {}]
  %s3 = inlined_call_operand.vmem [shape: f32[8,128], index: 3, kind: input, shape index: {}]
  %s4 = inlined_call_operand.vmem [shape: f32[8,4], index: 4, kind: input, shape index: {}]
  %s5 = inlined_call_operand.vmem [shape: f32[2,8,4], index: 5, kind: output, shape index: {}]
  %s6 = sld [smem:[#allocation0]]
  $region30: #{forward.1} parent=0
    _
  %s8 = ssub.s32 1, %s6
  %s9 = scalar_select 0, %s8, %s6
  // Predicated region
  $region2: #{forward.1} parent=0 // pred_check
    _
  $region3: #{forward.1} parent=0 // pred_check_branch
    %11 = sbr.rel (0) target = $region5
  $region4: #{forward.1} parent=0 // pred_region
    _
  $region5: #{forward.1} parent=0 // pred_fallthru
    _
  // Predicated region
  $region6: #{forward.1} parent=0 // pred_check
    _
  $region7: #{forward.1} parent=0 // pred_check_branch
    %13 = sbr.rel (0) target = $region9
  $region8: #{forward.1} parent=0 // pred_region
    _
  $region9: #{forward.1} parent=0 // pred_fallthru
    _
  // Predicated region
  $region10: #{forward.1} parent=0 // pred_check
    _
  $region11: #{forward.1} parent=0 // pred_check_branch
    %15 = sbr.rel (0) target = $region13
  $region12: #{forward.1} parent=0 // pred_region
    _
  $region13: #{forward.1} parent=0 // pred_fallthru
    _
  // Predicated region
  $region14: #{forward.1} parent=0 // pred_check
    _
  $region15: #{forward.1} parent=0 // pred_check_branch
    %17 = sbr.rel (0) target = $region17
  $region16: #{forward.1} parent=0 // pred_region
    _
  $region17: #{forward.1} parent=0 // pred_fallthru
    _
  // Predicated region
  $region18: #{forward.1} parent=0 // pred_check
    _
  $region19: #{forward.1} parent=0 // pred_check_branch
    %19 = sbr.rel (0) target = $region21
  $region20: #{forward.1} parent=0 // pred_region
    _
  $region21: #{forward.1} parent=0 // pred_fallthru
    _
  %v21 = vld [vmem:[%s4] sm:$0xff]
  %v22 = vld [vmem:[%s0] sm:$0xff]
  %v23 = vld [vmem:[%s0 + $0x8] sm:$0xff]
  %v24 = vld [vmem:[%s0 + $0x10] sm:$0xff]
  %v25 = vld [vmem:[%s0 + $0x18] sm:$0xff]
  %v26 = vld [vmem:[%s0 + $0x20] sm:$0xff]
  %v27 = vld [vmem:[%s0 + $0x28] sm:$0xff]
  %v28 = vld [vmem:[%s0 + $0x30] sm:$0xff]
  %v29 = vld [vmem:[%s0 + $0x38] sm:$0xff]
  %v30 = vld [vmem:[%s0 + $0x40] sm:$0xff]
  %v31 = vld [vmem:[%s0 + $0x48] sm:$0xff]
  %v32 = vld [vmem:[%s0 + $0x50] sm:$0xff]
  %v33 = vld [vmem:[%s0 + $0x58] sm:$0xff]
  %v34 = vld [vmem:[%s0 + $0x60] sm:$0xff]
  %v35 = vld [vmem:[%s0 + $0x68] sm:$0xff]
  %v36 = vld [vmem:[%s0 + $0x70] sm:$0xff]
  %v37 = vld [vmem:[%s0 + $0x78] sm:$0xff]
  %v38 = vld [vmem:[%s0 + $0x80] sm:$0xff]
  %v39 = vld [vmem:[%s0 + $0x88] sm:$0xff]
  %v40 = vld [vmem:[%s0 + $0x90] sm:$0xff]
  %v41 = vld [vmem:[%s0 + $0x98] sm:$0xff]
  %v42 = vld [vmem:[%s0 + $0xa0] sm:$0xff]
  %v43 = vld [vmem:[%s0 + $0xa8] sm:$0xff]
  %v44 = vld [vmem:[%s0 + $0xb0] sm:$0xff]
  %v45 = vld [vmem:[%s0 + $0xb8] sm:$0xff]
  %v46 = vpack.c.bf16 %v22, %v22
  %v47 = vpack.c.bf16 %v23, %v23
  %v48 = vpack.c.bf16 %v24, %v24
  %v49 = vpack.c.bf16 %v25, %v25
  %v50 = vpack.c.bf16 %v26, %v26
  %v51 = vpack.c.bf16 %v27, %v27
  %v52 = vpack.c.bf16 %v28, %v28
  %v53 = vpack.c.bf16 %v29, %v29
  %v54 = vpack.c.bf16 %v30, %v30
  %v55 = vpack.c.bf16 %v31, %v31
  %v56 = vpack.c.bf16 %v32, %v32
  %v57 = vpack.c.bf16 %v33, %v33
  %v58 = vpack.c.bf16 %v34, %v34
  %v59 = vpack.c.bf16 %v35, %v35
  %v60 = vpack.c.bf16 %v36, %v36
  %v61 = vpack.c.bf16 %v37, %v37
  %v62 = vpack.c.bf16 %v38, %v38
  %v63 = vpack.c.bf16 %v39, %v39
  %v64 = vpack.c.bf16 %v40, %v40
  %v65 = vpack.c.bf16 %v41, %v41
  %v66 = vpack.c.bf16 %v42, %v42
  %v67 = vpack.c.bf16 %v43, %v43
  %v68 = vpack.c.bf16 %v44, %v44
  %v69 = vpack.c.bf16 %v45, %v45
  %v90 = vunpack.c.l.b16 %v47
  %v91 = vunpack.c.l.b16 %v48
  %v92 = vunpack.c.l.b16 %v49
  %v93 = vunpack.c.l.b16 %v50
  %v94 = vunpack.c.l.b16 %v51
  %v95 = vunpack.c.l.b16 %v52
  %v96 = vunpack.c.l.b16 %v53
  %v97 = vunpack.c.l.b16 %v54
  %v98 = vunpack.c.l.b16 %v55
  %v99 = vunpack.c.l.b16 %v56
  %v100 = vunpack.c.l.b16 %v59
  %v101 = vunpack.c.l.b16 %v60
  %v102 = vunpack.c.l.b16 %v61
  %v103 = vunpack.c.l.b16 %v62
  %v104 = vunpack.c.l.b16 %v63
  %v105 = vunpack.c.l.b16 %v64
  %v106 = vunpack.c.l.b16 %v65
  %v107 = vunpack.c.l.b16 %v66
  %v108 = vunpack.c.l.b16 %v67
  %v109 = vunpack.c.l.b16 %v68
  %v110 = vpack.c.b16 %v90, %v90
  %v111 = vpack.c.b16 %v91, %v91
  %v112 = vpack.c.b16 %v92, %v92
  %v113 = vpack.c.b16 %v93, %v93
  %v114 = vpack.c.b16 %v94, %v94
  %v115 = vpack.c.b16 %v95, %v95
  %v116 = vpack.c.b16 %v96, %v96
  %v117 = vpack.c.b16 %v97, %v97
  %v118 = vpack.c.b16 %v98, %v98
  %v119 = vpack.c.b16 %v99, %v99
  %v120 = vpack.c.b16 %v100, %v100
  %v121 = vpack.c.b16 %v101, %v101
  %v122 = vpack.c.b16 %v102, %v102
  %v123 = vpack.c.b16 %v103, %v103
  %v124 = vpack.c.b16 %v104, %v104
  %v125 = vpack.c.b16 %v105, %v105
  %v126 = vpack.c.b16 %v106, %v106
  %v127 = vpack.c.b16 %v107, %v107
  %v128 = vpack.c.b16 %v108, %v108
  %v129 = vpack.c.b16 %v109, %v109
  %130 = vrot.lane.b32.xlu0 %v110, 3
  %v131 = vpop.permute.xlu0 %130
  %132 = vrot.lane.b32.xlu0 %v111, 3
  %v133 = vpop.permute.xlu0 %132
  %134 = vrot.lane.b32.xlu0 %v112, 3
  %v135 = vpop.permute.xlu0 %134
  %136 = vrot.lane.b32.xlu0 %v113, 3
  %v137 = vpop.permute.xlu0 %136
  %138 = vrot.lane.b32.xlu0 %v114, 3
  %v139 = vpop.permute.xlu0 %138
  %140 = vrot.lane.b32.xlu0 %v115, 3
  %v141 = vpop.permute.xlu0 %140
  %142 = vrot.lane.b32.xlu0 %v116, 3
  %v143 = vpop.permute.xlu0 %142
  %144 = vrot.lane.b32.xlu0 %v117, 3
  %v145 = vpop.permute.xlu0 %144
  %146 = vrot.lane.b32.xlu0 %v118, 3
  %v147 = vpop.permute.xlu0 %146
  %148 = vrot.lane.b32.xlu0 %v119, 3
  %v149 = vpop.permute.xlu0 %148
  %150 = vrot.lane.b32.xlu0 %v120, 3
  %v151 = vpop.permute.xlu0 %150
  %152 = vrot.lane.b32.xlu0 %v121, 3
  %v153 = vpop.permute.xlu0 %152
  %154 = vrot.lane.b32.xlu0 %v122, 3
  %v155 = vpop.permute.xlu0 %154
  %156 = vrot.lane.b32.xlu0 %v123, 3
  %v157 = vpop.permute.xlu0 %156
  %158 = vrot.lane.b32.xlu0 %v124, 3
  %v159 = vpop.permute.xlu0 %158
  %160 = vrot.lane.b32.xlu0 %v125, 3
  %v161 = vpop.permute.xlu0 %160
  %162 = vrot.lane.b32.xlu0 %v126, 3
  %v163 = vpop.permute.xlu0 %162
  %164 = vrot.lane.b32.xlu0 %v127, 3
  %v165 = vpop.permute.xlu0 %164
  %166 = vrot.lane.b32.xlu0 %v128, 3
  %v167 = vpop.permute.xlu0 %166
  %168 = vrot.lane.b32.xlu0 %v129, 3
  %v169 = vpop.permute.xlu0 %168
  %v172 = vunpack.c.l.b16 %v57
  %v173 = vunpack.c.l.b16 %v69
  %v174 = vpack.c.b16 %v172, %v172
  %v175 = vpack.c.b16 %v173, %v173
  %176 = vrot.lane.b32.xlu0 %v111, 6
  %v177 = vpop.permute.xlu0 %176
  %178 = vrot.lane.b32.xlu0 %v112, 6
  %v179 = vpop.permute.xlu0 %178
  %180 = vrot.lane.b32.xlu0 %v113, 6
  %v181 = vpop.permute.xlu0 %180
  %182 = vrot.lane.b32.xlu0 %v114, 6
  %v183 = vpop.permute.xlu0 %182
  %184 = vrot.lane.b32.xlu0 %v115, 6
  %v185 = vpop.permute.xlu0 %184
  %186 = vrot.lane.b32.xlu0 %v116, 6
  %v187 = vpop.permute.xlu0 %186
  %188 = vrot.lane.b32.xlu0 %v117, 6
  %v189 = vpop.permute.xlu0 %188
  %190 = vrot.lane.b32.xlu0 %v118, 6
  %v191 = vpop.permute.xlu0 %190
  %192 = vrot.lane.b32.xlu0 %v119, 6
  %v193 = vpop.permute.xlu0 %192
  %194 = vrot.lane.b32.xlu0 %v174, 6
  %v195 = vpop.permute.xlu0 %194
  %196 = vrot.lane.b32.xlu0 %v121, 6
  %v197 = vpop.permute.xlu0 %196
  %198 = vrot.lane.b32.xlu0 %v122, 6
  %v199 = vpop.permute.xlu0 %198
  %200 = vrot.lane.b32.xlu0 %v123, 6
  %v201 = vpop.permute.xlu0 %200
  %202 = vrot.lane.b32.xlu0 %v124, 6
  %v203 = vpop.permute.xlu0 %202
  %204 = vrot.lane.b32.xlu0 %v125, 6
  %v205 = vpop.permute.xlu0 %204
  %206 = vrot.lane.b32.xlu0 %v126, 6
  %v207 = vpop.permute.xlu0 %206
  %208 = vrot.lane.b32.xlu0 %v127, 6
  %v209 = vpop.permute.xlu0 %208
  %210 = vrot.lane.b32.xlu0 %v128, 6
  %v211 = vpop.permute.xlu0 %210
  %212 = vrot.lane.b32.xlu0 %v129, 6
  %v213 = vpop.permute.xlu0 %212
  %214 = vrot.lane.b32.xlu0 %v175, 6
  %v215 = vpop.permute.xlu0 %214
  %vm216 = vcmask 23552
  %v219 = vsel %vm216, %v46, %v131
  %v222 = vsel %vm216, %v47, %v133
  %v225 = vsel %vm216, %v48, %v135
  %v228 = vsel %vm216, %v49, %v137
  %v231 = vsel %vm216, %v50, %v139
  %v234 = vsel %vm216, %v51, %v141
  %v237 = vsel %vm216, %v52, %v143
  %v240 = vsel %vm216, %v53, %v145
  %v243 = vsel %vm216, %v54, %v147
  %v246 = vsel %vm216, %v55, %v149
  %v249 = vsel %vm216, %v58, %v151
  %v252 = vsel %vm216, %v59, %v153
  %v255 = vsel %vm216, %v60, %v155
  %v258 = vsel %vm216, %v61, %v157
  %v261 = vsel %vm216, %v62, %v159
  %v264 = vsel %vm216, %v63, %v161
  %v267 = vsel %vm216, %v64, %v163
  %v270 = vsel %vm216, %v65, %v165
  %v273 = vsel %vm216, %v66, %v167
  %v276 = vsel %vm216, %v67, %v169
  %vm277 = vcmask 48128
  %v279 = vsel %vm277, %v219, %v177
  %v281 = vsel %vm277, %v222, %v179
  %v283 = vsel %vm277, %v225, %v181
  %v285 = vsel %vm277, %v228, %v183
  %v287 = vsel %vm277, %v231, %v185
  %v289 = vsel %vm277, %v234, %v187
  %v291 = vsel %vm277, %v237, %v189
  %v293 = vsel %vm277, %v240, %v191
  %v295 = vsel %vm277, %v243, %v193
  %v297 = vsel %vm277, %v246, %v195
  %v299 = vsel %vm277, %v249, %v197
  %v301 = vsel %vm277, %v252, %v199
  %v303 = vsel %vm277, %v255, %v201
  %v305 = vsel %vm277, %v258, %v203
  %v307 = vsel %vm277, %v261, %v205
  %v309 = vsel %vm277, %v264, %v207
  %v311 = vsel %vm277, %v267, %v209
  %v313 = vsel %vm277, %v270, %v211
  %v315 = vsel %vm277, %v273, %v213
  %v317 = vsel %vm277, %v276, %v215
  %v318 = vld [vmem:[%s1] sm:$0xf]
  %v319 = vld [vmem:[%s1 + $0x4] sm:$0x1]
  %v340 = vunpack.c.l.b16 %v279
  %v341 = vunpack.c.l.b16 %v281
  %v342 = vunpack.c.l.b16 %v283
  %v343 = vunpack.c.l.b16 %v285
  %v344 = vunpack.c.l.b16 %v287
  %v345 = vunpack.c.l.b16 %v289
  %v346 = vunpack.c.l.b16 %v291
  %v347 = vunpack.c.l.b16 %v293
  %v348 = vunpack.c.l.b16 %v295
  %v349 = vunpack.c.l.b16 %v297
  %v350 = vunpack.c.l.b16 %v299
  %v351 = vunpack.c.l.b16 %v301
  %v352 = vunpack.c.l.b16 %v303
  %v353 = vunpack.c.l.b16 %v305
  %v354 = vunpack.c.l.b16 %v307
  %v355 = vunpack.c.l.b16 %v309
  %v356 = vunpack.c.l.b16 %v311
  %v357 = vunpack.c.l.b16 %v313
  %v358 = vunpack.c.l.b16 %v315
  %v359 = vunpack.c.l.b16 %v317
  %v360 = vpack.c.b16 %v341, %v340
  %v361 = vpack.c.b16 %v343, %v342
  %v362 = vpack.c.b16 %v345, %v344
  %v363 = vpack.c.b16 %v347, %v346
  %v364 = vpack.c.b16 %v349, %v348
  %v365 = vpack.c.b16 %v351, %v350
  %v366 = vpack.c.b16 %v353, %v352
  %v367 = vpack.c.b16 %v355, %v354
  %v368 = vpack.c.b16 %v357, %v356
  %v369 = vpack.c.b16 %v359, %v358
  %v372 = vunpack.c.l.b16 %v318
  %v373 = vunpack.c.l.b16 %v319
  %v374 = vpack.c.b16 %v373, %v372
  %vm375 = vcmask 72704
  %v377 = vsel %vm375, %v360, 0
  %v380 = vsel %vm375, %v361, 0
  %v383 = vsel %vm375, %v362, 0
  %v386 = vsel %vm375, %v363, 0
  %v389 = vsel %vm375, %v364, 0
  %v392 = vsel %vm375, %v365, 0
  %v395 = vsel %vm375, %v366, 0
  %v398 = vsel %vm375, %v367, 0
  %v401 = vsel %vm375, %v368, 0
  %v404 = vsel %vm375, %v369, 0
  %vm406 = vcmask 1043456
  %vm407 = vcmask 1044480
  %v408 = vsel %vm406, 4294967295, 65535
  %v409 = vsel %vm407, %v408, 0
  %v411 = vand.u32 %v374, %v409
  %413 = vmatpush.bf16.msra.mxu0 0
  %414 = vmatpush.bf16.msra.mxu0 0
  %415 = vmatpush.bf16.msra.mxu0 0
  %416 = vmatpush.bf16.msra.mxu0 0
  %417 = vmatpush.bf16.msra.mxu0 0
  %418 = vmatpush.bf16.msra.mxu0 0
  %419 = vmatpush.bf16.msra.mxu0 0
  %420 = vmatpush.bf16.msra.mxu0 %v411
  %421 = vmatmul.bf16.gmra.mxu0 %v377
  %v422 = vpop.f32.mrf.mxu0
  %v423 = vadd.f32 0.0, %v422
  %v424 = vpop.f32.mrf.mxu0
  %v425 = vadd.f32 0.0, %v424
  %426 = vmatmul.bf16.gmra.mxu0 %v380
  %v427 = vpop.f32.mrf.mxu0
  %v428 = vadd.f32 0.0, %v427
  %v429 = vpop.f32.mrf.mxu0
  %v430 = vadd.f32 0.0, %v429
  %431 = vmatmul.bf16.gmra.mxu0 %v383
  %v432 = vpop.f32.mrf.mxu0
  %v433 = vadd.f32 0.0, %v432
  %v434 = vpop.f32.mrf.mxu0
  %v435 = vadd.f32 0.0, %v434
  %436 = vmatmul.bf16.gmra.mxu0 %v386
  %v437 = vpop.f32.mrf.mxu0
  %v438 = vadd.f32 0.0, %v437
  %v439 = vpop.f32.mrf.mxu0
  %v440 = vadd.f32 0.0, %v439
  %441 = vmatmul.bf16.gmra.mxu0 %v389
  %v442 = vpop.f32.mrf.mxu0
  %v443 = vadd.f32 0.0, %v442
  %v444 = vpop.f32.mrf.mxu0
  %v445 = vadd.f32 0.0, %v444
  %446 = vmatmul.bf16.gmra.mxu0 %v392
  %v447 = vpop.f32.mrf.mxu0
  %v448 = vadd.f32 0.0, %v447
  %v449 = vpop.f32.mrf.mxu0
  %v450 = vadd.f32 0.0, %v449
  %451 = vmatmul.bf16.gmra.mxu0 %v395
  %v452 = vpop.f32.mrf.mxu0
  %v453 = vadd.f32 0.0, %v452
  %v454 = vpop.f32.mrf.mxu0
  %v455 = vadd.f32 0.0, %v454
  %456 = vmatmul.bf16.gmra.mxu0 %v398
  %v457 = vpop.f32.mrf.mxu0
  %v458 = vadd.f32 0.0, %v457
  %v459 = vpop.f32.mrf.mxu0
  %v460 = vadd.f32 0.0, %v459
  %461 = vmatmul.bf16.gmra.mxu0 %v401
  %v462 = vpop.f32.mrf.mxu0
  %v463 = vadd.f32 0.0, %v462
  %v464 = vpop.f32.mrf.mxu0
  %v465 = vadd.f32 0.0, %v464
  %466 = vmatmul.bf16.gmra.mxu0 %v404
  %v467 = vpop.f32.mrf.mxu0
  %v468 = vadd.f32 0.0, %v467
  %v469 = vpop.f32.mrf.mxu0
  %v470 = vadd.f32 0.0, %v469
  %471 = vdwg.mxu0
  %v472 = vld [vmem:[%s3] sm:$0x1]
  %v473 = vperm.slane %v472, 0
  %v474 = vadd.f32 %v423, %v473
  %v475 = vadd.f32 %v425, %v473
  %v476 = vadd.f32 %v428, %v473
  %v477 = vadd.f32 %v430, %v473
  %v478 = vadd.f32 %v433, %v473
  %v479 = vadd.f32 %v435, %v473
  %v480 = vadd.f32 %v438, %v473
  %v481 = vadd.f32 %v440, %v473
  %v482 = vadd.f32 %v443, %v473
  %v483 = vadd.f32 %v445, %v473
  %v484 = vadd.f32 %v448, %v473
  %v485 = vadd.f32 %v450, %v473
  %v486 = vadd.f32 %v453, %v473
  %v487 = vadd.f32 %v455, %v473
  %v488 = vadd.f32 %v458, %v473
  %v489 = vadd.f32 %v460, %v473
  %v490 = vadd.f32 %v463, %v473
  %v491 = vadd.f32 %v465, %v473
  %v492 = vadd.f32 %v468, %v473
  %v493 = vadd.f32 %v470, %v473
  %v494 = vsub.f32 0.0, %v474
  %v495 = vsub.f32 0.0, %v475
  %v496 = vsub.f32 0.0, %v476
  %v497 = vsub.f32 0.0, %v477
  %v498 = vsub.f32 0.0, %v478
  %v499 = vsub.f32 0.0, %v479
  %v500 = vsub.f32 0.0, %v480
  %v501 = vsub.f32 0.0, %v481
  %v502 = vsub.f32 0.0, %v482
  %v503 = vsub.f32 0.0, %v483
  %v504 = vsub.f32 0.0, %v484
  %v505 = vsub.f32 0.0, %v485
  %v506 = vsub.f32 0.0, %v486
  %v507 = vsub.f32 0.0, %v487
  %v508 = vsub.f32 0.0, %v488
  %v509 = vsub.f32 0.0, %v489
  %v510 = vsub.f32 0.0, %v490
  %v511 = vsub.f32 0.0, %v491
  %v512 = vsub.f32 0.0, %v492
  %v513 = vsub.f32 0.0, %v493
  %v514 = vmul.f32 %v494, 1.442695
  %v515 = vpow.pop %v514
  %v516 = vmul.f32 %v495, 1.442695
  %v517 = vpow.pop %v516
  %v518 = vmul.f32 %v496, 1.442695
  %v519 = vpow.pop %v518
  %v520 = vmul.f32 %v497, 1.442695
  %v521 = vpow.pop %v520
  %v522 = vmul.f32 %v498, 1.442695
  %v523 = vpow.pop %v522
  %v524 = vmul.f32 %v499, 1.442695
  %v525 = vpow.pop %v524
  %v526 = vmul.f32 %v500, 1.442695
  %v527 = vpow.pop %v526
  %v528 = vmul.f32 %v501, 1.442695
  %v529 = vpow.pop %v528
  %v530 = vmul.f32 %v502, 1.442695
  %v531 = vpow.pop %v530
  %v532 = vmul.f32 %v503, 1.442695
  %v533 = vpow.pop %v532
  %v534 = vmul.f32 %v504, 1.442695
  %v535 = vpow.pop %v534
  %v536 = vmul.f32 %v505, 1.442695
  %v537 = vpow.pop %v536
  %v538 = vmul.f32 %v506, 1.442695
  %v539 = vpow.pop %v538
  %v540 = vmul.f32 %v507, 1.442695
  %v541 = vpow.pop %v540
  %v542 = vmul.f32 %v508, 1.442695
  %v543 = vpow.pop %v542
  %v544 = vmul.f32 %v509, 1.442695
  %v545 = vpow.pop %v544
  %v546 = vmul.f32 %v510, 1.442695
  %v547 = vpow.pop %v546
  %v548 = vmul.f32 %v511, 1.442695
  %v549 = vpow.pop %v548
  %v550 = vmul.f32 %v512, 1.442695
  %v551 = vpow.pop %v550
  %v552 = vmul.f32 %v513, 1.442695
  %v553 = vpow.pop %v552
  %v554 = vadd.f32 %v515, 1.0
  %v555 = vadd.f32 %v517, 1.0
  %v556 = vadd.f32 %v519, 1.0
  %v557 = vadd.f32 %v521, 1.0
  %v558 = vadd.f32 %v523, 1.0
  %v559 = vadd.f32 %v525, 1.0
  %v560 = vadd.f32 %v527, 1.0
  %v561 = vadd.f32 %v529, 1.0
  %v562 = vadd.f32 %v531, 1.0
  %v563 = vadd.f32 %v533, 1.0
  %v564 = vadd.f32 %v535, 1.0
  %v565 = vadd.f32 %v537, 1.0
  %v566 = vadd.f32 %v539, 1.0
  %v567 = vadd.f32 %v541, 1.0
  %v568 = vadd.f32 %v543, 1.0
  %v569 = vadd.f32 %v545, 1.0
  %v570 = vadd.f32 %v547, 1.0
  %v571 = vadd.f32 %v549, 1.0
  %v572 = vadd.f32 %v551, 1.0
  %v573 = vadd.f32 %v553, 1.0
  %v574 = vrcp.pop %v554
  %v575 = vrcp.pop %v555
  %v576 = vrcp.pop %v556
  %v577 = vrcp.pop %v557
  %v578 = vrcp.pop %v558
  %v579 = vrcp.pop %v559
  %v580 = vrcp.pop %v560
  %v581 = vrcp.pop %v561
  %v582 = vrcp.pop %v562
  %v583 = vrcp.pop %v563
  %v584 = vrcp.pop %v564
  %v585 = vrcp.pop %v565
  %v586 = vrcp.pop %v566
  %v587 = vrcp.pop %v567
  %v588 = vrcp.pop %v568
  %v589 = vrcp.pop %v569
  %v590 = vrcp.pop %v570
  %v591 = vrcp.pop %v571
  %v592 = vrcp.pop %v572
  %v593 = vrcp.pop %v573
  %614 = vrot.lane.b32.xlu0 %v574, 64
  %v615 = vpop.permute.xlu0 %614
  %616 = vrot.lane.b32.xlu0 %v575, 64
  %v617 = vpop.permute.xlu0 %616
  %618 = vrot.lane.b32.xlu0 %v576, 64
  %v619 = vpop.permute.xlu0 %618
  %620 = vrot.lane.b32.xlu0 %v577, 64
  %v621 = vpop.permute.xlu0 %620
  %622 = vrot.lane.b32.xlu0 %v578, 64
  %v623 = vpop.permute.xlu0 %622
  %624 = vrot.lane.b32.xlu0 %v579, 64
  %v625 = vpop.permute.xlu0 %624
  %626 = vrot.lane.b32.xlu0 %v580, 64
  %v627 = vpop.permute.xlu0 %626
  %628 = vrot.lane.b32.xlu0 %v581, 64
  %v629 = vpop.permute.xlu0 %628
  %630 = vrot.lane.b32.xlu0 %v582, 64
  %v631 = vpop.permute.xlu0 %630
  %632 = vrot.lane.b32.xlu0 %v583, 64
  %v633 = vpop.permute.xlu0 %632
  %634 = vrot.lane.b32.xlu0 %v584, 64
  %v635 = vpop.permute.xlu0 %634
  %636 = vrot.lane.b32.xlu0 %v585, 64
  %v637 = vpop.permute.xlu0 %636
  %638 = vrot.lane.b32.xlu0 %v586, 64
  %v639 = vpop.permute.xlu0 %638
  %640 = vrot.lane.b32.xlu0 %v587, 64
  %v641 = vpop.permute.xlu0 %640
  %642 = vrot.lane.b32.xlu0 %v588, 64
  %v643 = vpop.permute.xlu0 %642
  %644 = vrot.lane.b32.xlu0 %v589, 64
  %v645 = vpop.permute.xlu0 %644
  %646 = vrot.lane.b32.xlu0 %v590, 64
  %v647 = vpop.permute.xlu0 %646
  %648 = vrot.lane.b32.xlu0 %v591, 64
  %v649 = vpop.permute.xlu0 %648
  %650 = vrot.lane.b32.xlu0 %v592, 64
  %v651 = vpop.permute.xlu0 %650
  %652 = vrot.lane.b32.xlu0 %v593, 64
  %v653 = vpop.permute.xlu0 %652
  %v674 = vmul.f32 %v474, %v615
  %v675 = vmul.f32 %v475, %v617
  %v676 = vmul.f32 %v476, %v619
  %v677 = vmul.f32 %v477, %v621
  %v678 = vmul.f32 %v478, %v623
  %v679 = vmul.f32 %v479, %v625
  %v680 = vmul.f32 %v480, %v627
  %v681 = vmul.f32 %v481, %v629
  %v682 = vmul.f32 %v482, %v631
  %v683 = vmul.f32 %v483, %v633
  %v684 = vmul.f32 %v484, %v635
  %v685 = vmul.f32 %v485, %v637
  %v686 = vmul.f32 %v486, %v639
  %v687 = vmul.f32 %v487, %v641
  %v688 = vmul.f32 %v488, %v643
  %v689 = vmul.f32 %v489, %v645
  %v690 = vmul.f32 %v490, %v647
  %v691 = vmul.f32 %v491, %v649
  %v692 = vmul.f32 %v492, %v651
  %v693 = vmul.f32 %v493, %v653
  %v694 = vpack.c.bf16 %v674, %v674
  %v695 = vpack.c.bf16 %v675, %v675
  %v696 = vpack.c.bf16 %v676, %v676
  %v697 = vpack.c.bf16 %v677, %v677
  %v698 = vpack.c.bf16 %v678, %v678
  %v699 = vpack.c.bf16 %v679, %v679
  %v700 = vpack.c.bf16 %v680, %v680
  %v701 = vpack.c.bf16 %v681, %v681
  %v702 = vpack.c.bf16 %v682, %v682
  %v703 = vpack.c.bf16 %v683, %v683
  %v704 = vpack.c.bf16 %v684, %v684
  %v705 = vpack.c.bf16 %v685, %v685
  %v706 = vpack.c.bf16 %v686, %v686
  %v707 = vpack.c.bf16 %v687, %v687
  %v708 = vpack.c.bf16 %v688, %v688
  %v709 = vpack.c.bf16 %v689, %v689
  %v710 = vpack.c.bf16 %v690, %v690
  %v711 = vpack.c.bf16 %v691, %v691
  %v712 = vpack.c.bf16 %v692, %v692
  %v713 = vpack.c.bf16 %v693, %v693
  %v734 = vunpack.c.l.b16 %v694
  %v735 = vunpack.c.l.b16 %v695
  %v736 = vunpack.c.l.b16 %v696
  %v737 = vunpack.c.l.b16 %v697
  %v738 = vunpack.c.l.b16 %v698
  %v739 = vunpack.c.l.b16 %v699
  %v740 = vunpack.c.l.b16 %v700
  %v741 = vunpack.c.l.b16 %v701
  %v742 = vunpack.c.l.b16 %v702
  %v743 = vunpack.c.l.b16 %v703
  %v744 = vunpack.c.l.b16 %v704
  %v745 = vunpack.c.l.b16 %v705
  %v746 = vunpack.c.l.b16 %v706
  %v747 = vunpack.c.l.b16 %v707
  %v748 = vunpack.c.l.b16 %v708
  %v749 = vunpack.c.l.b16 %v709
  %v750 = vunpack.c.l.b16 %v710
  %v751 = vunpack.c.l.b16 %v711
  %v752 = vunpack.c.l.b16 %v712
  %v753 = vunpack.c.l.b16 %v713
  %v754 = vpack.c.b16 %v734, %v734
  %v755 = vpack.c.b16 %v735, %v735
  %v756 = vpack.c.b16 %v736, %v736
  %v757 = vpack.c.b16 %v737, %v737
  %v758 = vpack.c.b16 %v738, %v738
  %v759 = vpack.c.b16 %v739, %v739
  %v760 = vpack.c.b16 %v740, %v740
  %v761 = vpack.c.b16 %v741, %v741
  %v762 = vpack.c.b16 %v742, %v742
  %v763 = vpack.c.b16 %v743, %v743
  %v764 = vpack.c.b16 %v744, %v744
  %v765 = vpack.c.b16 %v745, %v745
  %v766 = vpack.c.b16 %v746, %v746
  %v767 = vpack.c.b16 %v747, %v747
  %v768 = vpack.c.b16 %v748, %v748
  %v769 = vpack.c.b16 %v749, %v749
  %v770 = vpack.c.b16 %v750, %v750
  %v771 = vpack.c.b16 %v751, %v751
  %v772 = vpack.c.b16 %v752, %v752
  %v773 = vpack.c.b16 %v753, %v753
  %v775 = vshrl.u32 %v754, 16
  %v777 = vrot.slane %v775, 7
  %v778 = vshll.u32 %v754, 16
  %v780 = vor.u32 %v777, %v778
  %v782 = vshrl.u32 %v755, 16
  %v784 = vrot.slane %v782, 7
  %v785 = vshll.u32 %v755, 16
  %v787 = vor.u32 %v784, %v785
  %v789 = vshrl.u32 %v756, 16
  %v791 = vrot.slane %v789, 7
  %v792 = vshll.u32 %v756, 16
  %v794 = vor.u32 %v791, %v792
  %v796 = vshrl.u32 %v757, 16
  %v798 = vrot.slane %v796, 7
  %v799 = vshll.u32 %v757, 16
  %v801 = vor.u32 %v798, %v799
  %v803 = vshrl.u32 %v758, 16
  %v805 = vrot.slane %v803, 7
  %v806 = vshll.u32 %v758, 16
  %v808 = vor.u32 %v805, %v806
  %v810 = vshrl.u32 %v759, 16
  %v812 = vrot.slane %v810, 7
  %v813 = vshll.u32 %v759, 16
  %v815 = vor.u32 %v812, %v813
  %v817 = vshrl.u32 %v760, 16
  %v819 = vrot.slane %v817, 7
  %v820 = vshll.u32 %v760, 16
  %v822 = vor.u32 %v819, %v820
  %v824 = vshrl.u32 %v761, 16
  %v826 = vrot.slane %v824, 7
  %v827 = vshll.u32 %v761, 16
  %v829 = vor.u32 %v826, %v827
  %v831 = vshrl.u32 %v762, 16
  %v833 = vrot.slane %v831, 7
  %v834 = vshll.u32 %v762, 16
  %v836 = vor.u32 %v833, %v834
  %v838 = vshrl.u32 %v763, 16
  %v840 = vrot.slane %v838, 7
  %v841 = vshll.u32 %v763, 16
  %v843 = vor.u32 %v840, %v841
  %v845 = vshrl.u32 %v764, 16
  %v847 = vrot.slane %v845, 7
  %v848 = vshll.u32 %v764, 16
  %v850 = vor.u32 %v847, %v848
  %v852 = vshrl.u32 %v765, 16
  %v854 = vrot.slane %v852, 7
  %v855 = vshll.u32 %v765, 16
  %v857 = vor.u32 %v854, %v855
  %v859 = vshrl.u32 %v766, 16
  %v861 = vrot.slane %v859, 7
  %v862 = vshll.u32 %v766, 16
  %v864 = vor.u32 %v861, %v862
  %v866 = vshrl.u32 %v767, 16
  %v868 = vrot.slane %v866, 7
  %v869 = vshll.u32 %v767, 16
  %v871 = vor.u32 %v868, %v869
  %v873 = vshrl.u32 %v768, 16
  %v875 = vrot.slane %v873, 7
  %v876 = vshll.u32 %v768, 16
  %v878 = vor.u32 %v875, %v876
  %v880 = vshrl.u32 %v769, 16
  %v882 = vrot.slane %v880, 7
  %v883 = vshll.u32 %v769, 16
  %v885 = vor.u32 %v882, %v883
  %v887 = vshrl.u32 %v770, 16
  %v889 = vrot.slane %v887, 7
  %v890 = vshll.u32 %v770, 16
  %v892 = vor.u32 %v889, %v890
  %v894 = vshrl.u32 %v771, 16
  %v896 = vrot.slane %v894, 7
  %v897 = vshll.u32 %v771, 16
  %v899 = vor.u32 %v896, %v897
  %v901 = vshrl.u32 %v772, 16
  %v903 = vrot.slane %v901, 7
  %v904 = vshll.u32 %v772, 16
  %v906 = vor.u32 %v903, %v904
  %v908 = vshrl.u32 %v773, 16
  %v910 = vrot.slane %v908, 7
  %v911 = vshll.u32 %v773, 16
  %v913 = vor.u32 %v910, %v911
  %vm934 = vcmask 1040384
  %vm935 = vsmask.f32 256
  %vm936 = vmand %vm934, %vm935
  %v937 = vsel %vm936, 0, %v780
  %v938 = vsel %vm936, 0, %v787
  %v939 = vsel %vm936, 0, %v794
  %v940 = vsel %vm936, 0, %v801
  %v941 = vsel %vm936, 0, %v808
  %v942 = vsel %vm936, 0, %v815
  %v943 = vsel %vm936, 0, %v822
  %v944 = vsel %vm936, 0, %v829
  %v945 = vsel %vm936, 0, %v836
  %v946 = vsel %vm936, 0, %v843
  %v947 = vsel %vm936, 0, %v850
  %v948 = vsel %vm936, 0, %v857
  %v949 = vsel %vm936, 0, %v864
  %v950 = vsel %vm936, 0, %v871
  %v951 = vsel %vm936, 0, %v878
  %v952 = vsel %vm936, 0, %v885
  %v953 = vsel %vm936, 0, %v892
  %v954 = vsel %vm936, 0, %v899
  %v955 = vsel %vm936, 0, %v906
  %v956 = vsel %vm936, 0, %v913
  %v957 = vrot.slane %v778, 1
  %v958 = vor.u32 %v775, %v957
  %v959 = vrot.slane %v785, 1
  %v960 = vor.u32 %v782, %v959
  %v961 = vrot.slane %v792, 1
  %v962 = vor.u32 %v789, %v961
  %v963 = vrot.slane %v799, 1
  %v964 = vor.u32 %v796, %v963
  %v965 = vrot.slane %v806, 1
  %v966 = vor.u32 %v803, %v965
  %v967 = vrot.slane %v813, 1
  %v968 = vor.u32 %v810, %v967
  %v969 = vrot.slane %v820, 1
  %v970 = vor.u32 %v817, %v969
  %v971 = vrot.slane %v827, 1
  %v972 = vor.u32 %v824, %v971
  %v973 = vrot.slane %v834, 1
  %v974 = vor.u32 %v831, %v973
  %v975 = vrot.slane %v841, 1
  %v976 = vor.u32 %v838, %v975
  %v977 = vrot.slane %v848, 1
  %v978 = vor.u32 %v845, %v977
  %v979 = vrot.slane %v855, 1
  %v980 = vor.u32 %v852, %v979
  %v981 = vrot.slane %v862, 1
  %v982 = vor.u32 %v859, %v981
  %v983 = vrot.slane %v869, 1
  %v984 = vor.u32 %v866, %v983
  %v985 = vrot.slane %v876, 1
  %v986 = vor.u32 %v873, %v985
  %v987 = vrot.slane %v883, 1
  %v988 = vor.u32 %v880, %v987
  %v989 = vrot.slane %v890, 1
  %v990 = vor.u32 %v887, %v989
  %v991 = vrot.slane %v897, 1
  %v992 = vor.u32 %v894, %v991
  %v993 = vrot.slane %v904, 1
  %v994 = vor.u32 %v901, %v993
  %v995 = vrot.slane %v911, 1
  %v996 = vor.u32 %v908, %v995
  %vm1017 = vcmask 1043456
  %vm1018 = vsmask.f32 3328
  %vm1019 = vmand %vm1017, %vm1018
  %v1020 = vsel %vm1019, %v958, 0
  %v1021 = vsel %vm1019, %v960, 0
  %v1022 = vsel %vm1019, %v962, 0
  %v1023 = vsel %vm1019, %v964, 0
  %v1024 = vsel %vm1019, %v966, 0
  %v1025 = vsel %vm1019, %v968, 0
  %v1026 = vsel %vm1019, %v970, 0
  %v1027 = vsel %vm1019, %v972, 0
  %v1028 = vsel %vm1019, %v974, 0
  %v1029 = vsel %vm1019, %v976, 0
  %v1030 = vsel %vm1019, %v978, 0
  %v1031 = vsel %vm1019, %v980, 0
  %v1032 = vsel %vm1019, %v982, 0
  %v1033 = vsel %vm1019, %v984, 0
  %v1034 = vsel %vm1019, %v986, 0
  %v1035 = vsel %vm1019, %v988, 0
  %v1036 = vsel %vm1019, %v990, 0
  %v1037 = vsel %vm1019, %v992, 0
  %v1038 = vsel %vm1019, %v994, 0
  %v1039 = vsel %vm1019, %v996, 0
  %1040 = vrot.lane.b32.xlu0 %v754, 64
  %v1041 = vpop.permute.xlu0 %1040
  %1042 = vrot.lane.b32.xlu0 %v755, 64
  %v1043 = vpop.permute.xlu0 %1042
  %1044 = vrot.lane.b32.xlu0 %v756, 64
  %v1045 = vpop.permute.xlu0 %1044
  %1046 = vrot.lane.b32.xlu0 %v757, 64
  %v1047 = vpop.permute.xlu0 %1046
  %1048 = vrot.lane.b32.xlu0 %v758, 64
  %v1049 = vpop.permute.xlu0 %1048
  %1050 = vrot.lane.b32.xlu0 %v759, 64
  %v1051 = vpop.permute.xlu0 %1050
  %1052 = vrot.lane.b32.xlu0 %v760, 64
  %v1053 = vpop.permute.xlu0 %1052
  %1054 = vrot.lane.b32.xlu0 %v761, 64
  %v1055 = vpop.permute.xlu0 %1054
  %1056 = vrot.lane.b32.xlu0 %v762, 64
  %v1057 = vpop.permute.xlu0 %1056
  %1058 = vrot.lane.b32.xlu0 %v763, 64
  %v1059 = vpop.permute.xlu0 %1058
  %1060 = vrot.lane.b32.xlu0 %v764, 64
  %v1061 = vpop.permute.xlu0 %1060
  %1062 = vrot.lane.b32.xlu0 %v765, 64
  %v1063 = vpop.permute.xlu0 %1062
  %1064 = vrot.lane.b32.xlu0 %v766, 64
  %v1065 = vpop.permute.xlu0 %1064
  %1066 = vrot.lane.b32.xlu0 %v767, 64
  %v1067 = vpop.permute.xlu0 %1066
  %1068 = vrot.lane.b32.xlu0 %v768, 64
  %v1069 = vpop.permute.xlu0 %1068
  %1070 = vrot.lane.b32.xlu0 %v769, 64
  %v1071 = vpop.permute.xlu0 %1070
  %1072 = vrot.lane.b32.xlu0 %v770, 64
  %v1073 = vpop.permute.xlu0 %1072
  %1074 = vrot.lane.b32.xlu0 %v771, 64
  %v1075 = vpop.permute.xlu0 %1074
  %1076 = vrot.lane.b32.xlu0 %v772, 64
  %v1077 = vpop.permute.xlu0 %1076
  %1078 = vrot.lane.b32.xlu0 %v773, 64
  %v1079 = vpop.permute.xlu0 %1078
  %vm1080 = vcmask 523264
  %v1083 = vsel %vm1080, %v937, %v1041
  %v1086 = vsel %vm1080, %v938, %v1043
  %v1089 = vsel %vm1080, %v939, %v1045
  %v1092 = vsel %vm1080, %v940, %v1047
  %v1095 = vsel %vm1080, %v941, %v1049
  %v1098 = vsel %vm1080, %v942, %v1051
  %v1101 = vsel %vm1080, %v943, %v1053
  %v1104 = vsel %vm1080, %v944, %v1055
  %v1107 = vsel %vm1080, %v945, %v1057
  %v1110 = vsel %vm1080, %v946, %v1059
  %v1113 = vsel %vm1080, %v947, %v1061
  %v1116 = vsel %vm1080, %v948, %v1063
  %v1119 = vsel %vm1080, %v949, %v1065
  %v1122 = vsel %vm1080, %v950, %v1067
  %v1125 = vsel %vm1080, %v951, %v1069
  %v1128 = vsel %vm1080, %v952, %v1071
  %v1131 = vsel %vm1080, %v953, %v1073
  %v1134 = vsel %vm1080, %v954, %v1075
  %v1137 = vsel %vm1080, %v955, %v1077
  %v1140 = vsel %vm1080, %v956, %v1079
  %v1181 = vunpack.c.l.b16 %v1083
  %v1182 = vunpack.c.l.b16 %v1020
  %v1183 = vunpack.c.l.b16 %v1086
  %v1184 = vunpack.c.l.b16 %v1021
  %v1185 = vunpack.c.l.b16 %v1089
  %v1186 = vunpack.c.l.b16 %v1022
  %v1187 = vunpack.c.l.b16 %v1092
  %v1188 = vunpack.c.l.b16 %v1023
  %v1189 = vunpack.c.l.b16 %v1095
  %v1190 = vunpack.c.l.b16 %v1024
  %v1191 = vunpack.c.l.b16 %v1098
  %v1192 = vunpack.c.l.b16 %v1025
  %v1193 = vunpack.c.l.b16 %v1101
  %v1194 = vunpack.c.l.b16 %v1026
  %v1195 = vunpack.c.l.b16 %v1104
  %v1196 = vunpack.c.l.b16 %v1027
  %v1197 = vunpack.c.l.b16 %v1107
  %v1198 = vunpack.c.l.b16 %v1028
  %v1199 = vunpack.c.l.b16 %v1110
  %v1200 = vunpack.c.l.b16 %v1029
  %v1201 = vunpack.c.l.b16 %v1113
  %v1202 = vunpack.c.l.b16 %v1030
  %v1203 = vunpack.c.l.b16 %v1116
  %v1204 = vunpack.c.l.b16 %v1031
  %v1205 = vunpack.c.l.b16 %v1119
  %v1206 = vunpack.c.l.b16 %v1032
  %v1207 = vunpack.c.l.b16 %v1122
  %v1208 = vunpack.c.l.b16 %v1033
  %v1209 = vunpack.c.l.b16 %v1125
  %v1210 = vunpack.c.l.b16 %v1034
  %v1211 = vunpack.c.l.b16 %v1128
  %v1212 = vunpack.c.l.b16 %v1035
  %v1213 = vunpack.c.l.b16 %v1131
  %v1214 = vunpack.c.l.b16 %v1036
  %v1215 = vunpack.c.l.b16 %v1134
  %v1216 = vunpack.c.l.b16 %v1037
  %v1217 = vunpack.c.l.b16 %v1137
  %v1218 = vunpack.c.l.b16 %v1038
  %v1219 = vunpack.c.l.b16 %v1140
  %v1220 = vunpack.c.l.b16 %v1039
  %v1221 = vld [vmem:[%s2] sm:$0xf]
  %v1222 = vld [vmem:[%s2 + $0x4] sm:$0xf]
  %v1223 = vld [vmem:[%s2 + $0x8] sm:$0xf]
  %v1224 = vld [vmem:[%s2 + $0xc] sm:$0xf]
  %v1225 = vld [vmem:[%s2 + $0x10] sm:$0xf]
  %v1226 = vld [vmem:[%s2 + $0x14] sm:$0xf]
  %v1227 = vld [vmem:[%s2 + $0x18] sm:$0xf]
  %v1228 = vld [vmem:[%s2 + $0x1c] sm:$0xf]
  %v1229 = vld [vmem:[%s2 + $0x20] sm:$0xf]
  %v1230 = vld [vmem:[%s2 + $0x24] sm:$0xf]
  %v1231 = vld [vmem:[%s2 + $0x28] sm:$0xf]
  %v1232 = vld [vmem:[%s2 + $0x2c] sm:$0xf]
  %v1233 = vld [vmem:[%s2 + $0x30] sm:$0xf]
  %v1234 = vld [vmem:[%s2 + $0x34] sm:$0xf]
  %v1235 = vld [vmem:[%s2 + $0x38] sm:$0xf]
  %v1236 = vld [vmem:[%s2 + $0x3c] sm:$0xf]
  %v1237 = vld [vmem:[%s2 + $0x40] sm:$0xf]
  %v1238 = vld [vmem:[%s2 + $0x44] sm:$0xf]
  %v1239 = vld [vmem:[%s2 + $0x48] sm:$0xf]
  %v1240 = vld [vmem:[%s2 + $0x4c] sm:$0xf]
  %v1241 = vld [vmem:[%s2 + $0x50] sm:$0xf]
  %v1242 = vld [vmem:[%s2 + $0x54] sm:$0xf]
  %v1243 = vld [vmem:[%s2 + $0x58] sm:$0xf]
  %v1244 = vld [vmem:[%s2 + $0x5c] sm:$0xf]
  %v1245 = vpack.c.b16 %v1183, %v1181
  %v1246 = vpack.c.b16 %v1184, %v1182
  %v1247 = vpack.c.b16 %v1187, %v1185
  %v1248 = vpack.c.b16 %v1188, %v1186
  %v1249 = vpack.c.b16 %v1191, %v1189
  %v1250 = vpack.c.b16 %v1192, %v1190
  %v1251 = vpack.c.b16 %v1195, %v1193
  %v1252 = vpack.c.b16 %v1196, %v1194
  %v1253 = vpack.c.b16 %v1199, %v1197
  %v1254 = vpack.c.b16 %v1200, %v1198
  %v1255 = vpack.c.b16 %v1203, %v1201
  %v1256 = vpack.c.b16 %v1204, %v1202
  %v1257 = vpack.c.b16 %v1207, %v1205
  %v1258 = vpack.c.b16 %v1208, %v1206
  %v1259 = vpack.c.b16 %v1211, %v1209
  %v1260 = vpack.c.b16 %v1212, %v1210
  %v1261 = vpack.c.b16 %v1215, %v1213
  %v1262 = vpack.c.b16 %v1216, %v1214
  %v1263 = vpack.c.b16 %v1219, %v1217
  %v1264 = vpack.c.b16 %v1220, %v1218
  %v1299 = vunpack.c.l.b16 %v1221
  %v1300 = vunpack.c.l.b16 %v1222
  %v1301 = vunpack.c.l.b16 %v1223
  %v1302 = vunpack.c.l.b16 %v1224
  %v1303 = vunpack.c.l.b16 %v1225
  %v1304 = vunpack.c.l.b16 %v1226
  %v1305 = vunpack.c.l.b16 %v1227
  %v1306 = vunpack.c.l.b16 %v1228
  %v1307 = vunpack.c.l.b16 %v1229
  %v1308 = vunpack.c.l.b16 %v1230
  %v1309 = vunpack.c.l.b16 %v1231
  %v1310 = vunpack.c.l.b16 %v1232
  %v1311 = vunpack.c.l.b16 %v1233
  %v1312 = vunpack.c.l.b16 %v1234
  %v1313 = vunpack.c.l.b16 %v1235
  %v1314 = vunpack.c.l.b16 %v1236
  %v1315 = vunpack.c.l.b16 %v1237
  %v1316 = vunpack.c.l.b16 %v1238
  %v1317 = vunpack.c.l.b16 %v1239
  %v1318 = vunpack.c.l.b16 %v1240
  %v1319 = vunpack.c.l.b16 %v1241
  %v1320 = vunpack.c.l.b16 %v1242
  %v1321 = vunpack.c.l.b16 %v1243
  %v1322 = vunpack.c.l.b16 %v1244
  %v1323 = vpack.c.b16 %v1300, %v1299
  %v1324 = vpack.c.b16 %v1302, %v1301
  %v1325 = vpack.c.b16 %v1304, %v1303
  %v1326 = vpack.c.b16 %v1306, %v1305
  %v1327 = vpack.c.b16 %v1308, %v1307
  %v1328 = vpack.c.b16 %v1310, %v1309
  %v1329 = vpack.c.b16 %v1312, %v1311
  %v1330 = vpack.c.b16 %v1314, %v1313
  %v1331 = vpack.c.b16 %v1316, %v1315
  %v1332 = vpack.c.b16 %v1318, %v1317
  %v1333 = vpack.c.b16 %v1320, %v1319
  %v1334 = vpack.c.b16 %v1322, %v1321
  %v1348 = vsel %vm1080, %v1246, 0
  %v1351 = vsel %vm1080, %v1248, 0
  %v1354 = vsel %vm1080, %v1250, 0
  %v1357 = vsel %vm1080, %v1252, 0
  %v1360 = vsel %vm1080, %v1254, 0
  %v1363 = vsel %vm1080, %v1256, 0
  %v1366 = vsel %vm1080, %v1258, 0
  %v1369 = vsel %vm1080, %v1260, 0
  %v1372 = vsel %vm1080, %v1262, 0
  %v1375 = vsel %vm1080, %v1264, 0
  %1377 = vmatpush.bf16.msra.mxu0 %v1330
  %1378 = vmatpush.bf16.msra.mxu0 %v1329
  %1379 = vmatpush.bf16.msra.mxu0 %v1328
  %1380 = vmatpush.bf16.msra.mxu0 %v1327
  %1381 = vmatpush.bf16.msra.mxu0 %v1326
  %1382 = vmatpush.bf16.msra.mxu0 %v1325
  %1383 = vmatpush.bf16.msra.mxu0 %v1324
  %1384 = vmatpush.bf16.msra.mxu0 %v1323
  %1385 = vmatmul.bf16.gmra.mxu0 %v1245
  %v1386 = vpop.f32.mrf.mxu0
  %v1387 = vadd.f32 0.0, %v1386
  %v1388 = vpop.f32.mrf.mxu0
  %v1389 = vadd.f32 0.0, %v1388
  %1390 = vmatmul.bf16.gmra.mxu0 %v1247
  %v1391 = vpop.f32.mrf.mxu0
  %v1392 = vadd.f32 0.0, %v1391
  %v1393 = vpop.f32.mrf.mxu0
  %v1394 = vadd.f32 0.0, %v1393
  %1395 = vmatmul.bf16.gmra.mxu0 %v1249
  %v1396 = vpop.f32.mrf.mxu0
  %v1397 = vadd.f32 0.0, %v1396
  %v1398 = vpop.f32.mrf.mxu0
  %v1399 = vadd.f32 0.0, %v1398
  %1400 = vmatmul.bf16.gmra.mxu0 %v1251
  %v1401 = vpop.f32.mrf.mxu0
  %v1402 = vadd.f32 0.0, %v1401
  %v1403 = vpop.f32.mrf.mxu0
  %v1404 = vadd.f32 0.0, %v1403
  %1405 = vmatmul.bf16.gmra.mxu0 %v1253
  %v1406 = vpop.f32.mrf.mxu0
  %v1407 = vadd.f32 0.0, %v1406
  %v1408 = vpop.f32.mrf.mxu0
  %v1409 = vadd.f32 0.0, %v1408
  %1410 = vmatmul.bf16.gmra.mxu0 %v1255
  %v1411 = vpop.f32.mrf.mxu0
  %v1412 = vadd.f32 0.0, %v1411
  %v1413 = vpop.f32.mrf.mxu0
  %v1414 = vadd.f32 0.0, %v1413
  %1415 = vmatmul.bf16.gmra.mxu0 %v1257
  %v1416 = vpop.f32.mrf.mxu0
  %v1417 = vadd.f32 0.0, %v1416
  %v1418 = vpop.f32.mrf.mxu0
  %v1419 = vadd.f32 0.0, %v1418
  %1420 = vmatmul.bf16.gmra.mxu0 %v1259
  %v1421 = vpop.f32.mrf.mxu0
  %v1422 = vadd.f32 0.0, %v1421
  %v1423 = vpop.f32.mrf.mxu0
  %v1424 = vadd.f32 0.0, %v1423
  %1425 = vmatmul.bf16.gmra.mxu0 %v1261
  %v1426 = vpop.f32.mrf.mxu0
  %v1427 = vadd.f32 0.0, %v1426
  %v1428 = vpop.f32.mrf.mxu0
  %v1429 = vadd.f32 0.0, %v1428
  %1430 = vmatmul.bf16.gmra.mxu0 %v1263
  %v1431 = vpop.f32.mrf.mxu0
  %v1432 = vadd.f32 0.0, %v1431
  %v1433 = vpop.f32.mrf.mxu0
  %v1434 = vadd.f32 0.0, %v1433
  %1435 = vdwg.mxu0
  %1436 = vmatpush.bf16.msra.mxu0 0
  %1437 = vmatpush.bf16.msra.mxu0 0
  %1438 = vmatpush.bf16.msra.mxu0 0
  %1439 = vmatpush.bf16.msra.mxu0 0
  %1440 = vmatpush.bf16.msra.mxu0 %v1334
  %1441 = vmatpush.bf16.msra.mxu0 %v1333
  %1442 = vmatpush.bf16.msra.mxu0 %v1332
  %1443 = vmatpush.bf16.msra.mxu0 %v1331
  %1444 = vmatmul.bf16.gmra.mxu0 %v1348
  %v1445 = vpop.f32.mrf.mxu0
  %v1446 = vadd.f32 %v1387, %v1445
  %v1447 = vpop.f32.mrf.mxu0
  %v1448 = vadd.f32 %v1389, %v1447
  %1449 = vmatmul.bf16.gmra.mxu0 %v1351
  %v1450 = vpop.f32.mrf.mxu0
  %v1451 = vadd.f32 %v1392, %v1450
  %v1452 = vpop.f32.mrf.mxu0
  %v1453 = vadd.f32 %v1394, %v1452
  %1454 = vmatmul.bf16.gmra.mxu0 %v1354
  %v1455 = vpop.f32.mrf.mxu0
  %v1456 = vadd.f32 %v1397, %v1455
  %v1457 = vpop.f32.mrf.mxu0
  %v1458 = vadd.f32 %v1399, %v1457
  %1459 = vmatmul.bf16.gmra.mxu0 %v1357
  %v1460 = vpop.f32.mrf.mxu0
  %v1461 = vadd.f32 %v1402, %v1460
  %v1462 = vpop.f32.mrf.mxu0
  %v1463 = vadd.f32 %v1404, %v1462
  %1464 = vmatmul.bf16.gmra.mxu0 %v1360
  %v1465 = vpop.f32.mrf.mxu0
  %v1466 = vadd.f32 %v1407, %v1465
  %v1467 = vpop.f32.mrf.mxu0
  %v1468 = vadd.f32 %v1409, %v1467
  %1469 = vmatmul.bf16.gmra.mxu0 %v1363
  %v1470 = vpop.f32.mrf.mxu0
  %v1471 = vadd.f32 %v1412, %v1470
  %v1472 = vpop.f32.mrf.mxu0
  %v1473 = vadd.f32 %v1414, %v1472
  %1474 = vmatmul.bf16.gmra.mxu0 %v1366
  %v1475 = vpop.f32.mrf.mxu0
  %v1476 = vadd.f32 %v1417, %v1475
  %v1477 = vpop.f32.mrf.mxu0
  %v1478 = vadd.f32 %v1419, %v1477
  %1479 = vmatmul.bf16.gmra.mxu0 %v1369
  %v1480 = vpop.f32.mrf.mxu0
  %v1481 = vadd.f32 %v1422, %v1480
  %v1482 = vpop.f32.mrf.mxu0
  %v1483 = vadd.f32 %v1424, %v1482
  %1484 = vmatmul.bf16.gmra.mxu0 %v1372
  %v1485 = vpop.f32.mrf.mxu0
  %v1486 = vadd.f32 %v1427, %v1485
  %v1487 = vpop.f32.mrf.mxu0
  %v1488 = vadd.f32 %v1429, %v1487
  %1489 = vmatmul.bf16.gmra.mxu0 %v1375
  %v1490 = vpop.f32.mrf.mxu0
  %v1491 = vadd.f32 %v1432, %v1490
  %v1492 = vpop.f32.mrf.mxu0
  %v1493 = vadd.f32 %v1434, %v1492
  %1494 = vdwg.mxu0
  %v1495 = vld [vmem:[%s3 + $0x5] sm:$0x1]
  %v1496 = vperm.slane %v1495, 0
  %v1497 = vadd.f32 %v1446, %v1496
  %v1498 = vadd.f32 %v1448, %v1496
  %v1499 = vadd.f32 %v1451, %v1496
  %v1500 = vadd.f32 %v1453, %v1496
  %v1501 = vadd.f32 %v1456, %v1496
  %v1502 = vadd.f32 %v1458, %v1496
  %v1503 = vadd.f32 %v1461, %v1496
  %v1504 = vadd.f32 %v1463, %v1496
  %v1505 = vadd.f32 %v1466, %v1496
  %v1506 = vadd.f32 %v1468, %v1496
  %v1507 = vadd.f32 %v1471, %v1496
  %v1508 = vadd.f32 %v1473, %v1496
  %v1509 = vadd.f32 %v1476, %v1496
  %v1510 = vadd.f32 %v1478, %v1496
  %v1511 = vadd.f32 %v1481, %v1496
  %v1512 = vadd.f32 %v1483, %v1496
  %v1513 = vadd.f32 %v1486, %v1496
  %v1514 = vadd.f32 %v1488, %v1496
  %v1515 = vadd.f32 %v1491, %v1496
  %v1516 = vadd.f32 %v1493, %v1496
  %v1517 = vmax.f32 %v1497, 0.0
  %v1518 = vmax.f32 %v1498, 0.0
  %v1519 = vmax.f32 %v1499, 0.0
  %v1520 = vmax.f32 %v1500, 0.0
  %v1521 = vmax.f32 %v1501, 0.0
  %v1522 = vmax.f32 %v1502, 0.0
  %v1523 = vmax.f32 %v1503, 0.0
  %v1524 = vmax.f32 %v1504, 0.0
  %v1525 = vmax.f32 %v1505, 0.0
  %v1526 = vmax.f32 %v1506, 0.0
  %v1527 = vmax.f32 %v1507, 0.0
  %v1528 = vmax.f32 %v1508, 0.0
  %v1529 = vmax.f32 %v1509, 0.0
  %v1530 = vmax.f32 %v1510, 0.0
  %v1531 = vmax.f32 %v1511, 0.0
  %v1532 = vmax.f32 %v1512, 0.0
  %v1533 = vmax.f32 %v1513, 0.0
  %v1534 = vmax.f32 %v1514, 0.0
  %v1535 = vmax.f32 %v1515, 0.0
  %v1536 = vmax.f32 %v1516, 0.0
  %v1537 = vpack.c.bf16 %v1517, %v1517
  %v1538 = vpack.c.bf16 %v1518, %v1518
  %v1539 = vpack.c.bf16 %v1519, %v1519
  %v1540 = vpack.c.bf16 %v1520, %v1520
  %v1541 = vpack.c.bf16 %v1521, %v1521
  %v1542 = vpack.c.bf16 %v1522, %v1522
  %v1543 = vpack.c.bf16 %v1523, %v1523
  %v1544 = vpack.c.bf16 %v1524, %v1524
  %v1545 = vpack.c.bf16 %v1525, %v1525
  %v1546 = vpack.c.bf16 %v1526, %v1526
  %v1547 = vpack.c.bf16 %v1527, %v1527
  %v1548 = vpack.c.bf16 %v1528, %v1528
  %v1549 = vpack.c.bf16 %v1529, %v1529
  %v1550 = vpack.c.bf16 %v1530, %v1530
  %v1551 = vpack.c.bf16 %v1531, %v1531
  %v1552 = vpack.c.bf16 %v1532, %v1532
  %v1553 = vpack.c.bf16 %v1533, %v1533
  %v1554 = vpack.c.bf16 %v1534, %v1534
  %v1555 = vpack.c.bf16 %v1535, %v1535
  %v1556 = vpack.c.bf16 %v1536, %v1536
  %v1573 = vunpack.c.l.b16 %v1538
  %v1574 = vunpack.c.l.b16 %v1539
  %v1575 = vunpack.c.l.b16 %v1540
  %v1576 = vunpack.c.l.b16 %v1541
  %v1577 = vunpack.c.l.b16 %v1542
  %v1578 = vunpack.c.l.b16 %v1543
  %v1579 = vunpack.c.l.b16 %v1544
  %v1580 = vunpack.c.l.b16 %v1545
  %v1581 = vunpack.c.l.b16 %v1548
  %v1582 = vunpack.c.l.b16 %v1549
  %v1583 = vunpack.c.l.b16 %v1550
  %v1584 = vunpack.c.l.b16 %v1551
  %v1585 = vunpack.c.l.b16 %v1552
  %v1586 = vunpack.c.l.b16 %v1553
  %v1587 = vunpack.c.l.b16 %v1554
  %v1588 = vunpack.c.l.b16 %v1555
  %v1589 = vpack.c.b16 %v1573, %v1573
  %v1590 = vpack.c.b16 %v1574, %v1574
  %v1591 = vpack.c.b16 %v1575, %v1575
  %v1592 = vpack.c.b16 %v1576, %v1576
  %v1593 = vpack.c.b16 %v1577, %v1577
  %v1594 = vpack.c.b16 %v1578, %v1578
  %v1595 = vpack.c.b16 %v1579, %v1579
  %v1596 = vpack.c.b16 %v1580, %v1580
  %v1597 = vpack.c.b16 %v1581, %v1581
  %v1598 = vpack.c.b16 %v1582, %v1582
  %v1599 = vpack.c.b16 %v1583, %v1583
  %v1600 = vpack.c.b16 %v1584, %v1584
  %v1601 = vpack.c.b16 %v1585, %v1585
  %v1602 = vpack.c.b16 %v1586, %v1586
  %v1603 = vpack.c.b16 %v1587, %v1587
  %v1604 = vpack.c.b16 %v1588, %v1588
  %1605 = vrot.lane.b32.xlu0 %v1589, 16
  %v1606 = vpop.permute.xlu0 %1605
  %1607 = vrot.lane.b32.xlu0 %v1590, 16
  %v1608 = vpop.permute.xlu0 %1607
  %1609 = vrot.lane.b32.xlu0 %v1591, 16
  %v1610 = vpop.permute.xlu0 %1609
  %1611 = vrot.lane.b32.xlu0 %v1592, 16
  %v1612 = vpop.permute.xlu0 %1611
  %1613 = vrot.lane.b32.xlu0 %v1593, 16
  %v1614 = vpop.permute.xlu0 %1613
  %1615 = vrot.lane.b32.xlu0 %v1594, 16
  %v1616 = vpop.permute.xlu0 %1615
  %1617 = vrot.lane.b32.xlu0 %v1595, 16
  %v1618 = vpop.permute.xlu0 %1617
  %1619 = vrot.lane.b32.xlu0 %v1596, 16
  %v1620 = vpop.permute.xlu0 %1619
  %1621 = vrot.lane.b32.xlu0 %v1597, 16
  %v1622 = vpop.permute.xlu0 %1621
  %1623 = vrot.lane.b32.xlu0 %v1598, 16
  %v1624 = vpop.permute.xlu0 %1623
  %1625 = vrot.lane.b32.xlu0 %v1599, 16
  %v1626 = vpop.permute.xlu0 %1625
  %1627 = vrot.lane.b32.xlu0 %v1600, 16
  %v1628 = vpop.permute.xlu0 %1627
  %1629 = vrot.lane.b32.xlu0 %v1601, 16
  %v1630 = vpop.permute.xlu0 %1629
  %1631 = vrot.lane.b32.xlu0 %v1602, 16
  %v1632 = vpop.permute.xlu0 %1631
  %1633 = vrot.lane.b32.xlu0 %v1603, 16
  %v1634 = vpop.permute.xlu0 %1633
  %1635 = vrot.lane.b32.xlu0 %v1604, 16
  %v1636 = vpop.permute.xlu0 %1635
  %v1639 = vunpack.c.l.b16 %v1546
  %v1640 = vunpack.c.l.b16 %v1556
  %v1641 = vpack.c.b16 %v1639, %v1639
  %v1642 = vpack.c.b16 %v1640, %v1640
  %1643 = vrot.lane.b32.xlu0 %v1590, 32
  %v1644 = vpop.permute.xlu0 %1643
  %1645 = vrot.lane.b32.xlu0 %v1591, 32
  %v1646 = vpop.permute.xlu0 %1645
  %1647 = vrot.lane.b32.xlu0 %v1592, 32
  %v1648 = vpop.permute.xlu0 %1647
  %1649 = vrot.lane.b32.xlu0 %v1593, 32
  %v1650 = vpop.permute.xlu0 %1649
  %1651 = vrot.lane.b32.xlu0 %v1594, 32
  %v1652 = vpop.permute.xlu0 %1651
  %1653 = vrot.lane.b32.xlu0 %v1595, 32
  %v1654 = vpop.permute.xlu0 %1653
  %1655 = vrot.lane.b32.xlu0 %v1596, 32
  %v1656 = vpop.permute.xlu0 %1655
  %1657 = vrot.lane.b32.xlu0 %v1641, 32
  %v1658 = vpop.permute.xlu0 %1657
  %1659 = vrot.lane.b32.xlu0 %v1598, 32
  %v1660 = vpop.permute.xlu0 %1659
  %1661 = vrot.lane.b32.xlu0 %v1599, 32
  %v1662 = vpop.permute.xlu0 %1661
  %1663 = vrot.lane.b32.xlu0 %v1600, 32
  %v1664 = vpop.permute.xlu0 %1663
  %1665 = vrot.lane.b32.xlu0 %v1601, 32
  %v1666 = vpop.permute.xlu0 %1665
  %1667 = vrot.lane.b32.xlu0 %v1602, 32
  %v1668 = vpop.permute.xlu0 %1667
  %1669 = vrot.lane.b32.xlu0 %v1603, 32
  %v1670 = vpop.permute.xlu0 %1669
  %1671 = vrot.lane.b32.xlu0 %v1604, 32
  %v1672 = vpop.permute.xlu0 %1671
  %1673 = vrot.lane.b32.xlu0 %v1642, 32
  %v1674 = vpop.permute.xlu0 %1673
  %vm1675 = vcmask 130048
  %v1678 = vsel %vm1675, %v1537, %v1606
  %v1681 = vsel %vm1675, %v1538, %v1608
  %v1684 = vsel %vm1675, %v1539, %v1610
  %v1687 = vsel %vm1675, %v1540, %v1612
  %v1690 = vsel %vm1675, %v1541, %v1614
  %v1693 = vsel %vm1675, %v1542, %v1616
  %v1696 = vsel %vm1675, %v1543, %v1618
  %v1699 = vsel %vm1675, %v1544, %v1620
  %v1702 = vsel %vm1675, %v1547, %v1622
  %v1705 = vsel %vm1675, %v1548, %v1624
  %v1708 = vsel %vm1675, %v1549, %v1626
  %v1711 = vsel %vm1675, %v1550, %v1628
  %v1714 = vsel %vm1675, %v1551, %v1630
  %v1717 = vsel %vm1675, %v1552, %v1632
  %v1720 = vsel %vm1675, %v1553, %v1634
  %v1723 = vsel %vm1675, %v1554, %v1636
  %vm1724 = vcmask 261120
  %v1726 = vsel %vm1724, %v1678, %v1644
  %v1728 = vsel %vm1724, %v1681, %v1646
  %v1730 = vsel %vm1724, %v1684, %v1648
  %v1732 = vsel %vm1724, %v1687, %v1650
  %v1734 = vsel %vm1724, %v1690, %v1652
  %v1736 = vsel %vm1724, %v1693, %v1654
  %v1738 = vsel %vm1724, %v1696, %v1656
  %v1740 = vsel %vm1724, %v1699, %v1658
  %v1742 = vsel %vm1724, %v1702, %v1660
  %v1744 = vsel %vm1724, %v1705, %v1662
  %v1746 = vsel %vm1724, %v1708, %v1664
  %v1748 = vsel %vm1724, %v1711, %v1666
  %v1750 = vsel %vm1724, %v1714, %v1668
  %v1752 = vsel %vm1724, %v1717, %v1670
  %v1754 = vsel %vm1724, %v1720, %v1672
  %v1756 = vsel %vm1724, %v1723, %v1674
  %v1757 = vld [vmem:[%s1 + $0x8] sm:$0xf]
  %v1758 = vld [vmem:[%s1 + $0xc] sm:$0xf]
  %v1759 = vld [vmem:[%s1 + $0x10] sm:$0xf]
  %v1760 = vld [vmem:[%s1 + $0x14] sm:$0xf]
  %v1761 = vld [vmem:[%s1 + $0x18] sm:$0xf]
  %v1762 = vld [vmem:[%s1 + $0x1c] sm:$0xf]
  %v1779 = vunpack.c.l.b16 %v1726
  %v1780 = vunpack.c.l.b16 %v1728
  %v1781 = vunpack.c.l.b16 %v1730
  %v1782 = vunpack.c.l.b16 %v1732
  %v1783 = vunpack.c.l.b16 %v1734
  %v1784 = vunpack.c.l.b16 %v1736
  %v1785 = vunpack.c.l.b16 %v1738
  %v1786 = vunpack.c.l.b16 %v1740
  %v1787 = vunpack.c.l.b16 %v1742
  %v1788 = vunpack.c.l.b16 %v1744
  %v1789 = vunpack.c.l.b16 %v1746
  %v1790 = vunpack.c.l.b16 %v1748
  %v1791 = vunpack.c.l.b16 %v1750
  %v1792 = vunpack.c.l.b16 %v1752
  %v1793 = vunpack.c.l.b16 %v1754
  %v1794 = vunpack.c.l.b16 %v1756
  %v1795 = vpack.c.b16 %v1780, %v1779
  %v1796 = vpack.c.b16 %v1782, %v1781
  %v1797 = vpack.c.b16 %v1784, %v1783
  %v1798 = vpack.c.b16 %v1786, %v1785
  %v1799 = vpack.c.b16 %v1788, %v1787
  %v1800 = vpack.c.b16 %v1790, %v1789
  %v1801 = vpack.c.b16 %v1792, %v1791
  %v1802 = vpack.c.b16 %v1794, %v1793
  %v1809 = vunpack.c.l.b16 %v1757
  %v1810 = vunpack.c.l.b16 %v1758
  %v1811 = vunpack.c.l.b16 %v1759
  %v1812 = vunpack.c.l.b16 %v1760
  %v1813 = vunpack.c.l.b16 %v1761
  %v1814 = vunpack.c.l.b16 %v1762
  %v1815 = vpack.c.b16 %v1810, %v1809
  %v1816 = vpack.c.b16 %v1812, %v1811
  %v1817 = vpack.c.b16 %v1814, %v1813
  %vm1821 = vcmask 392192
  %v1823 = vsel %vm1821, %v1795, 0
  %v1826 = vsel %vm1821, %v1796, 0
  %v1829 = vsel %vm1821, %v1797, 0
  %v1832 = vsel %vm1821, %v1798, 0
  %v1835 = vsel %vm1821, %v1799, 0
  %v1838 = vsel %vm1821, %v1800, 0
  %v1841 = vsel %vm1821, %v1801, 0
  %v1844 = vsel %vm1821, %v1802, 0
  %1846 = vmatpush.bf16.msra.mxu0 0
  %1847 = vmatpush.bf16.msra.mxu0 0
  %1848 = vmatpush.bf16.msra.mxu0 0
  %1849 = vmatpush.bf16.msra.mxu0 0
  %1850 = vmatpush.bf16.msra.mxu0 0
  %1851 = vmatpush.bf16.msra.mxu0 %v1817
  %1852 = vmatpush.bf16.msra.mxu0 %v1816
  %1853 = vmatpush.bf16.msra.mxu0 %v1815
  %1854 = vmatmul.bf16.gmra.mxu0 %v1823
  %v1855 = vpop.f32.mrf.mxu0
  %v1856 = vadd.f32 0.0, %v1855
  %v1857 = vpop.f32.mrf.mxu0
  %v1858 = vadd.f32 0.0, %v1857
  %1859 = vmatmul.bf16.gmra.mxu0 %v1826
  %v1860 = vpop.f32.mrf.mxu0
  %v1861 = vadd.f32 0.0, %v1860
  %v1862 = vpop.f32.mrf.mxu0
  %v1863 = vadd.f32 0.0, %v1862
  %1864 = vmatmul.bf16.gmra.mxu0 %v1829
  %v1865 = vpop.f32.mrf.mxu0
  %v1866 = vadd.f32 0.0, %v1865
  %v1867 = vpop.f32.mrf.mxu0
  %v1868 = vadd.f32 0.0, %v1867
  %1869 = vmatmul.bf16.gmra.mxu0 %v1832
  %v1870 = vpop.f32.mrf.mxu0
  %v1871 = vadd.f32 0.0, %v1870
  %v1872 = vpop.f32.mrf.mxu0
  %v1873 = vadd.f32 0.0, %v1872
  %1874 = vmatmul.bf16.gmra.mxu0 %v1835
  %v1875 = vpop.f32.mrf.mxu0
  %v1876 = vadd.f32 0.0, %v1875
  %v1877 = vpop.f32.mrf.mxu0
  %v1878 = vadd.f32 0.0, %v1877
  %1879 = vmatmul.bf16.gmra.mxu0 %v1838
  %v1880 = vpop.f32.mrf.mxu0
  %v1881 = vadd.f32 0.0, %v1880
  %v1882 = vpop.f32.mrf.mxu0
  %v1883 = vadd.f32 0.0, %v1882
  %1884 = vmatmul.bf16.gmra.mxu0 %v1841
  %v1885 = vpop.f32.mrf.mxu0
  %v1886 = vadd.f32 0.0, %v1885
  %v1887 = vpop.f32.mrf.mxu0
  %v1888 = vadd.f32 0.0, %v1887
  %1889 = vmatmul.bf16.gmra.mxu0 %v1844
  %v1890 = vpop.f32.mrf.mxu0
  %v1891 = vadd.f32 0.0, %v1890
  %v1892 = vpop.f32.mrf.mxu0
  %v1893 = vadd.f32 0.0, %v1892
  %1894 = vdwg.mxu0
  %v1895 = vld [vmem:[%s3 + $0x1] sm:$0x1]
  %v1896 = vperm.slane %v1895, 0
  %v1897 = vadd.f32 %v1856, %v1896
  %v1898 = vadd.f32 %v1858, %v1896
  %v1899 = vadd.f32 %v1861, %v1896
  %v1900 = vadd.f32 %v1863, %v1896
  %v1901 = vadd.f32 %v1866, %v1896
  %v1902 = vadd.f32 %v1868, %v1896
  %v1903 = vadd.f32 %v1871, %v1896
  %v1904 = vadd.f32 %v1873, %v1896
  %v1905 = vadd.f32 %v1876, %v1896
  %v1906 = vadd.f32 %v1878, %v1896
  %v1907 = vadd.f32 %v1881, %v1896
  %v1908 = vadd.f32 %v1883, %v1896
  %v1909 = vadd.f32 %v1886, %v1896
  %v1910 = vadd.f32 %v1888, %v1896
  %v1911 = vadd.f32 %v1891, %v1896
  %v1912 = vadd.f32 %v1893, %v1896
  %v1913 = vsub.f32 0.0, %v1897
  %v1914 = vsub.f32 0.0, %v1898
  %v1915 = vsub.f32 0.0, %v1899
  %v1916 = vsub.f32 0.0, %v1900
  %v1917 = vsub.f32 0.0, %v1901
  %v1918 = vsub.f32 0.0, %v1902
  %v1919 = vsub.f32 0.0, %v1903
  %v1920 = vsub.f32 0.0, %v1904
  %v1921 = vsub.f32 0.0, %v1905
  %v1922 = vsub.f32 0.0, %v1906
  %v1923 = vsub.f32 0.0, %v1907
  %v1924 = vsub.f32 0.0, %v1908
  %v1925 = vsub.f32 0.0, %v1909
  %v1926 = vsub.f32 0.0, %v1910
  %v1927 = vsub.f32 0.0, %v1911
  %v1928 = vsub.f32 0.0, %v1912
  %v1929 = vmul.f32 %v1913, 1.442695
  %v1930 = vpow.pop %v1929
  %v1931 = vmul.f32 %v1914, 1.442695
  %v1932 = vpow.pop %v1931
  %v1933 = vmul.f32 %v1915, 1.442695
  %v1934 = vpow.pop %v1933
  %v1935 = vmul.f32 %v1916, 1.442695
  %v1936 = vpow.pop %v1935
  %v1937 = vmul.f32 %v1917, 1.442695
  %v1938 = vpow.pop %v1937
  %v1939 = vmul.f32 %v1918, 1.442695
  %v1940 = vpow.pop %v1939
  %v1941 = vmul.f32 %v1919, 1.442695
  %v1942 = vpow.pop %v1941
  %v1943 = vmul.f32 %v1920, 1.442695
  %v1944 = vpow.pop %v1943
  %v1945 = vmul.f32 %v1921, 1.442695
  %v1946 = vpow.pop %v1945
  %v1947 = vmul.f32 %v1922, 1.442695
  %v1948 = vpow.pop %v1947
  %v1949 = vmul.f32 %v1923, 1.442695
  %v1950 = vpow.pop %v1949
  %v1951 = vmul.f32 %v1924, 1.442695
  %v1952 = vpow.pop %v1951
  %v1953 = vmul.f32 %v1925, 1.442695
  %v1954 = vpow.pop %v1953
  %v1955 = vmul.f32 %v1926, 1.442695
  %v1956 = vpow.pop %v1955
  %v1957 = vmul.f32 %v1927, 1.442695
  %v1958 = vpow.pop %v1957
  %v1959 = vmul.f32 %v1928, 1.442695
  %v1960 = vpow.pop %v1959
  %v1961 = vadd.f32 %v1930, 1.0
  %v1962 = vadd.f32 %v1932, 1.0
  %v1963 = vadd.f32 %v1934, 1.0
  %v1964 = vadd.f32 %v1936, 1.0
  %v1965 = vadd.f32 %v1938, 1.0
  %v1966 = vadd.f32 %v1940, 1.0
  %v1967 = vadd.f32 %v1942, 1.0
  %v1968 = vadd.f32 %v1944, 1.0
  %v1969 = vadd.f32 %v1946, 1.0
  %v1970 = vadd.f32 %v1948, 1.0
  %v1971 = vadd.f32 %v1950, 1.0
  %v1972 = vadd.f32 %v1952, 1.0
  %v1973 = vadd.f32 %v1954, 1.0
  %v1974 = vadd.f32 %v1956, 1.0
  %v1975 = vadd.f32 %v1958, 1.0
  %v1976 = vadd.f32 %v1960, 1.0
  %v1977 = vrcp.pop %v1961
  %v1978 = vrcp.pop %v1962
  %v1979 = vrcp.pop %v1963
  %v1980 = vrcp.pop %v1964
  %v1981 = vrcp.pop %v1965
  %v1982 = vrcp.pop %v1966
  %v1983 = vrcp.pop %v1967
  %v1984 = vrcp.pop %v1968
  %v1985 = vrcp.pop %v1969
  %v1986 = vrcp.pop %v1970
  %v1987 = vrcp.pop %v1971
  %v1988 = vrcp.pop %v1972
  %v1989 = vrcp.pop %v1973
  %v1990 = vrcp.pop %v1974
  %v1991 = vrcp.pop %v1975
  %v1992 = vrcp.pop %v1976
  %2009 = vrot.lane.b32.xlu0 %v1977, 64
  %v2010 = vpop.permute.xlu0 %2009
  %2011 = vrot.lane.b32.xlu0 %v1978, 64
  %v2012 = vpop.permute.xlu0 %2011
  %2013 = vrot.lane.b32.xlu0 %v1979, 64
  %v2014 = vpop.permute.xlu0 %2013
  %2015 = vrot.lane.b32.xlu0 %v1980, 64
  %v2016 = vpop.permute.xlu0 %2015
  %2017 = vrot.lane.b32.xlu0 %v1981, 64
  %v2018 = vpop.permute.xlu0 %2017
  %2019 = vrot.lane.b32.xlu0 %v1982, 64
  %v2020 = vpop.permute.xlu0 %2019
  %2021 = vrot.lane.b32.xlu0 %v1983, 64
  %v2022 = vpop.permute.xlu0 %2021
  %2023 = vrot.lane.b32.xlu0 %v1984, 64
  %v2024 = vpop.permute.xlu0 %2023
  %2025 = vrot.lane.b32.xlu0 %v1985, 64
  %v2026 = vpop.permute.xlu0 %2025
  %2027 = vrot.lane.b32.xlu0 %v1986, 64
  %v2028 = vpop.permute.xlu0 %2027
  %2029 = vrot.lane.b32.xlu0 %v1987, 64
  %v2030 = vpop.permute.xlu0 %2029
  %2031 = vrot.lane.b32.xlu0 %v1988, 64
  %v2032 = vpop.permute.xlu0 %2031
  %2033 = vrot.lane.b32.xlu0 %v1989, 64
  %v2034 = vpop.permute.xlu0 %2033
  %2035 = vrot.lane.b32.xlu0 %v1990, 64
  %v2036 = vpop.permute.xlu0 %2035
  %2037 = vrot.lane.b32.xlu0 %v1991, 64
  %v2038 = vpop.permute.xlu0 %2037
  %2039 = vrot.lane.b32.xlu0 %v1992, 64
  %v2040 = vpop.permute.xlu0 %2039
  %v2057 = vmul.f32 %v1897, %v2010
  %v2058 = vmul.f32 %v1898, %v2012
  %v2059 = vmul.f32 %v1899, %v2014
  %v2060 = vmul.f32 %v1900, %v2016
  %v2061 = vmul.f32 %v1901, %v2018
  %v2062 = vmul.f32 %v1902, %v2020
  %v2063 = vmul.f32 %v1903, %v2022
  %v2064 = vmul.f32 %v1904, %v2024
  %v2065 = vmul.f32 %v1905, %v2026
  %v2066 = vmul.f32 %v1906, %v2028
  %v2067 = vmul.f32 %v1907, %v2030
  %v2068 = vmul.f32 %v1908, %v2032
  %v2069 = vmul.f32 %v1909, %v2034
  %v2070 = vmul.f32 %v1910, %v2036
  %v2071 = vmul.f32 %v1911, %v2038
  %v2072 = vmul.f32 %v1912, %v2040
  %v2073 = vsel %vm1080, %v2057, 0.0
  %v2074 = vsel %vm1080, %v2058, 0.0
  %v2075 = vadd.f32 %v2073, %v2074
  %v2076 = vsel %vm1080, %v2059, 0.0
  %v2077 = vadd.f32 %v2075, %v2076
  %v2078 = vsel %vm1080, %v2060, 0.0
  %v2079 = vadd.f32 %v2077, %v2078
  %v2080 = vsel %vm1080, %v2061, 0.0
  %v2081 = vadd.f32 %v2079, %v2080
  %v2082 = vsel %vm1080, %v2062, 0.0
  %v2083 = vadd.f32 %v2081, %v2082
  %v2084 = vsel %vm1080, %v2063, 0.0
  %v2085 = vadd.f32 %v2083, %v2084
  %v2086 = vsel %vm1080, %v2064, 0.0
  %v2087 = vadd.f32 %v2085, %v2086
  %v2088 = vsel %vm1080, %v2065, 0.0
  %v2089 = vadd.f32 %v2087, %v2088
  %v2090 = vsel %vm1080, %v2066, 0.0
  %v2091 = vadd.f32 %v2089, %v2090
  %v2092 = vsel %vm1080, %v2067, 0.0
  %v2093 = vadd.f32 %v2091, %v2092
  %v2094 = vsel %vm1080, %v2068, 0.0
  %v2095 = vadd.f32 %v2093, %v2094
  %v2096 = vsel %vm1080, %v2069, 0.0
  %v2097 = vadd.f32 %v2095, %v2096
  %v2098 = vsel %vm1080, %v2070, 0.0
  %v2099 = vadd.f32 %v2097, %v2098
  %v2100 = vsel %vm1080, %v2071, 0.0
  %v2101 = vadd.f32 %v2099, %v2100
  %v2102 = vsel %vm1080, %v2072, 0.0
  %v2103 = vadd.f32 %v2101, %v2102
  %2104 = vadd.xlane.f32.xlu0 %v2103
  %v2105 = vpop.xlane.xlu0 %2104
  %v2106 = vmul.f32 %v2057, %v2057
  %v2107 = vmul.f32 %v2058, %v2058
  %v2108 = vmul.f32 %v2059, %v2059
  %v2109 = vmul.f32 %v2060, %v2060
  %v2110 = vmul.f32 %v2061, %v2061
  %v2111 = vmul.f32 %v2062, %v2062
  %v2112 = vmul.f32 %v2063, %v2063
  %v2113 = vmul.f32 %v2064, %v2064
  %v2114 = vmul.f32 %v2065, %v2065
  %v2115 = vmul.f32 %v2066, %v2066
  %v2116 = vmul.f32 %v2067, %v2067
  %v2117 = vmul.f32 %v2068, %v2068
  %v2118 = vmul.f32 %v2069, %v2069
  %v2119 = vmul.f32 %v2070, %v2070
  %v2120 = vmul.f32 %v2071, %v2071
  %v2121 = vmul.f32 %v2072, %v2072
  %v2122 = vsel %vm1080, %v2106, 0.0
  %v2123 = vsel %vm1080, %v2107, 0.0
  %v2124 = vadd.f32 %v2122, %v2123
  %v2125 = vsel %vm1080, %v2108, 0.0
  %v2126 = vadd.f32 %v2124, %v2125
  %v2127 = vsel %vm1080, %v2109, 0.0
  %v2128 = vadd.f32 %v2126, %v2127
  %v2129 = vsel %vm1080, %v2110, 0.0
  %v2130 = vadd.f32 %v2128, %v2129
  %v2131 = vsel %vm1080, %v2111, 0.0
  %v2132 = vadd.f32 %v2130, %v2131
  %v2133 = vsel %vm1080, %v2112, 0.0
  %v2134 = vadd.f32 %v2132, %v2133
  %v2135 = vsel %vm1080, %v2113, 0.0
  %v2136 = vadd.f32 %v2134, %v2135
  %v2137 = vsel %vm1080, %v2114, 0.0
  %v2138 = vadd.f32 %v2136, %v2137
  %v2139 = vsel %vm1080, %v2115, 0.0
  %v2140 = vadd.f32 %v2138, %v2139
  %v2141 = vsel %vm1080, %v2116, 0.0
  %v2142 = vadd.f32 %v2140, %v2141
  %v2143 = vsel %vm1080, %v2117, 0.0
  %v2144 = vadd.f32 %v2142, %v2143
  %v2145 = vsel %vm1080, %v2118, 0.0
  %v2146 = vadd.f32 %v2144, %v2145
  %v2147 = vsel %vm1080, %v2119, 0.0
  %v2148 = vadd.f32 %v2146, %v2147
  %v2149 = vsel %vm1080, %v2120, 0.0
  %v2150 = vadd.f32 %v2148, %v2149
  %v2151 = vsel %vm1080, %v2121, 0.0
  %v2152 = vadd.f32 %v2150, %v2151
  %2153 = vadd.xlane.f32.xlu0 %v2152
  %v2154 = vpop.xlane.xlu0 %2153
  %v2155 = vmul.f32 %v2105, 0.0009765625
  %v2156 = vmul.f32 %v2154, 0.0009765625
  %v2157 = vmul.f32 %v2155, %v2155
  %v2158 = vsub.f32 %v2156, %v2157
  %v2159 = vadd.f32 %v2158, 1e-05
  %v2160 = vrsqrt.pop %v2159
  %v2161 = vmul.f32 %v2160, %v2159
  %v2162 = vmul.f32 %v2161, %v2160
  %v2163 = vmul.f32 0.5, %v2162
  %v2164 = vsub.f32 1.5, %v2163
  %v2165 = vmul.f32 %v2160, %v2164
  %vm2166 = vweird.f32 %v2159
  %vm2167 = vweird.f32 %v2160
  %vm2168 = vmor %vm2166, %vm2167
  %v2169 = vsel %vm2168, %v2160, %v2165
  %v2170 = vmul.f32 %v21, %v2169
  %2172 = vset.pattern.permute.xlu0 0
  %2173 = vperm.xlu0 %2172, %v2170
  %v2174 = vpop.permute.xlu0 %2173
  %v2176 = vmul.f32 %v2057, %v2174
  %v2177 = vmul.f32 %v2058, %v2174
  %v2178 = vmul.f32 %v2059, %v2174
  %v2179 = vmul.f32 %v2060, %v2174
  %v2180 = vmul.f32 %v2061, %v2174
  %v2181 = vmul.f32 %v2062, %v2174
  %v2182 = vmul.f32 %v2063, %v2174
  %v2183 = vmul.f32 %v2064, %v2174
  %v2184 = vmul.f32 %v2065, %v2174
  %v2185 = vmul.f32 %v2066, %v2174
  %v2186 = vmul.f32 %v2067, %v2174
  %v2187 = vmul.f32 %v2068, %v2174
  %v2188 = vmul.f32 %v2069, %v2174
  %v2189 = vmul.f32 %v2070, %v2174
  %v2190 = vmul.f32 %v2071, %v2174
  %v2191 = vmul.f32 %v2072, %v2174
  %v2192 = vmul.f32 %v2155, %v2170
  %2194 = vrot.lane.b32.xlu0 %v2192, 1
  %v2195 = vpop.permute.xlu0 %2194
  %v2197 = vsub.f32 %v21, %v2195
  %2199 = vset.pattern.permute.xlu0 1
  %2200 = vperm.xlu0 %2199, %v2197
  %v2201 = vpop.permute.xlu0 %2200
  %v2203 = vadd.f32 %v2176, %v2201
  %v2204 = vadd.f32 %v2177, %v2201
  %v2205 = vadd.f32 %v2178, %v2201
  %v2206 = vadd.f32 %v2179, %v2201
  %v2207 = vadd.f32 %v2180, %v2201
  %v2208 = vadd.f32 %v2181, %v2201
  %v2209 = vadd.f32 %v2182, %v2201
  %v2210 = vadd.f32 %v2183, %v2201
  %v2211 = vadd.f32 %v2184, %v2201
  %v2212 = vadd.f32 %v2185, %v2201
  %v2213 = vadd.f32 %v2186, %v2201
  %v2214 = vadd.f32 %v2187, %v2201
  %v2215 = vadd.f32 %v2188, %v2201
  %v2216 = vadd.f32 %v2189, %v2201
  %v2217 = vadd.f32 %v2190, %v2201
  %v2218 = vadd.f32 %v2191, %v2201
  %v2219 = vpack.c.bf16 %v2203, %v2203
  %v2220 = vpack.c.bf16 %v2204, %v2204
  %v2221 = vpack.c.bf16 %v2205, %v2205
  %v2222 = vpack.c.bf16 %v2206, %v2206
  %v2223 = vpack.c.bf16 %v2207, %v2207
  %v2224 = vpack.c.bf16 %v2208, %v2208
  %v2225 = vpack.c.bf16 %v2209, %v2209
  %v2226 = vpack.c.bf16 %v2210, %v2210
  %v2227 = vpack.c.bf16 %v2211, %v2211
  %v2228 = vpack.c.bf16 %v2212, %v2212
  %v2229 = vpack.c.bf16 %v2213, %v2213
  %v2230 = vpack.c.bf16 %v2214, %v2214
  %v2231 = vpack.c.bf16 %v2215, %v2215
  %v2232 = vpack.c.bf16 %v2216, %v2216
  %v2233 = vpack.c.bf16 %v2217, %v2217
  %v2234 = vpack.c.bf16 %v2218, %v2218
  %v2247 = vunpack.c.l.b16 %v2220
  %v2248 = vunpack.c.l.b16 %v2221
  %v2249 = vunpack.c.l.b16 %v2222
  %v2250 = vunpack.c.l.b16 %v2223
  %v2251 = vunpack.c.l.b16 %v2224
  %v2252 = vunpack.c.l.b16 %v2225
  %v2253 = vunpack.c.l.b16 %v2228
  %v2254 = vunpack.c.l.b16 %v2229
  %v2255 = vunpack.c.l.b16 %v2230
  %v2256 = vunpack.c.l.b16 %v2231
  %v2257 = vunpack.c.l.b16 %v2232
  %v2258 = vunpack.c.l.b16 %v2233
  %v2259 = vpack.c.b16 %v2247, %v2247
  %v2260 = vpack.c.b16 %v2248, %v2248
  %v2261 = vpack.c.b16 %v2249, %v2249
  %v2262 = vpack.c.b16 %v2250, %v2250
  %v2263 = vpack.c.b16 %v2251, %v2251
  %v2264 = vpack.c.b16 %v2252, %v2252
  %v2265 = vpack.c.b16 %v2253, %v2253
  %v2266 = vpack.c.b16 %v2254, %v2254
  %v2267 = vpack.c.b16 %v2255, %v2255
  %v2268 = vpack.c.b16 %v2256, %v2256
  %v2269 = vpack.c.b16 %v2257, %v2257
  %v2270 = vpack.c.b16 %v2258, %v2258
  %2271 = vrot.lane.b32.xlu0 %v2259, 64
  %v2272 = vpop.permute.xlu0 %2271
  %2273 = vrot.lane.b32.xlu0 %v2260, 64
  %v2274 = vpop.permute.xlu0 %2273
  %2275 = vrot.lane.b32.xlu0 %v2261, 64
  %v2276 = vpop.permute.xlu0 %2275
  %2277 = vrot.lane.b32.xlu0 %v2262, 64
  %v2278 = vpop.permute.xlu0 %2277
  %2279 = vrot.lane.b32.xlu0 %v2263, 64
  %v2280 = vpop.permute.xlu0 %2279
  %2281 = vrot.lane.b32.xlu0 %v2264, 64
  %v2282 = vpop.permute.xlu0 %2281
  %2283 = vrot.lane.b32.xlu0 %v2265, 64
  %v2284 = vpop.permute.xlu0 %2283
  %2285 = vrot.lane.b32.xlu0 %v2266, 64
  %v2286 = vpop.permute.xlu0 %2285
  %2287 = vrot.lane.b32.xlu0 %v2267, 64
  %v2288 = vpop.permute.xlu0 %2287
  %2289 = vrot.lane.b32.xlu0 %v2268, 64
  %v2290 = vpop.permute.xlu0 %2289
  %2291 = vrot.lane.b32.xlu0 %v2269, 64
  %v2292 = vpop.permute.xlu0 %2291
  %2293 = vrot.lane.b32.xlu0 %v2270, 64
  %v2294 = vpop.permute.xlu0 %2293
  %v2297 = vsel %vm1080, %v2219, %v2272
  %v2300 = vsel %vm1080, %v2220, %v2274
  %v2303 = vsel %vm1080, %v2221, %v2276
  %v2306 = vsel %vm1080, %v2222, %v2278
  %v2309 = vsel %vm1080, %v2223, %v2280
  %v2312 = vsel %vm1080, %v2224, %v2282
  %v2315 = vsel %vm1080, %v2227, %v2284
  %v2318 = vsel %vm1080, %v2228, %v2286
  %v2321 = vsel %vm1080, %v2229, %v2288
  %v2324 = vsel %vm1080, %v2230, %v2290
  %v2327 = vsel %vm1080, %v2231, %v2292
  %v2330 = vsel %vm1080, %v2232, %v2294
  %v2345 = vunpack.c.l.b16 %v2297
  %v2346 = vunpack.c.l.b16 %v2300
  %v2347 = vunpack.c.l.b16 %v2303
  %v2348 = vunpack.c.l.b16 %v2306
  %v2349 = vunpack.c.l.b16 %v2309
  %v2350 = vunpack.c.l.b16 %v2312
  %v2351 = vunpack.c.l.b16 %v2226
  %v2352 = vunpack.c.l.b16 %v2315
  %v2353 = vunpack.c.l.b16 %v2318
  %v2354 = vunpack.c.l.b16 %v2321
  %v2355 = vunpack.c.l.b16 %v2324
  %v2356 = vunpack.c.l.b16 %v2327
  %v2357 = vunpack.c.l.b16 %v2330
  %v2358 = vunpack.c.l.b16 %v2234
  %v2359 = vld [vmem:[%s1 + $0x20] sm:$0xf]
  %v2360 = vld [vmem:[%s1 + $0x24] sm:$0xf]
  %v2361 = vld [vmem:[%s1 + $0x28] sm:$0xf]
  %v2362 = vld [vmem:[%s1 + $0x2c] sm:$0xf]
  %v2363 = vld [vmem:[%s1 + $0x30] sm:$0xf]
  %v2364 = vld [vmem:[%s1 + $0x34] sm:$0xf]
  %v2365 = vld [vmem:[%s1 + $0x38] sm:$0xf]
  %v2366 = vld [vmem:[%s1 + $0x3c] sm:$0xf]
  %v2367 = vld [vmem:[%s1 + $0x40] sm:$0xf]
  %v2368 = vld [vmem:[%s1 + $0x44] sm:$0xf]
  %v2369 = vld [vmem:[%s1 + $0x48] sm:$0xf]
  %v2370 = vld [vmem:[%s1 + $0x4c] sm:$0xf]
  %v2371 = vld [vmem:[%s1 + $0x50] sm:$0xf]
  %v2372 = vld [vmem:[%s1 + $0x54] sm:$0xf]
  %v2373 = vld [vmem:[%s1 + $0x58] sm:$0xf]
  %v2374 = vld [vmem:[%s1 + $0x5c] sm:$0xf]
  %v2375 = vld [vmem:[%s1 + $0x60] sm:$0xf]
  %v2376 = vld [vmem:[%s1 + $0x64] sm:$0xf]
  %v2377 = vld [vmem:[%s1 + $0x68] sm:$0xf]
  %v2378 = vld [vmem:[%s1 + $0x6c] sm:$0xf]
  %v2379 = vld [vmem:[%s1 + $0x70] sm:$0xf]
  %v2380 = vld [vmem:[%s1 + $0x74] sm:$0xf]
  %v2381 = vld [vmem:[%s1 + $0x78] sm:$0xf]
  %v2382 = vld [vmem:[%s1 + $0x7c] sm:$0xf]
  %v2383 = vpack.c.b16 %v2346, %v2345
  %v2384 = vpack.c.b16 %v2249, %v2248
  %v2385 = vpack.c.b16 %v2348, %v2347
  %v2386 = vpack.c.b16 %v2251, %v2250
  %v2387 = vpack.c.b16 %v2350, %v2349
  %v2388 = vpack.c.b16 %v2351, %v2252
  %v2389 = vpack.c.b16 %v2353, %v2352
  %v2390 = vpack.c.b16 %v2255, %v2254
  %v2391 = vpack.c.b16 %v2355, %v2354
  %v2392 = vpack.c.b16 %v2257, %v2256
  %v2393 = vpack.c.b16 %v2357, %v2356
  %v2394 = vpack.c.b16 %v2358, %v2258
  %v2425 = vunpack.c.l.b16 %v2359
  %v2426 = vunpack.c.l.b16 %v2360
  %v2427 = vunpack.c.l.b16 %v2361
  %v2428 = vunpack.c.l.b16 %v2362
  %v2429 = vunpack.c.l.b16 %v2363
  %v2430 = vunpack.c.l.b16 %v2364
  %v2431 = vunpack.c.l.b16 %v2365
  %v2432 = vunpack.c.l.b16 %v2366
  %v2433 = vunpack.c.l.b16 %v2367
  %v2434 = vunpack.c.l.b16 %v2368
  %v2435 = vunpack.c.l.b16 %v2369
  %v2436 = vunpack.c.l.b16 %v2370
  %v2437 = vunpack.c.l.b16 %v2371
  %v2438 = vunpack.c.l.b16 %v2372
  %v2439 = vunpack.c.l.b16 %v2373
  %v2440 = vunpack.c.l.b16 %v2374
  %v2441 = vunpack.c.l.b16 %v2375
  %v2442 = vunpack.c.l.b16 %v2376
  %v2443 = vunpack.c.l.b16 %v2377
  %v2444 = vunpack.c.l.b16 %v2378
  %v2445 = vunpack.c.l.b16 %v2379
  %v2446 = vunpack.c.l.b16 %v2380
  %v2447 = vunpack.c.l.b16 %v2381
  %v2448 = vunpack.c.l.b16 %v2382
  %v2449 = vpack.c.b16 %v2426, %v2425
  %v2450 = vpack.c.b16 %v2428, %v2427
  %v2451 = vpack.c.b16 %v2430, %v2429
  %v2452 = vpack.c.b16 %v2432, %v2431
  %v2453 = vpack.c.b16 %v2434, %v2433
  %v2454 = vpack.c.b16 %v2436, %v2435
  %v2455 = vpack.c.b16 %v2438, %v2437
  %v2456 = vpack.c.b16 %v2440, %v2439
  %v2457 = vpack.c.b16 %v2442, %v2441
  %v2458 = vpack.c.b16 %v2444, %v2443
  %v2459 = vpack.c.b16 %v2446, %v2445
  %v2460 = vpack.c.b16 %v2448, %v2447
  %v2474 = vsel %vm1080, %v2384, 0
  %v2477 = vsel %vm1080, %v2386, 0
  %v2480 = vsel %vm1080, %v2388, 0
  %v2483 = vsel %vm1080, %v2390, 0
  %v2486 = vsel %vm1080, %v2392, 0
  %v2489 = vsel %vm1080, %v2394, 0
  %2491 = vmatpush.bf16.msra.mxu0 %v2456
  %2492 = vmatpush.bf16.msra.mxu0 %v2455
  %2493 = vmatpush.bf16.msra.mxu0 %v2454
  %2494 = vmatpush.bf16.msra.mxu0 %v2453
  %2495 = vmatpush.bf16.msra.mxu0 %v2452
  %2496 = vmatpush.bf16.msra.mxu0 %v2451
  %2497 = vmatpush.bf16.msra.mxu0 %v2450
  %2498 = vmatpush.bf16.msra.mxu0 %v2449
  %2499 = vmatmul.bf16.gmra.mxu0 %v2383
  %v2500 = vpop.f32.mrf.mxu0
  %v2501 = vadd.f32 0.0, %v2500
  %v2502 = vpop.f32.mrf.mxu0
  %v2503 = vadd.f32 0.0, %v2502
  %2504 = vmatmul.bf16.gmra.mxu0 %v2385
  %v2505 = vpop.f32.mrf.mxu0
  %v2506 = vadd.f32 0.0, %v2505
  %v2507 = vpop.f32.mrf.mxu0
  %v2508 = vadd.f32 0.0, %v2507
  %2509 = vmatmul.bf16.gmra.mxu0 %v2387
  %v2510 = vpop.f32.mrf.mxu0
  %v2511 = vadd.f32 0.0, %v2510
  %v2512 = vpop.f32.mrf.mxu0
  %v2513 = vadd.f32 0.0, %v2512
  %2514 = vmatmul.bf16.gmra.mxu0 %v2389
  %v2515 = vpop.f32.mrf.mxu0
  %v2516 = vadd.f32 0.0, %v2515
  %v2517 = vpop.f32.mrf.mxu0
  %v2518 = vadd.f32 0.0, %v2517
  %2519 = vmatmul.bf16.gmra.mxu0 %v2391
  %v2520 = vpop.f32.mrf.mxu0
  %v2521 = vadd.f32 0.0, %v2520
  %v2522 = vpop.f32.mrf.mxu0
  %v2523 = vadd.f32 0.0, %v2522
  %2524 = vmatmul.bf16.gmra.mxu0 %v2393
  %v2525 = vpop.f32.mrf.mxu0
  %v2526 = vadd.f32 0.0, %v2525
  %v2527 = vpop.f32.mrf.mxu0
  %v2528 = vadd.f32 0.0, %v2527
  %2529 = vdwg.mxu0
  %2530 = vmatpush.bf16.msra.mxu0 0
  %2531 = vmatpush.bf16.msra.mxu0 0
  %2532 = vmatpush.bf16.msra.mxu0 0
  %2533 = vmatpush.bf16.msra.mxu0 0
  %2534 = vmatpush.bf16.msra.mxu0 %v2460
  %2535 = vmatpush.bf16.msra.mxu0 %v2459
  %2536 = vmatpush.bf16.msra.mxu0 %v2458
  %2537 = vmatpush.bf16.msra.mxu0 %v2457
  %2538 = vmatmul.bf16.gmra.mxu0 %v2474
  %v2539 = vpop.f32.mrf.mxu0
  %v2540 = vadd.f32 %v2501, %v2539
  %v2541 = vpop.f32.mrf.mxu0
  %v2542 = vadd.f32 %v2503, %v2541
  %2543 = vmatmul.bf16.gmra.mxu0 %v2477
  %v2544 = vpop.f32.mrf.mxu0
  %v2545 = vadd.f32 %v2506, %v2544
  %v2546 = vpop.f32.mrf.mxu0
  %v2547 = vadd.f32 %v2508, %v2546
  %2548 = vmatmul.bf16.gmra.mxu0 %v2480
  %v2549 = vpop.f32.mrf.mxu0
  %v2550 = vadd.f32 %v2511, %v2549
  %v2551 = vpop.f32.mrf.mxu0
  %v2552 = vadd.f32 %v2513, %v2551
  %2553 = vmatmul.bf16.gmra.mxu0 %v2483
  %v2554 = vpop.f32.mrf.mxu0
  %v2555 = vadd.f32 %v2516, %v2554
  %v2556 = vpop.f32.mrf.mxu0
  %v2557 = vadd.f32 %v2518, %v2556
  %2558 = vmatmul.bf16.gmra.mxu0 %v2486
  %v2559 = vpop.f32.mrf.mxu0
  %v2560 = vadd.f32 %v2521, %v2559
  %v2561 = vpop.f32.mrf.mxu0
  %v2562 = vadd.f32 %v2523, %v2561
  %2563 = vmatmul.bf16.gmra.mxu0 %v2489
  %v2564 = vpop.f32.mrf.mxu0
  %v2565 = vadd.f32 %v2526, %v2564
  %v2566 = vpop.f32.mrf.mxu0
  %v2567 = vadd.f32 %v2528, %v2566
  %2568 = vdwg.mxu0
  %v2569 = vld [vmem:[%s3 + $0x2] sm:$0x1]
  %v2570 = vperm.slane %v2569, 0
  %v2571 = vadd.f32 %v2540, %v2570
  %v2572 = vadd.f32 %v2542, %v2570
  %v2573 = vadd.f32 %v2545, %v2570
  %v2574 = vadd.f32 %v2547, %v2570
  %v2575 = vadd.f32 %v2550, %v2570
  %v2576 = vadd.f32 %v2552, %v2570
  %v2577 = vadd.f32 %v2555, %v2570
  %v2578 = vadd.f32 %v2557, %v2570
  %v2579 = vadd.f32 %v2560, %v2570
  %v2580 = vadd.f32 %v2562, %v2570
  %v2581 = vadd.f32 %v2565, %v2570
  %v2582 = vadd.f32 %v2567, %v2570
  %v2583 = vsub.f32 0.0, %v2571
  %v2584 = vsub.f32 0.0, %v2572
  %v2585 = vsub.f32 0.0, %v2573
  %v2586 = vsub.f32 0.0, %v2574
  %v2587 = vsub.f32 0.0, %v2575
  %v2588 = vsub.f32 0.0, %v2576
  %v2589 = vsub.f32 0.0, %v2577
  %v2590 = vsub.f32 0.0, %v2578
  %v2591 = vsub.f32 0.0, %v2579
  %v2592 = vsub.f32 0.0, %v2580
  %v2593 = vsub.f32 0.0, %v2581
  %v2594 = vsub.f32 0.0, %v2582
  %v2595 = vmul.f32 %v2583, 1.442695
  %v2596 = vpow.pop %v2595
  %v2597 = vmul.f32 %v2584, 1.442695
  %v2598 = vpow.pop %v2597
  %v2599 = vmul.f32 %v2585, 1.442695
  %v2600 = vpow.pop %v2599
  %v2601 = vmul.f32 %v2586, 1.442695
  %v2602 = vpow.pop %v2601
  %v2603 = vmul.f32 %v2587, 1.442695
  %v2604 = vpow.pop %v2603
  %v2605 = vmul.f32 %v2588, 1.442695
  %v2606 = vpow.pop %v2605
  %v2607 = vmul.f32 %v2589, 1.442695
  %v2608 = vpow.pop %v2607
  %v2609 = vmul.f32 %v2590, 1.442695
  %v2610 = vpow.pop %v2609
  %v2611 = vmul.f32 %v2591, 1.442695
  %v2612 = vpow.pop %v2611
  %v2613 = vmul.f32 %v2592, 1.442695
  %v2614 = vpow.pop %v2613
  %v2615 = vmul.f32 %v2593, 1.442695
  %v2616 = vpow.pop %v2615
  %v2617 = vmul.f32 %v2594, 1.442695
  %v2618 = vpow.pop %v2617
  %v2619 = vadd.f32 %v2596, 1.0
  %v2620 = vadd.f32 %v2598, 1.0
  %v2621 = vadd.f32 %v2600, 1.0
  %v2622 = vadd.f32 %v2602, 1.0
  %v2623 = vadd.f32 %v2604, 1.0
  %v2624 = vadd.f32 %v2606, 1.0
  %v2625 = vadd.f32 %v2608, 1.0
  %v2626 = vadd.f32 %v2610, 1.0
  %v2627 = vadd.f32 %v2612, 1.0
  %v2628 = vadd.f32 %v2614, 1.0
  %v2629 = vadd.f32 %v2616, 1.0
  %v2630 = vadd.f32 %v2618, 1.0
  %v2631 = vrcp.pop %v2619
  %v2632 = vrcp.pop %v2620
  %v2633 = vrcp.pop %v2621
  %v2634 = vrcp.pop %v2622
  %v2635 = vrcp.pop %v2623
  %v2636 = vrcp.pop %v2624
  %v2637 = vrcp.pop %v2625
  %v2638 = vrcp.pop %v2626
  %v2639 = vrcp.pop %v2627
  %v2640 = vrcp.pop %v2628
  %v2641 = vrcp.pop %v2629
  %v2642 = vrcp.pop %v2630
  %2655 = vrot.lane.b32.xlu0 %v2631, 64
  %v2656 = vpop.permute.xlu0 %2655
  %2657 = vrot.lane.b32.xlu0 %v2632, 64
  %v2658 = vpop.permute.xlu0 %2657
  %2659 = vrot.lane.b32.xlu0 %v2633, 64
  %v2660 = vpop.permute.xlu0 %2659
  %2661 = vrot.lane.b32.xlu0 %v2634, 64
  %v2662 = vpop.permute.xlu0 %2661
  %2663 = vrot.lane.b32.xlu0 %v2635, 64
  %v2664 = vpop.permute.xlu0 %2663
  %2665 = vrot.lane.b32.xlu0 %v2636, 64
  %v2666 = vpop.permute.xlu0 %2665
  %2667 = vrot.lane.b32.xlu0 %v2637, 64
  %v2668 = vpop.permute.xlu0 %2667
  %2669 = vrot.lane.b32.xlu0 %v2638, 64
  %v2670 = vpop.permute.xlu0 %2669
  %2671 = vrot.lane.b32.xlu0 %v2639, 64
  %v2672 = vpop.permute.xlu0 %2671
  %2673 = vrot.lane.b32.xlu0 %v2640, 64
  %v2674 = vpop.permute.xlu0 %2673
  %2675 = vrot.lane.b32.xlu0 %v2641, 64
  %v2676 = vpop.permute.xlu0 %2675
  %2677 = vrot.lane.b32.xlu0 %v2642, 64
  %v2678 = vpop.permute.xlu0 %2677
  %v2691 = vmul.f32 %v2571, %v2656
  %v2692 = vmul.f32 %v2572, %v2658
  %v2693 = vmul.f32 %v2573, %v2660
  %v2694 = vmul.f32 %v2574, %v2662
  %v2695 = vmul.f32 %v2575, %v2664
  %v2696 = vmul.f32 %v2576, %v2666
  %v2697 = vmul.f32 %v2577, %v2668
  %v2698 = vmul.f32 %v2578, %v2670
  %v2699 = vmul.f32 %v2579, %v2672
  %v2700 = vmul.f32 %v2580, %v2674
  %v2701 = vmul.f32 %v2581, %v2676
  %v2702 = vmul.f32 %v2582, %v2678
  %v2703 = vpack.c.bf16 %v2691, %v2691
  %v2704 = vpack.c.bf16 %v2692, %v2692
  %v2705 = vpack.c.bf16 %v2693, %v2693
  %v2706 = vpack.c.bf16 %v2694, %v2694
  %v2707 = vpack.c.bf16 %v2695, %v2695
  %v2708 = vpack.c.bf16 %v2696, %v2696
  %v2709 = vpack.c.bf16 %v2697, %v2697
  %v2710 = vpack.c.bf16 %v2698, %v2698
  %v2711 = vpack.c.bf16 %v2699, %v2699
  %v2712 = vpack.c.bf16 %v2700, %v2700
  %v2713 = vpack.c.bf16 %v2701, %v2701
  %v2714 = vpack.c.bf16 %v2702, %v2702
  %v2727 = vunpack.c.l.b16 %v2703
  %v2728 = vunpack.c.l.b16 %v2704
  %v2729 = vunpack.c.l.b16 %v2705
  %v2730 = vunpack.c.l.b16 %v2706
  %v2731 = vunpack.c.l.b16 %v2707
  %v2732 = vunpack.c.l.b16 %v2708
  %v2733 = vunpack.c.l.b16 %v2709
  %v2734 = vunpack.c.l.b16 %v2710
  %v2735 = vunpack.c.l.b16 %v2711
  %v2736 = vunpack.c.l.b16 %v2712
  %v2737 = vunpack.c.l.b16 %v2713
  %v2738 = vunpack.c.l.b16 %v2714
  %v2739 = vpack.c.b16 %v2727, %v2727
  %v2740 = vpack.c.b16 %v2728, %v2728
  %v2741 = vpack.c.b16 %v2729, %v2729
  %v2742 = vpack.c.b16 %v2730, %v2730
  %v2743 = vpack.c.b16 %v2731, %v2731
  %v2744 = vpack.c.b16 %v2732, %v2732
  %v2745 = vpack.c.b16 %v2733, %v2733
  %v2746 = vpack.c.b16 %v2734, %v2734
  %v2747 = vpack.c.b16 %v2735, %v2735
  %v2748 = vpack.c.b16 %v2736, %v2736
  %v2749 = vpack.c.b16 %v2737, %v2737
  %v2750 = vpack.c.b16 %v2738, %v2738
  %v2752 = vshrl.u32 %v2739, 16
  %v2754 = vrot.slane %v2752, 7
  %v2755 = vshll.u32 %v2739, 16
  %v2757 = vor.u32 %v2754, %v2755
  %v2759 = vshrl.u32 %v2740, 16
  %v2761 = vrot.slane %v2759, 7
  %v2762 = vshll.u32 %v2740, 16
  %v2764 = vor.u32 %v2761, %v2762
  %v2766 = vshrl.u32 %v2741, 16
  %v2768 = vrot.slane %v2766, 7
  %v2769 = vshll.u32 %v2741, 16
  %v2771 = vor.u32 %v2768, %v2769
  %v2773 = vshrl.u32 %v2742, 16
  %v2775 = vrot.slane %v2773, 7
  %v2776 = vshll.u32 %v2742, 16
  %v2778 = vor.u32 %v2775, %v2776
  %v2780 = vshrl.u32 %v2743, 16
  %v2782 = vrot.slane %v2780, 7
  %v2783 = vshll.u32 %v2743, 16
  %v2785 = vor.u32 %v2782, %v2783
  %v2787 = vshrl.u32 %v2744, 16
  %v2789 = vrot.slane %v2787, 7
  %v2790 = vshll.u32 %v2744, 16
  %v2792 = vor.u32 %v2789, %v2790
  %v2794 = vshrl.u32 %v2745, 16
  %v2796 = vrot.slane %v2794, 7
  %v2797 = vshll.u32 %v2745, 16
  %v2799 = vor.u32 %v2796, %v2797
  %v2801 = vshrl.u32 %v2746, 16
  %v2803 = vrot.slane %v2801, 7
  %v2804 = vshll.u32 %v2746, 16
  %v2806 = vor.u32 %v2803, %v2804
  %v2808 = vshrl.u32 %v2747, 16
  %v2810 = vrot.slane %v2808, 7
  %v2811 = vshll.u32 %v2747, 16
  %v2813 = vor.u32 %v2810, %v2811
  %v2815 = vshrl.u32 %v2748, 16
  %v2817 = vrot.slane %v2815, 7
  %v2818 = vshll.u32 %v2748, 16
  %v2820 = vor.u32 %v2817, %v2818
  %v2822 = vshrl.u32 %v2749, 16
  %v2824 = vrot.slane %v2822, 7
  %v2825 = vshll.u32 %v2749, 16
  %v2827 = vor.u32 %v2824, %v2825
  %v2829 = vshrl.u32 %v2750, 16
  %v2831 = vrot.slane %v2829, 7
  %v2832 = vshll.u32 %v2750, 16
  %v2834 = vor.u32 %v2831, %v2832
  %v2847 = vsel %vm936, 0, %v2757
  %v2848 = vsel %vm936, 0, %v2764
  %v2849 = vsel %vm936, 0, %v2771
  %v2850 = vsel %vm936, 0, %v2778
  %v2851 = vsel %vm936, 0, %v2785
  %v2852 = vsel %vm936, 0, %v2792
  %v2853 = vsel %vm936, 0, %v2799
  %v2854 = vsel %vm936, 0, %v2806
  %v2855 = vsel %vm936, 0, %v2813
  %v2856 = vsel %vm936, 0, %v2820
  %v2857 = vsel %vm936, 0, %v2827
  %v2858 = vsel %vm936, 0, %v2834
  %v2859 = vrot.slane %v2755, 1
  %v2860 = vor.u32 %v2752, %v2859
  %v2861 = vrot.slane %v2762, 1
  %v2862 = vor.u32 %v2759, %v2861
  %v2863 = vrot.slane %v2769, 1
  %v2864 = vor.u32 %v2766, %v2863
  %v2865 = vrot.slane %v2776, 1
  %v2866 = vor.u32 %v2773, %v2865
  %v2867 = vrot.slane %v2783, 1
  %v2868 = vor.u32 %v2780, %v2867
  %v2869 = vrot.slane %v2790, 1
  %v2870 = vor.u32 %v2787, %v2869
  %v2871 = vrot.slane %v2797, 1
  %v2872 = vor.u32 %v2794, %v2871
  %v2873 = vrot.slane %v2804, 1
  %v2874 = vor.u32 %v2801, %v2873
  %v2875 = vrot.slane %v2811, 1
  %v2876 = vor.u32 %v2808, %v2875
  %v2877 = vrot.slane %v2818, 1
  %v2878 = vor.u32 %v2815, %v2877
  %v2879 = vrot.slane %v2825, 1
  %v2880 = vor.u32 %v2822, %v2879
  %v2881 = vrot.slane %v2832, 1
  %v2882 = vor.u32 %v2829, %v2881
  %v2895 = vsel %vm1019, %v2860, 0
  %v2896 = vsel %vm1019, %v2862, 0
  %v2897 = vsel %vm1019, %v2864, 0
  %v2898 = vsel %vm1019, %v2866, 0
  %v2899 = vsel %vm1019, %v2868, 0
  %v2900 = vsel %vm1019, %v2870, 0
  %v2901 = vsel %vm1019, %v2872, 0
  %v2902 = vsel %vm1019, %v2874, 0
  %v2903 = vsel %vm1019, %v2876, 0
  %v2904 = vsel %vm1019, %v2878, 0
  %v2905 = vsel %vm1019, %v2880, 0
  %v2906 = vsel %vm1019, %v2882, 0
  %2907 = vrot.lane.b32.xlu0 %v2739, 64
  %v2908 = vpop.permute.xlu0 %2907
  %2909 = vrot.lane.b32.xlu0 %v2740, 64
  %v2910 = vpop.permute.xlu0 %2909
  %2911 = vrot.lane.b32.xlu0 %v2741, 64
  %v2912 = vpop.permute.xlu0 %2911
  %2913 = vrot.lane.b32.xlu0 %v2742, 64
  %v2914 = vpop.permute.xlu0 %2913
  %2915 = vrot.lane.b32.xlu0 %v2743, 64
  %v2916 = vpop.permute.xlu0 %2915
  %2917 = vrot.lane.b32.xlu0 %v2744, 64
  %v2918 = vpop.permute.xlu0 %2917
  %2919 = vrot.lane.b32.xlu0 %v2745, 64
  %v2920 = vpop.permute.xlu0 %2919
  %2921 = vrot.lane.b32.xlu0 %v2746, 64
  %v2922 = vpop.permute.xlu0 %2921
  %2923 = vrot.lane.b32.xlu0 %v2747, 64
  %v2924 = vpop.permute.xlu0 %2923
  %2925 = vrot.lane.b32.xlu0 %v2748, 64
  %v2926 = vpop.permute.xlu0 %2925
  %2927 = vrot.lane.b32.xlu0 %v2749, 64
  %v2928 = vpop.permute.xlu0 %2927
  %2929 = vrot.lane.b32.xlu0 %v2750, 64
  %v2930 = vpop.permute.xlu0 %2929
  %v2933 = vsel %vm1080, %v2847, %v2908
  %v2936 = vsel %vm1080, %v2848, %v2910
  %v2939 = vsel %vm1080, %v2849, %v2912
  %v2942 = vsel %vm1080, %v2850, %v2914
  %v2945 = vsel %vm1080, %v2851, %v2916
  %v2948 = vsel %vm1080, %v2852, %v2918
  %v2951 = vsel %vm1080, %v2853, %v2920
  %v2954 = vsel %vm1080, %v2854, %v2922
  %v2957 = vsel %vm1080, %v2855, %v2924
  %v2960 = vsel %vm1080, %v2856, %v2926
  %v2963 = vsel %vm1080, %v2857, %v2928
  %v2966 = vsel %vm1080, %v2858, %v2930
  %v2991 = vunpack.c.l.b16 %v2933
  %v2992 = vunpack.c.l.b16 %v2895
  %v2993 = vunpack.c.l.b16 %v2936
  %v2994 = vunpack.c.l.b16 %v2896
  %v2995 = vunpack.c.l.b16 %v2939
  %v2996 = vunpack.c.l.b16 %v2897
  %v2997 = vunpack.c.l.b16 %v2942
  %v2998 = vunpack.c.l.b16 %v2898
  %v2999 = vunpack.c.l.b16 %v2945
  %v3000 = vunpack.c.l.b16 %v2899
  %v3001 = vunpack.c.l.b16 %v2948
  %v3002 = vunpack.c.l.b16 %v2900
  %v3003 = vunpack.c.l.b16 %v2951
  %v3004 = vunpack.c.l.b16 %v2901
  %v3005 = vunpack.c.l.b16 %v2954
  %v3006 = vunpack.c.l.b16 %v2902
  %v3007 = vunpack.c.l.b16 %v2957
  %v3008 = vunpack.c.l.b16 %v2903
  %v3009 = vunpack.c.l.b16 %v2960
  %v3010 = vunpack.c.l.b16 %v2904
  %v3011 = vunpack.c.l.b16 %v2963
  %v3012 = vunpack.c.l.b16 %v2905
  %v3013 = vunpack.c.l.b16 %v2966
  %v3014 = vunpack.c.l.b16 %v2906
  %v3015 = vld [vmem:[%s2 + $0x60] sm:$0xf]
  %v3016 = vld [vmem:[%s2 + $0x64] sm:$0xf]
  %v3017 = vld [vmem:[%s2 + $0x68] sm:$0xf]
  %v3018 = vld [vmem:[%s2 + $0x6c] sm:$0xf]
  %v3019 = vld [vmem:[%s2 + $0x70] sm:$0xf]
  %v3020 = vld [vmem:[%s2 + $0x74] sm:$0xf]
  %v3021 = vld [vmem:[%s2 + $0x78] sm:$0xf]
  %v3022 = vld [vmem:[%s2 + $0x7c] sm:$0xf]
  %v3023 = vld [vmem:[%s2 + $0x80] sm:$0xf]
  %v3024 = vld [vmem:[%s2 + $0x84] sm:$0xf]
  %v3025 = vld [vmem:[%s2 + $0x88] sm:$0xf]
  %v3026 = vld [vmem:[%s2 + $0x8c] sm:$0xf]
  %v3027 = vld [vmem:[%s2 + $0x90] sm:$0xf]
  %v3028 = vld [vmem:[%s2 + $0x94] sm:$0xf]
  %v3029 = vld [vmem:[%s2 + $0x98] sm:$0xf]
  %v3030 = vld [vmem:[%s2 + $0x9c] sm:$0xf]
  %v3031 = vld [vmem:[%s2 + $0xa0] sm:$0xf]
  %v3032 = vld [vmem:[%s2 + $0xa4] sm:$0xf]
  %v3033 = vld [vmem:[%s2 + $0xa8] sm:$0xf]
  %v3034 = vld [vmem:[%s2 + $0xac] sm:$0xf]
  %v3035 = vld [vmem:[%s2 + $0xb0] sm:$0xf]
  %v3036 = vld [vmem:[%s2 + $0xb4] sm:$0xf]
  %v3037 = vld [vmem:[%s2 + $0xb8] sm:$0xf]
  %v3038 = vld [vmem:[%s2 + $0xbc] sm:$0xf]
  %v3039 = vpack.c.b16 %v2993, %v2991
  %v3040 = vpack.c.b16 %v2994, %v2992
  %v3041 = vpack.c.b16 %v2997, %v2995
  %v3042 = vpack.c.b16 %v2998, %v2996
  %v3043 = vpack.c.b16 %v3001, %v2999
  %v3044 = vpack.c.b16 %v3002, %v3000
  %v3045 = vpack.c.b16 %v3005, %v3003
  %v3046 = vpack.c.b16 %v3006, %v3004
  %v3047 = vpack.c.b16 %v3009, %v3007
  %v3048 = vpack.c.b16 %v3010, %v3008
  %v3049 = vpack.c.b16 %v3013, %v3011
  %v3050 = vpack.c.b16 %v3014, %v3012
  %v3081 = vunpack.c.l.b16 %v3015
  %v3082 = vunpack.c.l.b16 %v3016
  %v3083 = vunpack.c.l.b16 %v3017
  %v3084 = vunpack.c.l.b16 %v3018
  %v3085 = vunpack.c.l.b16 %v3019
  %v3086 = vunpack.c.l.b16 %v3020
  %v3087 = vunpack.c.l.b16 %v3021
  %v3088 = vunpack.c.l.b16 %v3022
  %v3089 = vunpack.c.l.b16 %v3023
  %v3090 = vunpack.c.l.b16 %v3024
  %v3091 = vunpack.c.l.b16 %v3025
  %v3092 = vunpack.c.l.b16 %v3026
  %v3093 = vunpack.c.l.b16 %v3027
  %v3094 = vunpack.c.l.b16 %v3028
  %v3095 = vunpack.c.l.b16 %v3029
  %v3096 = vunpack.c.l.b16 %v3030
  %v3097 = vunpack.c.l.b16 %v3031
  %v3098 = vunpack.c.l.b16 %v3032
  %v3099 = vunpack.c.l.b16 %v3033
  %v3100 = vunpack.c.l.b16 %v3034
  %v3101 = vunpack.c.l.b16 %v3035
  %v3102 = vunpack.c.l.b16 %v3036
  %v3103 = vunpack.c.l.b16 %v3037
  %v3104 = vunpack.c.l.b16 %v3038
  %v3105 = vpack.c.b16 %v3082, %v3081
  %v3106 = vpack.c.b16 %v3084, %v3083
  %v3107 = vpack.c.b16 %v3086, %v3085
  %v3108 = vpack.c.b16 %v3088, %v3087
  %v3109 = vpack.c.b16 %v3090, %v3089
  %v3110 = vpack.c.b16 %v3092, %v3091
  %v3111 = vpack.c.b16 %v3094, %v3093
  %v3112 = vpack.c.b16 %v3096, %v3095
  %v3113 = vpack.c.b16 %v3098, %v3097
  %v3114 = vpack.c.b16 %v3100, %v3099
  %v3115 = vpack.c.b16 %v3102, %v3101
  %v3116 = vpack.c.b16 %v3104, %v3103
  %v3130 = vsel %vm1080, %v3040, 0
  %v3133 = vsel %vm1080, %v3042, 0
  %v3136 = vsel %vm1080, %v3044, 0
  %v3139 = vsel %vm1080, %v3046, 0
  %v3142 = vsel %vm1080, %v3048, 0
  %v3145 = vsel %vm1080, %v3050, 0
  %3147 = vmatpush.bf16.msra.mxu0 %v3112
  %3148 = vmatpush.bf16.msra.mxu0 %v3111
  %3149 = vmatpush.bf16.msra.mxu0 %v3110
  %3150 = vmatpush.bf16.msra.mxu0 %v3109
  %3151 = vmatpush.bf16.msra.mxu0 %v3108
  %3152 = vmatpush.bf16.msra.mxu0 %v3107
  %3153 = vmatpush.bf16.msra.mxu0 %v3106
  %3154 = vmatpush.bf16.msra.mxu0 %v3105
  %3155 = vmatmul.bf16.gmra.mxu0 %v3039
  %v3156 = vpop.f32.mrf.mxu0
  %v3157 = vadd.f32 0.0, %v3156
  %v3158 = vpop.f32.mrf.mxu0
  %v3159 = vadd.f32 0.0, %v3158
  %3160 = vmatmul.bf16.gmra.mxu0 %v3041
  %v3161 = vpop.f32.mrf.mxu0
  %v3162 = vadd.f32 0.0, %v3161
  %v3163 = vpop.f32.mrf.mxu0
  %v3164 = vadd.f32 0.0, %v3163
  %3165 = vmatmul.bf16.gmra.mxu0 %v3043
  %v3166 = vpop.f32.mrf.mxu0
  %v3167 = vadd.f32 0.0, %v3166
  %v3168 = vpop.f32.mrf.mxu0
  %v3169 = vadd.f32 0.0, %v3168
  %3170 = vmatmul.bf16.gmra.mxu0 %v3045
  %v3171 = vpop.f32.mrf.mxu0
  %v3172 = vadd.f32 0.0, %v3171
  %v3173 = vpop.f32.mrf.mxu0
  %v3174 = vadd.f32 0.0, %v3173
  %3175 = vmatmul.bf16.gmra.mxu0 %v3047
  %v3176 = vpop.f32.mrf.mxu0
  %v3177 = vadd.f32 0.0, %v3176
  %v3178 = vpop.f32.mrf.mxu0
  %v3179 = vadd.f32 0.0, %v3178
  %3180 = vmatmul.bf16.gmra.mxu0 %v3049
  %v3181 = vpop.f32.mrf.mxu0
  %v3182 = vadd.f32 0.0, %v3181
  %v3183 = vpop.f32.mrf.mxu0
  %v3184 = vadd.f32 0.0, %v3183
  %3185 = vdwg.mxu0
  %3186 = vmatpush.bf16.msra.mxu0 0
  %3187 = vmatpush.bf16.msra.mxu0 0
  %3188 = vmatpush.bf16.msra.mxu0 0
  %3189 = vmatpush.bf16.msra.mxu0 0
  %3190 = vmatpush.bf16.msra.mxu0 %v3116
  %3191 = vmatpush.bf16.msra.mxu0 %v3115
  %3192 = vmatpush.bf16.msra.mxu0 %v3114
  %3193 = vmatpush.bf16.msra.mxu0 %v3113
  %3194 = vmatmul.bf16.gmra.mxu0 %v3130
  %v3195 = vpop.f32.mrf.mxu0
  %v3196 = vadd.f32 %v3157, %v3195
  %v3197 = vpop.f32.mrf.mxu0
  %v3198 = vadd.f32 %v3159, %v3197
  %3199 = vmatmul.bf16.gmra.mxu0 %v3133
  %v3200 = vpop.f32.mrf.mxu0
  %v3201 = vadd.f32 %v3162, %v3200
  %v3202 = vpop.f32.mrf.mxu0
  %v3203 = vadd.f32 %v3164, %v3202
  %3204 = vmatmul.bf16.gmra.mxu0 %v3136
  %v3205 = vpop.f32.mrf.mxu0
  %v3206 = vadd.f32 %v3167, %v3205
  %v3207 = vpop.f32.mrf.mxu0
  %v3208 = vadd.f32 %v3169, %v3207
  %3209 = vmatmul.bf16.gmra.mxu0 %v3139
  %v3210 = vpop.f32.mrf.mxu0
  %v3211 = vadd.f32 %v3172, %v3210
  %v3212 = vpop.f32.mrf.mxu0
  %v3213 = vadd.f32 %v3174, %v3212
  %3214 = vmatmul.bf16.gmra.mxu0 %v3142
  %v3215 = vpop.f32.mrf.mxu0
  %v3216 = vadd.f32 %v3177, %v3215
  %v3217 = vpop.f32.mrf.mxu0
  %v3218 = vadd.f32 %v3179, %v3217
  %3219 = vmatmul.bf16.gmra.mxu0 %v3145
  %v3220 = vpop.f32.mrf.mxu0
  %v3221 = vadd.f32 %v3182, %v3220
  %v3222 = vpop.f32.mrf.mxu0
  %v3223 = vadd.f32 %v3184, %v3222
  %3224 = vdwg.mxu0
  %v3225 = vld [vmem:[%s3 + $0x6] sm:$0x1]
  %v3226 = vperm.slane %v3225, 0
  %v3227 = vadd.f32 %v3196, %v3226
  %v3228 = vadd.f32 %v3198, %v3226
  %v3229 = vadd.f32 %v3201, %v3226
  %v3230 = vadd.f32 %v3203, %v3226
  %v3231 = vadd.f32 %v3206, %v3226
  %v3232 = vadd.f32 %v3208, %v3226
  %v3233 = vadd.f32 %v3211, %v3226
  %v3234 = vadd.f32 %v3213, %v3226
  %v3235 = vadd.f32 %v3216, %v3226
  %v3236 = vadd.f32 %v3218, %v3226
  %v3237 = vadd.f32 %v3221, %v3226
  %v3238 = vadd.f32 %v3223, %v3226
  %v3239 = vmax.f32 %v3227, 0.0
  %v3240 = vmax.f32 %v3228, 0.0
  %v3241 = vmax.f32 %v3229, 0.0
  %v3242 = vmax.f32 %v3230, 0.0
  %v3243 = vmax.f32 %v3231, 0.0
  %v3244 = vmax.f32 %v3232, 0.0
  %v3245 = vmax.f32 %v3233, 0.0
  %v3246 = vmax.f32 %v3234, 0.0
  %v3247 = vmax.f32 %v3235, 0.0
  %v3248 = vmax.f32 %v3236, 0.0
  %v3249 = vmax.f32 %v3237, 0.0
  %v3250 = vmax.f32 %v3238, 0.0
  %v3251 = vpack.c.bf16 %v3239, %v3239
  %v3252 = vpack.c.bf16 %v3240, %v3240
  %v3253 = vpack.c.bf16 %v3241, %v3241
  %v3254 = vpack.c.bf16 %v3242, %v3242
  %v3255 = vpack.c.bf16 %v3243, %v3243
  %v3256 = vpack.c.bf16 %v3244, %v3244
  %v3257 = vpack.c.bf16 %v3245, %v3245
  %v3258 = vpack.c.bf16 %v3246, %v3246
  %v3259 = vpack.c.bf16 %v3247, %v3247
  %v3260 = vpack.c.bf16 %v3248, %v3248
  %v3261 = vpack.c.bf16 %v3249, %v3249
  %v3262 = vpack.c.bf16 %v3250, %v3250
  %v3271 = vunpack.c.l.b16 %v3252
  %v3272 = vunpack.c.l.b16 %v3253
  %v3273 = vunpack.c.l.b16 %v3254
  %v3274 = vunpack.c.l.b16 %v3255
  %v3275 = vunpack.c.l.b16 %v3258
  %v3276 = vunpack.c.l.b16 %v3259
  %v3277 = vunpack.c.l.b16 %v3260
  %v3278 = vunpack.c.l.b16 %v3261
  %v3279 = vpack.c.b16 %v3271, %v3271
  %v3280 = vpack.c.b16 %v3272, %v3272
  %v3281 = vpack.c.b16 %v3273, %v3273
  %v3282 = vpack.c.b16 %v3274, %v3274
  %v3283 = vpack.c.b16 %v3275, %v3275
  %v3284 = vpack.c.b16 %v3276, %v3276
  %v3285 = vpack.c.b16 %v3277, %v3277
  %v3286 = vpack.c.b16 %v3278, %v3278
  %3287 = vrot.lane.b32.xlu0 %v3279, 16
  %v3288 = vpop.permute.xlu0 %3287
  %3289 = vrot.lane.b32.xlu0 %v3280, 16
  %v3290 = vpop.permute.xlu0 %3289
  %3291 = vrot.lane.b32.xlu0 %v3281, 16
  %v3292 = vpop.permute.xlu0 %3291
  %3293 = vrot.lane.b32.xlu0 %v3282, 16
  %v3294 = vpop.permute.xlu0 %3293
  %3295 = vrot.lane.b32.xlu0 %v3283, 16
  %v3296 = vpop.permute.xlu0 %3295
  %3297 = vrot.lane.b32.xlu0 %v3284, 16
  %v3298 = vpop.permute.xlu0 %3297
  %3299 = vrot.lane.b32.xlu0 %v3285, 16
  %v3300 = vpop.permute.xlu0 %3299
  %3301 = vrot.lane.b32.xlu0 %v3286, 16
  %v3302 = vpop.permute.xlu0 %3301
  %v3305 = vunpack.c.l.b16 %v3256
  %v3306 = vunpack.c.l.b16 %v3262
  %v3307 = vpack.c.b16 %v3305, %v3305
  %v3308 = vpack.c.b16 %v3306, %v3306
  %3309 = vrot.lane.b32.xlu0 %v3280, 32
  %v3310 = vpop.permute.xlu0 %3309
  %3311 = vrot.lane.b32.xlu0 %v3281, 32
  %v3312 = vpop.permute.xlu0 %3311
  %3313 = vrot.lane.b32.xlu0 %v3282, 32
  %v3314 = vpop.permute.xlu0 %3313
  %3315 = vrot.lane.b32.xlu0 %v3307, 32
  %v3316 = vpop.permute.xlu0 %3315
  %3317 = vrot.lane.b32.xlu0 %v3284, 32
  %v3318 = vpop.permute.xlu0 %3317
  %3319 = vrot.lane.b32.xlu0 %v3285, 32
  %v3320 = vpop.permute.xlu0 %3319
  %3321 = vrot.lane.b32.xlu0 %v3286, 32
  %v3322 = vpop.permute.xlu0 %3321
  %3323 = vrot.lane.b32.xlu0 %v3308, 32
  %v3324 = vpop.permute.xlu0 %3323
  %v3327 = vsel %vm1675, %v3251, %v3288
  %v3330 = vsel %vm1675, %v3252, %v3290
  %v3333 = vsel %vm1675, %v3253, %v3292
  %v3336 = vsel %vm1675, %v3254, %v3294
  %v3339 = vsel %vm1675, %v3257, %v3296
  %v3342 = vsel %vm1675, %v3258, %v3298
  %v3345 = vsel %vm1675, %v3259, %v3300
  %v3348 = vsel %vm1675, %v3260, %v3302
  %v3350 = vsel %vm1724, %v3327, %v3310
  %v3352 = vsel %vm1724, %v3330, %v3312
  %v3354 = vsel %vm1724, %v3333, %v3314
  %v3356 = vsel %vm1724, %v3336, %v3316
  %v3358 = vsel %vm1724, %v3339, %v3318
  %v3360 = vsel %vm1724, %v3342, %v3320
  %v3362 = vsel %vm1724, %v3345, %v3322
  %v3364 = vsel %vm1724, %v3348, %v3324
  %v3365 = vld [vmem:[%s1 + $0x80] sm:$0xf]
  %v3366 = vld [vmem:[%s1 + $0x84] sm:$0xf]
  %v3367 = vld [vmem:[%s1 + $0x88] sm:$0xf]
  %v3368 = vld [vmem:[%s1 + $0x8c] sm:$0xf]
  %v3369 = vld [vmem:[%s1 + $0x90] sm:$0xf]
  %v3370 = vld [vmem:[%s1 + $0x94] sm:$0xf]
  %v3379 = vunpack.c.l.b16 %v3350
  %v3380 = vunpack.c.l.b16 %v3352
  %v3381 = vunpack.c.l.b16 %v3354
  %v3382 = vunpack.c.l.b16 %v3356
  %v3383 = vunpack.c.l.b16 %v3358
  %v3384 = vunpack.c.l.b16 %v3360
  %v3385 = vunpack.c.l.b16 %v3362
  %v3386 = vunpack.c.l.b16 %v3364
  %v3387 = vpack.c.b16 %v3380, %v3379
  %v3388 = vpack.c.b16 %v3382, %v3381
  %v3389 = vpack.c.b16 %v3384, %v3383
  %v3390 = vpack.c.b16 %v3386, %v3385
  %v3397 = vunpack.c.l.b16 %v3365
  %v3398 = vunpack.c.l.b16 %v3366
  %v3399 = vunpack.c.l.b16 %v3367
  %v3400 = vunpack.c.l.b16 %v3368
  %v3401 = vunpack.c.l.b16 %v3369
  %v3402 = vunpack.c.l.b16 %v3370
  %v3403 = vpack.c.b16 %v3398, %v3397
  %v3404 = vpack.c.b16 %v3400, %v3399
  %v3405 = vpack.c.b16 %v3402, %v3401
  %v3410 = vsel %vm1821, %v3387, 0
  %v3413 = vsel %vm1821, %v3388, 0
  %v3416 = vsel %vm1821, %v3389, 0
  %v3419 = vsel %vm1821, %v3390, 0
  %3421 = vmatpush.bf16.msra.mxu0 0
  %3422 = vmatpush.bf16.msra.mxu0 0
  %3423 = vmatpush.bf16.msra.mxu0 0
  %3424 = vmatpush.bf16.msra.mxu0 0
  %3425 = vmatpush.bf16.msra.mxu0 0
  %3426 = vmatpush.bf16.msra.mxu0 %v3405
  %3427 = vmatpush.bf16.msra.mxu0 %v3404
  %3428 = vmatpush.bf16.msra.mxu0 %v3403
  %3429 = vmatmul.bf16.gmra.mxu0 %v3410
  %v3430 = vpop.f32.mrf.mxu0
  %v3431 = vadd.f32 0.0, %v3430
  %v3432 = vpop.f32.mrf.mxu0
  %v3433 = vadd.f32 0.0, %v3432
  %3434 = vmatmul.bf16.gmra.mxu0 %v3413
  %v3435 = vpop.f32.mrf.mxu0
  %v3436 = vadd.f32 0.0, %v3435
  %v3437 = vpop.f32.mrf.mxu0
  %v3438 = vadd.f32 0.0, %v3437
  %3439 = vmatmul.bf16.gmra.mxu0 %v3416
  %v3440 = vpop.f32.mrf.mxu0
  %v3441 = vadd.f32 0.0, %v3440
  %v3442 = vpop.f32.mrf.mxu0
  %v3443 = vadd.f32 0.0, %v3442
  %3444 = vmatmul.bf16.gmra.mxu0 %v3419
  %v3445 = vpop.f32.mrf.mxu0
  %v3446 = vadd.f32 0.0, %v3445
  %v3447 = vpop.f32.mrf.mxu0
  %v3448 = vadd.f32 0.0, %v3447
  %3449 = vdwg.mxu0
  %v3450 = vld [vmem:[%s3 + $0x3] sm:$0x1]
  %v3451 = vperm.slane %v3450, 0
  %v3452 = vadd.f32 %v3431, %v3451
  %v3453 = vadd.f32 %v3433, %v3451
  %v3454 = vadd.f32 %v3436, %v3451
  %v3455 = vadd.f32 %v3438, %v3451
  %v3456 = vadd.f32 %v3441, %v3451
  %v3457 = vadd.f32 %v3443, %v3451
  %v3458 = vadd.f32 %v3446, %v3451
  %v3459 = vadd.f32 %v3448, %v3451
  %v3460 = vsub.f32 0.0, %v3452
  %v3461 = vsub.f32 0.0, %v3453
  %v3462 = vsub.f32 0.0, %v3454
  %v3463 = vsub.f32 0.0, %v3455
  %v3464 = vsub.f32 0.0, %v3456
  %v3465 = vsub.f32 0.0, %v3457
  %v3466 = vsub.f32 0.0, %v3458
  %v3467 = vsub.f32 0.0, %v3459
  %v3468 = vmul.f32 %v3460, 1.442695
  %v3469 = vpow.pop %v3468
  %v3470 = vmul.f32 %v3461, 1.442695
  %v3471 = vpow.pop %v3470
  %v3472 = vmul.f32 %v3462, 1.442695
  %v3473 = vpow.pop %v3472
  %v3474 = vmul.f32 %v3463, 1.442695
  %v3475 = vpow.pop %v3474
  %v3476 = vmul.f32 %v3464, 1.442695
  %v3477 = vpow.pop %v3476
  %v3478 = vmul.f32 %v3465, 1.442695
  %v3479 = vpow.pop %v3478
  %v3480 = vmul.f32 %v3466, 1.442695
  %v3481 = vpow.pop %v3480
  %v3482 = vmul.f32 %v3467, 1.442695
  %v3483 = vpow.pop %v3482
  %v3484 = vadd.f32 %v3469, 1.0
  %v3485 = vadd.f32 %v3471, 1.0
  %v3486 = vadd.f32 %v3473, 1.0
  %v3487 = vadd.f32 %v3475, 1.0
  %v3488 = vadd.f32 %v3477, 1.0
  %v3489 = vadd.f32 %v3479, 1.0
  %v3490 = vadd.f32 %v3481, 1.0
  %v3491 = vadd.f32 %v3483, 1.0
  %v3492 = vrcp.pop %v3484
  %v3493 = vrcp.pop %v3485
  %v3494 = vrcp.pop %v3486
  %v3495 = vrcp.pop %v3487
  %v3496 = vrcp.pop %v3488
  %v3497 = vrcp.pop %v3489
  %v3498 = vrcp.pop %v3490
  %v3499 = vrcp.pop %v3491
  %3508 = vrot.lane.b32.xlu0 %v3492, 64
  %v3509 = vpop.permute.xlu0 %3508
  %3510 = vrot.lane.b32.xlu0 %v3493, 64
  %v3511 = vpop.permute.xlu0 %3510
  %3512 = vrot.lane.b32.xlu0 %v3494, 64
  %v3513 = vpop.permute.xlu0 %3512
  %3514 = vrot.lane.b32.xlu0 %v3495, 64
  %v3515 = vpop.permute.xlu0 %3514
  %3516 = vrot.lane.b32.xlu0 %v3496, 64
  %v3517 = vpop.permute.xlu0 %3516
  %3518 = vrot.lane.b32.xlu0 %v3497, 64
  %v3519 = vpop.permute.xlu0 %3518
  %3520 = vrot.lane.b32.xlu0 %v3498, 64
  %v3521 = vpop.permute.xlu0 %3520
  %3522 = vrot.lane.b32.xlu0 %v3499, 64
  %v3523 = vpop.permute.xlu0 %3522
  %v3532 = vmul.f32 %v3452, %v3509
  %v3533 = vmul.f32 %v3453, %v3511
  %v3534 = vmul.f32 %v3454, %v3513
  %v3535 = vmul.f32 %v3455, %v3515
  %v3536 = vmul.f32 %v3456, %v3517
  %v3537 = vmul.f32 %v3457, %v3519
  %v3538 = vmul.f32 %v3458, %v3521
  %v3539 = vmul.f32 %v3459, %v3523
  %v3540 = vsel %vm1080, %v3532, 0.0
  %v3541 = vsel %vm1080, %v3533, 0.0
  %v3542 = vadd.f32 %v3540, %v3541
  %v3543 = vsel %vm1080, %v3534, 0.0
  %v3544 = vadd.f32 %v3542, %v3543
  %v3545 = vsel %vm1080, %v3535, 0.0
  %v3546 = vadd.f32 %v3544, %v3545
  %v3547 = vsel %vm1080, %v3536, 0.0
  %v3548 = vadd.f32 %v3546, %v3547
  %v3549 = vsel %vm1080, %v3537, 0.0
  %v3550 = vadd.f32 %v3548, %v3549
  %v3551 = vsel %vm1080, %v3538, 0.0
  %v3552 = vadd.f32 %v3550, %v3551
  %v3553 = vsel %vm1080, %v3539, 0.0
  %v3554 = vadd.f32 %v3552, %v3553
  %3555 = vadd.xlane.f32.xlu0 %v3554
  %v3556 = vpop.xlane.xlu0 %3555
  %v3557 = vmul.f32 %v3532, %v3532
  %v3558 = vmul.f32 %v3533, %v3533
  %v3559 = vmul.f32 %v3534, %v3534
  %v3560 = vmul.f32 %v3535, %v3535
  %v3561 = vmul.f32 %v3536, %v3536
  %v3562 = vmul.f32 %v3537, %v3537
  %v3563 = vmul.f32 %v3538, %v3538
  %v3564 = vmul.f32 %v3539, %v3539
  %v3565 = vsel %vm1080, %v3557, 0.0
  %v3566 = vsel %vm1080, %v3558, 0.0
  %v3567 = vadd.f32 %v3565, %v3566
  %v3568 = vsel %vm1080, %v3559, 0.0
  %v3569 = vadd.f32 %v3567, %v3568
  %v3570 = vsel %vm1080, %v3560, 0.0
  %v3571 = vadd.f32 %v3569, %v3570
  %v3572 = vsel %vm1080, %v3561, 0.0
  %v3573 = vadd.f32 %v3571, %v3572
  %v3574 = vsel %vm1080, %v3562, 0.0
  %v3575 = vadd.f32 %v3573, %v3574
  %v3576 = vsel %vm1080, %v3563, 0.0
  %v3577 = vadd.f32 %v3575, %v3576
  %v3578 = vsel %vm1080, %v3564, 0.0
  %v3579 = vadd.f32 %v3577, %v3578
  %3580 = vadd.xlane.f32.xlu0 %v3579
  %v3581 = vpop.xlane.xlu0 %3580
  %v3582 = vmul.f32 %v3556, 0.001953125
  %v3583 = vmul.f32 %v3581, 0.001953125
  %v3584 = vmul.f32 %v3582, %v3582
  %v3585 = vsub.f32 %v3583, %v3584
  %v3586 = vadd.f32 %v3585, 1e-05
  %v3587 = vrsqrt.pop %v3586
  %v3588 = vmul.f32 %v3587, %v3586
  %v3589 = vmul.f32 %v3588, %v3587
  %v3590 = vmul.f32 0.5, %v3589
  %v3591 = vsub.f32 1.5, %v3590
  %v3592 = vmul.f32 %v3587, %v3591
  %vm3593 = vweird.f32 %v3586
  %vm3594 = vweird.f32 %v3587
  %vm3595 = vmor %vm3593, %vm3594
  %v3596 = vsel %vm3595, %v3587, %v3592
  %v3597 = vmul.f32 %v21, %v3596
  %3599 = vset.pattern.permute.xlu0 2
  %3600 = vperm.xlu0 %3599, %v3597
  %v3601 = vpop.permute.xlu0 %3600
  %v3603 = vmul.f32 %v3532, %v3601
  %v3604 = vmul.f32 %v3533, %v3601
  %v3605 = vmul.f32 %v3534, %v3601
  %v3606 = vmul.f32 %v3535, %v3601
  %v3607 = vmul.f32 %v3536, %v3601
  %v3608 = vmul.f32 %v3537, %v3601
  %v3609 = vmul.f32 %v3538, %v3601
  %v3610 = vmul.f32 %v3539, %v3601
  %v3611 = vmul.f32 %v3582, %v3597
  %3613 = vrot.lane.b32.xlu0 %v3611, 1
  %v3614 = vpop.permute.xlu0 %3613
  %v3616 = vsub.f32 %v21, %v3614
  %3618 = vset.pattern.permute.xlu0 3
  %3619 = vperm.xlu0 %3618, %v3616
  %v3620 = vpop.permute.xlu0 %3619
  %v3622 = vadd.f32 %v3603, %v3620
  %v3623 = vadd.f32 %v3604, %v3620
  %v3624 = vadd.f32 %v3605, %v3620
  %v3625 = vadd.f32 %v3606, %v3620
  %v3626 = vadd.f32 %v3607, %v3620
  %v3627 = vadd.f32 %v3608, %v3620
  %v3628 = vadd.f32 %v3609, %v3620
  %v3629 = vadd.f32 %v3610, %v3620
  %v3630 = vpack.c.bf16 %v3622, %v3622
  %v3631 = vpack.c.bf16 %v3623, %v3623
  %v3632 = vpack.c.bf16 %v3624, %v3624
  %v3633 = vpack.c.bf16 %v3625, %v3625
  %v3634 = vpack.c.bf16 %v3626, %v3626
  %v3635 = vpack.c.bf16 %v3627, %v3627
  %v3636 = vpack.c.bf16 %v3628, %v3628
  %v3637 = vpack.c.bf16 %v3629, %v3629
  %v3642 = vunpack.c.l.b16 %v3631
  %v3643 = vunpack.c.l.b16 %v3632
  %v3644 = vunpack.c.l.b16 %v3635
  %v3645 = vunpack.c.l.b16 %v3636
  %v3646 = vpack.c.b16 %v3642, %v3642
  %v3647 = vpack.c.b16 %v3643, %v3643
  %v3648 = vpack.c.b16 %v3644, %v3644
  %v3649 = vpack.c.b16 %v3645, %v3645
  %3650 = vrot.lane.b32.xlu0 %v3646, 64
  %v3651 = vpop.permute.xlu0 %3650
  %3652 = vrot.lane.b32.xlu0 %v3647, 64
  %v3653 = vpop.permute.xlu0 %3652
  %3654 = vrot.lane.b32.xlu0 %v3648, 64
  %v3655 = vpop.permute.xlu0 %3654
  %3656 = vrot.lane.b32.xlu0 %v3649, 64
  %v3657 = vpop.permute.xlu0 %3656
  %v3660 = vsel %vm1080, %v3630, %v3651
  %v3663 = vsel %vm1080, %v3631, %v3653
  %v3666 = vsel %vm1080, %v3634, %v3655
  %v3669 = vsel %vm1080, %v3635, %v3657
  %v3676 = vunpack.c.l.b16 %v3660
  %v3677 = vunpack.c.l.b16 %v3663
  %v3678 = vunpack.c.l.b16 %v3633
  %v3679 = vunpack.c.l.b16 %v3666
  %v3680 = vunpack.c.l.b16 %v3669
  %v3681 = vunpack.c.l.b16 %v3637
  %v3682 = vld [vmem:[%s1 + $0x98] sm:$0xf]
  %v3683 = vld [vmem:[%s1 + $0x9c] sm:$0xf]
  %v3684 = vld [vmem:[%s1 + $0xa0] sm:$0xf]
  %v3685 = vld [vmem:[%s1 + $0xa4] sm:$0xf]
  %v3686 = vld [vmem:[%s1 + $0xa8] sm:$0xf]
  %v3687 = vld [vmem:[%s1 + $0xac] sm:$0xf]
  %v3688 = vld [vmem:[%s1 + $0xb0] sm:$0xf]
  %v3689 = vld [vmem:[%s1 + $0xb4] sm:$0xf]
  %v3690 = vld [vmem:[%s1 + $0xb8] sm:$0xf]
  %v3691 = vld [vmem:[%s1 + $0xbc] sm:$0xf]
  %v3692 = vld [vmem:[%s1 + $0xc0] sm:$0xf]
  %v3693 = vld [vmem:[%s1 + $0xc4] sm:$0xf]
  %v3694 = vld [vmem:[%s1 + $0xc8] sm:$0xf]
  %v3695 = vld [vmem:[%s1 + $0xcc] sm:$0xf]
  %v3696 = vld [vmem:[%s1 + $0xd0] sm:$0xf]
  %v3697 = vld [vmem:[%s1 + $0xd4] sm:$0xf]
  %v3698 = vld [vmem:[%s1 + $0xd8] sm:$0xf]
  %v3699 = vld [vmem:[%s1 + $0xdc] sm:$0xf]
  %v3700 = vld [vmem:[%s1 + $0xe0] sm:$0xf]
  %v3701 = vld [vmem:[%s1 + $0xe4] sm:$0xf]
  %v3702 = vld [vmem:[%s1 + $0xe8] sm:$0xf]
  %v3703 = vld [vmem:[%s1 + $0xec] sm:$0xf]
  %v3704 = vld [vmem:[%s1 + $0xf0] sm:$0xf]
  %v3705 = vld [vmem:[%s1 + $0xf4] sm:$0xf]
  %v3706 = vpack.c.b16 %v3677, %v3676
  %v3707 = vpack.c.b16 %v3678, %v3643
  %v3708 = vpack.c.b16 %v3680, %v3679
  %v3709 = vpack.c.b16 %v3681, %v3645
  %v3736 = vunpack.c.l.b16 %v3682
  %v3737 = vunpack.c.l.b16 %v3683
  %v3738 = vunpack.c.l.b16 %v3684
  %v3739 = vunpack.c.l.b16 %v3685
  %v3740 = vunpack.c.l.b16 %v3686
  %v3741 = vunpack.c.l.b16 %v3687
  %v3742 = vunpack.c.l.b16 %v3688
  %v3743 = vunpack.c.l.b16 %v3689
  %v3744 = vunpack.c.l.b16 %v3690
  %v3745 = vunpack.c.l.b16 %v3691
  %v3746 = vunpack.c.l.b16 %v3692
  %v3747 = vunpack.c.l.b16 %v3693
  %v3748 = vunpack.c.l.b16 %v3694
  %v3749 = vunpack.c.l.b16 %v3695
  %v3750 = vunpack.c.l.b16 %v3696
  %v3751 = vunpack.c.l.b16 %v3697
  %v3752 = vunpack.c.l.b16 %v3698
  %v3753 = vunpack.c.l.b16 %v3699
  %v3754 = vunpack.c.l.b16 %v3700
  %v3755 = vunpack.c.l.b16 %v3701
  %v3756 = vunpack.c.l.b16 %v3702
  %v3757 = vunpack.c.l.b16 %v3703
  %v3758 = vunpack.c.l.b16 %v3704
  %v3759 = vunpack.c.l.b16 %v3705
  %v3760 = vpack.c.b16 %v3737, %v3736
  %v3761 = vpack.c.b16 %v3739, %v3738
  %v3762 = vpack.c.b16 %v3741, %v3740
  %v3763 = vpack.c.b16 %v3743, %v3742
  %v3764 = vpack.c.b16 %v3745, %v3744
  %v3765 = vpack.c.b16 %v3747, %v3746
  %v3766 = vpack.c.b16 %v3749, %v3748
  %v3767 = vpack.c.b16 %v3751, %v3750
  %v3768 = vpack.c.b16 %v3753, %v3752
  %v3769 = vpack.c.b16 %v3755, %v3754
  %v3770 = vpack.c.b16 %v3757, %v3756
  %v3771 = vpack.c.b16 %v3759, %v3758
  %v3785 = vsel %vm1080, %v3707, 0
  %v3788 = vsel %vm1080, %v3709, 0
  %3790 = vmatpush.bf16.msra.mxu0 %v3767
  %3791 = vmatpush.bf16.msra.mxu0 %v3766
  %3792 = vmatpush.bf16.msra.mxu0 %v3765
  %3793 = vmatpush.bf16.msra.mxu0 %v3764
  %3794 = vmatpush.bf16.msra.mxu0 %v3763
  %3795 = vmatpush.bf16.msra.mxu0 %v3762
  %3796 = vmatpush.bf16.msra.mxu0 %v3761
  %3797 = vmatpush.bf16.msra.mxu0 %v3760
  %3798 = vmatmul.bf16.gmra.mxu0 %v3706
  %v3799 = vpop.f32.mrf.mxu0
  %v3800 = vadd.f32 0.0, %v3799
  %v3801 = vpop.f32.mrf.mxu0
  %v3802 = vadd.f32 0.0, %v3801
  %3803 = vmatmul.bf16.gmra.mxu0 %v3708
  %v3804 = vpop.f32.mrf.mxu0
  %v3805 = vadd.f32 0.0, %v3804
  %v3806 = vpop.f32.mrf.mxu0
  %v3807 = vadd.f32 0.0, %v3806
  %3808 = vdwg.mxu0
  %3809 = vmatpush.bf16.msra.mxu0 0
  %3810 = vmatpush.bf16.msra.mxu0 0
  %3811 = vmatpush.bf16.msra.mxu0 0
  %3812 = vmatpush.bf16.msra.mxu0 0
  %3813 = vmatpush.bf16.msra.mxu0 %v3771
  %3814 = vmatpush.bf16.msra.mxu0 %v3770
  %3815 = vmatpush.bf16.msra.mxu0 %v3769
  %3816 = vmatpush.bf16.msra.mxu0 %v3768
  %3817 = vmatmul.bf16.gmra.mxu0 %v3785
  %v3818 = vpop.f32.mrf.mxu0
  %v3819 = vadd.f32 %v3800, %v3818
  %v3820 = vpop.f32.mrf.mxu0
  %v3821 = vadd.f32 %v3802, %v3820
  %3822 = vmatmul.bf16.gmra.mxu0 %v3788
  %v3823 = vpop.f32.mrf.mxu0
  %v3824 = vadd.f32 %v3805, %v3823
  %v3825 = vpop.f32.mrf.mxu0
  %v3826 = vadd.f32 %v3807, %v3825
  %3827 = vdwg.mxu0
  %v3828 = vld [vmem:[%s3 + $0x4] sm:$0x1]
  %v3829 = vperm.slane %v3828, 0
  %v3830 = vadd.f32 %v3819, %v3829
  %v3831 = vadd.f32 %v3821, %v3829
  %v3832 = vadd.f32 %v3824, %v3829
  %v3833 = vadd.f32 %v3826, %v3829
  %v3834 = vsub.f32 0.0, %v3830
  %v3835 = vsub.f32 0.0, %v3831
  %v3836 = vsub.f32 0.0, %v3832
  %v3837 = vsub.f32 0.0, %v3833
  %v3838 = vmul.f32 %v3834, 1.442695
  %v3839 = vpow.pop %v3838
  %v3840 = vmul.f32 %v3835, 1.442695
  %v3841 = vpow.pop %v3840
  %v3842 = vmul.f32 %v3836, 1.442695
  %v3843 = vpow.pop %v3842
  %v3844 = vmul.f32 %v3837, 1.442695
  %v3845 = vpow.pop %v3844
  %v3846 = vadd.f32 %v3839, 1.0
  %v3847 = vadd.f32 %v3841, 1.0
  %v3848 = vadd.f32 %v3843, 1.0
  %v3849 = vadd.f32 %v3845, 1.0
  %v3850 = vrcp.pop %v3846
  %v3851 = vrcp.pop %v3847
  %v3852 = vrcp.pop %v3848
  %v3853 = vrcp.pop %v3849
  %3858 = vrot.lane.b32.xlu0 %v3850, 64
  %v3859 = vpop.permute.xlu0 %3858
  %3860 = vrot.lane.b32.xlu0 %v3851, 64
  %v3861 = vpop.permute.xlu0 %3860
  %3862 = vrot.lane.b32.xlu0 %v3852, 64
  %v3863 = vpop.permute.xlu0 %3862
  %3864 = vrot.lane.b32.xlu0 %v3853, 64
  %v3865 = vpop.permute.xlu0 %3864
  %v3870 = vmul.f32 %v3830, %v3859
  %v3871 = vmul.f32 %v3831, %v3861
  %v3872 = vmul.f32 %v3832, %v3863
  %v3873 = vmul.f32 %v3833, %v3865
  %v3874 = vpack.c.bf16 %v3872, %v3870
  %v3875 = vld [vmem:[%s1 + $0xf8] sm:$0xf]
  %v3876 = vld [vmem:[%s1 + $0xfc] sm:$0xf]
  %v3877 = vld [vmem:[%s1 + $0x100] sm:$0xf]
  %v3878 = vld [vmem:[%s1 + $0x104] sm:$0xf]
  %v3879 = vld [vmem:[%s1 + $0x108] sm:$0xf]
  %v3880 = vld [vmem:[%s1 + $0x10c] sm:$0xf]
  %v3881 = vld [vmem:[%s1 + $0x110] sm:$0xf]
  %v3882 = vld [vmem:[%s1 + $0x114] sm:$0xf]
  %v3883 = vpack.c.bf16 %v3873, %v3871
  %v3884 = vld [vmem:[%s1 + $0x118] sm:$0xf]
  %v3885 = vld [vmem:[%s1 + $0x11c] sm:$0xf]
  %v3886 = vld [vmem:[%s1 + $0x120] sm:$0xf]
  %v3887 = vld [vmem:[%s1 + $0x124] sm:$0xf]
  %v3888 = vld [vmem:[%s1 + $0x128] sm:$0xf]
  %v3889 = vld [vmem:[%s1 + $0x12c] sm:$0xf]
  %v3890 = vld [vmem:[%s1 + $0x130] sm:$0xf]
  %v3891 = vld [vmem:[%s1 + $0x134] sm:$0xf]
  %v3900 = vunpack.c.l.b16 %v3884
  %v3901 = vunpack.c.l.b16 %v3885
  %v3902 = vunpack.c.l.b16 %v3886
  %v3903 = vunpack.c.l.b16 %v3887
  %v3904 = vunpack.c.l.b16 %v3888
  %v3905 = vunpack.c.l.b16 %v3889
  %v3906 = vunpack.c.l.b16 %v3890
  %v3907 = vunpack.c.l.b16 %v3891
  %v3908 = vpack.c.b16 %v3901, %v3900
  %v3909 = vpack.c.b16 %v3903, %v3902
  %v3910 = vpack.c.b16 %v3905, %v3904
  %v3911 = vpack.c.b16 %v3907, %v3906
  %v3917 = vsel %vm1080, %v3883, 0
  %3919 = vmatpush.bf16.msra.mxu0 0
  %3920 = vmatpush.bf16.msra.mxu0 0
  %3921 = vmatpush.bf16.msra.mxu0 0
  %3922 = vmatpush.bf16.msra.mxu0 0
  %3923 = vmatpush.bf16.msra.mxu0 %v3911
  %3924 = vmatpush.bf16.msra.mxu0 %v3910
  %3925 = vmatpush.bf16.msra.mxu0 %v3909
  %3926 = vmatpush.bf16.msra.mxu0 %v3908
  %3927 = vmatmul.bf16.gmra.mxu0 %v3917
  %v3928 = vpop.f32.mrf.mxu0
  %v3929 = vadd.f32 0.0, %v3928
  %v3930 = vpop.f32.mrf.mxu0
  %v3931 = vadd.f32 0.0, %v3930
  %3932 = vdwg.mxu0
  %v3941 = vunpack.c.l.b16 %v3875
  %v3942 = vunpack.c.l.b16 %v3876
  %v3943 = vunpack.c.l.b16 %v3877
  %v3944 = vunpack.c.l.b16 %v3878
  %v3945 = vunpack.c.l.b16 %v3879
  %v3946 = vunpack.c.l.b16 %v3880
  %v3947 = vunpack.c.l.b16 %v3881
  %v3948 = vunpack.c.l.b16 %v3882
  %v3949 = vpack.c.b16 %v3942, %v3941
  %v3950 = vpack.c.b16 %v3944, %v3943
  %v3951 = vpack.c.b16 %v3946, %v3945
  %v3952 = vpack.c.b16 %v3948, %v3947
  %v3958 = vsel %vm1080, %v3874, 0
  %3960 = vmatpush.bf16.msra.mxu0 0
  %3961 = vmatpush.bf16.msra.mxu0 0
  %3962 = vmatpush.bf16.msra.mxu0 0
  %3963 = vmatpush.bf16.msra.mxu0 0
  %3964 = vmatpush.bf16.msra.mxu0 %v3952
  %3965 = vmatpush.bf16.msra.mxu0 %v3951
  %3966 = vmatpush.bf16.msra.mxu0 %v3950
  %3967 = vmatpush.bf16.msra.mxu0 %v3949
  %3968 = vmatmul.bf16.gmra.mxu0 %v3958
  %v3969 = vpop.f32.mrf.mxu0
  %v3970 = vadd.f32 %v3929, %v3969
  %v3971 = vpop.f32.mrf.mxu0
  %v3972 = vadd.f32 %v3931, %v3971
  %3973 = vdwg.mxu0
  %v3974 = vld [vmem:[%s3 + $0x7] sm:$0x1]
  %v3975 = vperm.slane %v3974, 0
  %v3976 = vadd.f32 %v3970, %v3975
  %v3977 = vadd.f32 %v3972, %v3975
  %vm3978 = vcmask 31744
  %3979 = vst.msk [vmem:[%s5] sm:$0xff] %vm3978, %v3976
  %3980 = vst.msk [vmem:[%s5 + $0x8] sm:$0xff] %vm3978, %v3977
  // Predicated region
  $region22: #{forward.1} parent=0 // pred_check
    _
  $region23: #{forward.1} parent=0 // pred_check_branch
    %3982 = sbr.rel (0) target = $region25
  $region24: #{forward.1} parent=0 // pred_region
    _
  $region25: #{forward.1} parent=0 // pred_fallthru
    _
  // Predicated region
  $region26: #{forward.1} parent=0 // pred_check
    _
  $region27: #{forward.1} parent=0 // pred_check_branch
    %3984 = sbr.rel (0) target = $region29
  $region28: #{forward.1} parent=0 // pred_region
    _
  $region29: #{forward.1} parent=0 // pred_fallthru
    _

</llo_original>
